<compile_context>
chip_gen: v7x
topology: tpu7x:2x2x1
jax: 0.10.0
libtpu: 0.0.40
codegen_flags: <defaults>
</compile_context>

<pallas_src>
import numpy as np
import jax
import jax.numpy as jnp
from jax import lax
from jax.experimental import pallas as pl
from jax.experimental.pallas import tpu as pltpu


def crf_kernel(em_ref, mask_ref, tags_ref, start_ref, end_ref, transT_ref,
               best_ref, loss_ref, hist_ref):
    # em_ref:   (T, K, B)  f32/bf16  emissions, batch on lanes (cast to f32 in-kernel)
    # mask_ref: (T, B)     i32
    # tags_ref: (T, B)     i32
    # start_ref/end_ref: (K, 1) f32
    # transT_ref: (K, K) f32, transT[j, i] = trans[i, j]
    # best_ref: (T, B) i32 out; loss_ref: (1, B) f32 out
    # hist_ref: (max(T-1,1), K, B) i32 VMEM scratch (Viterbi back-pointers)
    T, K, B = em_ref.shape
    f32 = jnp.float32

    start = start_ref[...].astype(f32)                 # (K, 1)
    end = end_ref[...].astype(f32)                     # (K, 1)
    transT = transT_ref[...].astype(f32)               # (K, K)
    # Hoisted, loop-invariant lane broadcast (JAX does not CSE broadcast_in_dim; doing
    # it inside the serial time loop re-pays the cross-lane splat every step).
    transT_b = jnp.broadcast_to(transT[:, :, None], (K, K, B))   # (K_cur, K_prev, B)

    iota_k = lax.broadcasted_iota(jnp.int32, (K, B), 0)        # tag index (sublanes)
    iota_prev = lax.broadcasted_iota(jnp.int32, (K, K, B), 1)  # prev-tag index
    iota_t = lax.broadcasted_iota(jnp.int32, (T, B), 0)        # time index (sublanes)

    em0 = em_ref[0].astype(f32)            # (K, B)
    tags0 = tags_ref[0:1, :]               # (1, B)  (mask[:,0] == 1 assumed, as in torchcrf)
    oh0 = (iota_k == tags0).astype(f32)    # (K, B)

    score0 = start + em0                   # shared init for logZ and Viterbi recursions
    num0 = jnp.sum(score0 * oh0, axis=0, keepdims=True)   # gold path score (1, B)

    def step(t, carry):
        score_z, score_v, num, oh_prev = carry
        em_t = em_ref[t].astype(f32)                       # (K, B)
        mask_t = mask_ref[pl.ds(t, 1), :]                  # (1, B) int32
        active = mask_t > 0                                # (1, B) bool

        # ----- forward algorithm (log-partition): logsumexp over prev tag -----
        sz = score_z[None, :, :] + transT_b                # (K_cur, K_prev, B)
        m = jnp.max(sz, axis=1)                            # (K, B)
        lse = m + jnp.log(jnp.sum(jnp.exp(sz - m[:, None, :]), axis=1))
        score_z = jnp.where(active, lse + em_t, score_z)

        # ----- Viterbi: vectorized max + first-occurrence argmax (XLU reductions) -----
        sv = score_v[None, :, :] + transT_b                # (K_cur, K_prev, B)
        vmax = jnp.max(sv, axis=1)                         # (K, B)
        best_prev = jnp.min(
            jnp.where(sv == vmax[:, None, :], iota_prev, jnp.int32(K)),
            axis=1)                                        # (K, B) int32
        hist_ref[pl.ds(t - 1, 1), :, :] = best_prev[None, :, :]
        score_v = jnp.where(active, vmax + em_t, score_v)

        # ----- gold path score (VPU only; no MXU push/pop on the serial path) -----
        tags_t = tags_ref[pl.ds(t, 1), :]                  # (1, B)
        oh_cur = (iota_k == tags_t).astype(f32)            # (K, B)
        # proj[j, b] = trans[tag_prev[b], j]  via one-hot select on hoisted transT_b
        proj = jnp.sum(transT_b * oh_prev[None, :, :], axis=1)         # (K, B)
        gold = jnp.sum((proj + em_t) * oh_cur, axis=0, keepdims=True)  # (1, B)
        num = num + gold * mask_t.astype(f32)

        return score_z, score_v, num, oh_cur               # oh_cur reused as next oh_prev

    # K-aware unroll: (K,K,B) temporaries per unrolled copy — keep icache/vreg budget sane.
    if K <= 8:
        fwd_unroll = True if T <= 32 else 4
    elif K <= 32:
        fwd_unroll = 2
    else:
        fwd_unroll = 1
    score_z, score_v, num, _ = lax.fori_loop(
        1, T, step, (score0, score0, num0, oh0), unroll=fwd_unroll)

    # ---------- finalize gold score ----------
    mask_all = mask_ref[...]                               # (T, B) int32
    tags_all = tags_ref[...]                               # (T, B) int32
    seq_ends = jnp.sum(mask_all, axis=0, keepdims=True) - 1          # (1, B)
    last_tag = jnp.sum(jnp.where(iota_t == seq_ends, tags_all, 0),
                       axis=0, keepdims=True)                        # (1, B)
    oh_last = (iota_k == last_tag).astype(f32)
    num = num + jnp.sum(end * oh_last, axis=0, keepdims=True)

    # ---------- log-partition and loss (lane-dense (1, B) store) ----------
    score_z = score_z + end
    mz = jnp.max(score_z, axis=0, keepdims=True)
    logZ = mz + jnp.log(jnp.sum(jnp.exp(score_z - mz), axis=0, keepdims=True))
    loss_ref[...] = logZ - num                             # -(log-likelihood), reduction='none'

    # ---------- Viterbi termination + backtrack ----------
    score_v = score_v + end
    vbest = jnp.max(score_v, axis=0, keepdims=True)
    cur0 = jnp.min(jnp.where(score_v == vbest, iota_k, jnp.int32(K)),
                   axis=0, keepdims=True)                  # best final tag, first occurrence

    # initialize full output (0 padding past seq end, best last tag at seq_end)
    best_ref[...] = jnp.where(iota_t == seq_ends, cur0, 0)

    def back_step(s, cur):
        t = T - 1 - s
        hist = hist_ref[pl.ds(t - 1, 1), :, :][0]          # (K, B) back-pointers for step t
        active = seq_ends >= t                             # (1, B) bool
        prev_tag = jnp.sum(jnp.where(iota_k == cur, hist, 0), axis=0, keepdims=True)
        cur = jnp.where(active, prev_tag, cur)
        # lane-masked store: no read-modify-write on the output row
        pltpu.store(best_ref.at[pl.ds(t - 1, 1), :], cur, mask=active)
        return cur

    back_unroll = True if T <= 16 else 8
    lax.fori_loop(0, T - 1, back_step, cur0, unroll=back_unroll)


def _vmem_caps():
    """Generation-aware VMEM budgets (v5e/v6e: 128 MiB, v7x: 64 MiB per TC)."""
    cap = 64 * 1024 * 1024                  # conservative default (v7x per-core VMEM)
    try:
        info = pltpu.get_tpu_info()
        cap = int(getattr(info, "vmem_capacity_bytes", cap)) or cap
    except Exception:
        pass
    vmem_limit = int(min(0.75 * cap, 100 * 1024 * 1024))
    vmem_limit = max(vmem_limit, 32 * 1024 * 1024)
    tile_budget = int(0.55 * vmem_limit)    # leave headroom for temporaries / mis-accounting
    return tile_budget, vmem_limit


def _pick_batch_tile(T, K, B, esize, tile_budget):
    """Largest 128-multiple batch tile fitting the VMEM budget, with >=2 grid tiles
    whenever the real batch spans >=2 lane tiles (so v7x's two TCs both get work)."""
    def ceil_to(x, m):
        return -(-x // m) * m
    krow_em = ceil_to(K * esize, 32)          # one (K,) emission column, sublane-padded bytes
    krow_i32 = ceil_to(K * 4, 32)             # one (K,) int32 column, sublane-padded bytes
    tcol_i32 = ceil_to(T, 8) * 4              # one (T,) int32 column, sublane-padded bytes
    per_lane = (2 * T * krow_em               # emissions block, double buffered
                + 2 * 3 * tcol_i32            # mask + tags + best, double buffered
                + 2 * 8 * 4                   # loss
                + max(T - 1, 1) * krow_i32    # back-pointer history scratch
                + 12 * K * krow_i32)          # live (K,K,B) temporaries / transT_b fudge
    tb = 1024
    while tb > 128 and tb * per_lane > tile_budget:
        tb //= 2
    n_lane_tiles = -(-B // 128)
    tb = min(tb, 128 * max(1, n_lane_tiles))            # don't pad a small batch up
    if n_lane_tiles >= 2:
        tb = min(tb, 128 * max(1, n_lane_tiles // 2))   # guarantee >= 2 grid steps
    return tb


def crf_cell_forward(emissions, attn_mask, tags, start_t, end_t, transitions,
                     *, time_major_emissions=False):
    """Pallas-backed equivalent of CRFCell.forward.

    emissions: (B, T, K), or (T, K, B) if time_major_emissions=True (preferred: avoids
    an extra HBM transpose pass).  f32 or bf16; bf16 stays bf16 in HBM and is cast to
    f32 inside the kernel.
    Returns (best_tags (B,T) int32 padded with 0 past seq end, loss (B,) float32).
    NOTE: mask[:, 0] must be 1 for every sequence (torchcrf requirement)."""
    if time_major_emissions:
        T, K, B = emissions.shape
    else:
        B, T, K = emissions.shape

    em = emissions
    if em.dtype not in (jnp.float32, jnp.bfloat16):
        em = em.astype(jnp.float32)
    esize = np.dtype(em.dtype).itemsize

    tile_budget, vmem_limit = _vmem_caps()
    TB = _pick_batch_tile(T, K, B, esize, tile_budget)
    Bp = -(-B // TB) * TB
    pad = Bp - B

    mk = attn_mask.astype(jnp.int32)          # stays integer: no float-cast pass over HBM
    tg = tags.astype(jnp.int32)
    if pad:
        mk = jnp.pad(mk, ((0, pad), (0, 0)))  # padded rows: all-zero mask, results discarded
        tg = jnp.pad(tg, ((0, pad), (0, 0)))
    mk_tb = mk.T                              # (T, Bp)
    tg_tb = tg.T                              # (T, Bp)

    if time_major_emissions:
        em_tkb = jnp.pad(em, ((0, 0), (0, 0), (0, pad))) if pad else em
    else:
        # TODO(synk): produce emissions upstream in the time-major, lane-dense (T, K, B)
        # layout (pass time_major_emissions=True) so XLA does not spend an extra HBM
        # read+write pass on this transpose of the largest input.
        em_bp = jnp.pad(em, ((0, pad), (0, 0), (0, 0))) if pad else em
        em_tkb = jnp.transpose(em_bp, (1, 2, 0))          # (T, K, Bp)

    start_col = start_t.reshape(K, 1).astype(jnp.float32)
    end_col = end_t.reshape(K, 1).astype(jnp.float32)
    transT = transitions.T.astype(jnp.float32)            # transT[j, i] = trans[i, j]

    best_tb, loss_1b = pl.pallas_call(
        crf_kernel,
        out_shape=(jax.ShapeDtypeStruct((T, Bp), jnp.int32),
                   jax.ShapeDtypeStruct((1, Bp), jnp.float32)),
        grid_spec=pltpu.PrefetchScalarGridSpec(
            num_scalar_prefetch=0,
            grid=(Bp // TB,),
            in_specs=[
                pl.BlockSpec((T, K, TB), lambda i: (0, 0, i)),   # emissions (T, K, Btile)
                pl.BlockSpec((T, TB), lambda i: (0, i)),         # mask
                pl.BlockSpec((T, TB), lambda i: (0, i)),         # tags
                pl.BlockSpec((K, 1), lambda i: (0, 0)),          # start
                pl.BlockSpec((K, 1), lambda i: (0, 0)),          # end
                pl.BlockSpec((K, K), lambda i: (0, 0)),          # transitions^T
            ],
            out_specs=(
                pl.BlockSpec((T, TB), lambda i: (0, i)),         # best tags (lane-dense)
                pl.BlockSpec((1, TB), lambda i: (0, i)),         # loss (lane-dense)
            ),
            scratch_shapes=[pltpu.VMEM((max(T - 1, 1), K, TB), jnp.int32)],
        ),
        compiler_params=pltpu.CompilerParams(
            dimension_semantics=("parallel",),        # batch tiles split across v7x's 2 TCs
            vmem_limit_bytes=vmem_limit),
    )(em_tkb, mk_tb, tg_tb, start_col, end_col, transT)

    best = best_tb.T[:B]                      # (B, T)
    loss = loss_1b[0, :B]                     # (B,)
    return best, loss


# ---------------- pure-JAX / numpy reference (mirrors torchcrf) ----------------
def crf_reference(emissions, mask, tags, start, end, trans):
    B, T, K = emissions.shape
    maskf = mask.astype(jnp.float32)
    bidx = jnp.arange(B)

    # log-partition
    score = start[None] + emissions[:, 0]
    for t in range(1, T):
        nxt = jax.nn.logsumexp(score[:, :, None] + trans[None] + emissions[:, t, None, :], axis=1)
        score = jnp.where(maskf[:, t:t + 1] > 0, nxt, score)
    logZ = jax.nn.logsumexp(score + end[None], axis=1)

    # gold score
    num = start[tags[:, 0]] + emissions[bidx, 0, tags[:, 0]]
    for t in range(1, T):
        num = num + trans[tags[:, t - 1], tags[:, t]] * maskf[:, t]
        num = num + emissions[bidx, t, tags[:, t]] * maskf[:, t]
    seq_ends = mask.astype(jnp.int32).sum(1) - 1
    num = num + end[tags[bidx, seq_ends]]
    loss = logZ - num

    # Viterbi
    score = start[None] + emissions[:, 0]
    hist = []
    for t in range(1, T):
        nxt = score[:, :, None] + trans[None] + emissions[:, t, None, :]
        hist.append(np.asarray(jnp.argmax(nxt, axis=1)))
        score = jnp.where(maskf[:, t:t + 1] > 0, jnp.max(nxt, axis=1), score)
    score = np.asarray(score + end[None])
    se = np.asarray(seq_ends)
    out = np.zeros((B, T), np.int32)
    for b in range(B):
        cur = int(np.argmax(score[b]))
        out[b, se[b]] = cur
        for t in range(int(se[b]), 0, -1):
            cur = int(hist[t - 1][b, cur])
            out[b, t - 1] = cur
    return out, np.asarray(loss)


if __name__ == "__main__":
    B, T, K = 2, 8, 4  # batch, seq len, num_tags
    key = jax.random.PRNGKey(0)
    k_em, k_tags, k_s, k_e, k_tr = jax.random.split(key, 5)

    emissions = jax.random.normal(k_em, (B, T, K), dtype=jnp.float32)
    attn_mask = jnp.array([[1, 1, 1, 1, 1, 1, 1, 1],
                           [1, 1, 1, 1, 1, 0, 0, 0]], dtype=jnp.int32)
    bmeo_mask_target = jax.random.randint(k_tags, (B, T), 0, K, dtype=jnp.int32)

    # CRF parameters (torchcrf init: uniform(-0.1, 0.1)), deterministic here.
    start_t = jax.random.uniform(k_s, (K,), minval=-0.1, maxval=0.1, dtype=jnp.float32)
    end_t = jax.random.uniform(k_e, (K,), minval=-0.1, maxval=0.1, dtype=jnp.float32)
    transitions = jax.random.uniform(k_tr, (K, K), minval=-0.1, maxval=0.1, dtype=jnp.float32)

    best, loss = crf_cell_forward(emissions, attn_mask, bmeo_mask_target,
                                  start_t, end_t, transitions)
    best = jax.block_until_ready(best)
    loss = jax.block_until_ready(loss)

    ref_tags, ref_loss = crf_reference(emissions, attn_mask, bmeo_mask_target,
                                       start_t, end_t, transitions)
    valid = np.asarray(attn_mask) > 0
    assert np.allclose(np.asarray(loss), ref_loss, atol=1e-4), (loss, ref_loss)
    assert np.array_equal(np.where(valid, np.asarray(best), 0),
                          np.where(valid, ref_tags, 0)), (best, ref_tags)
    print("KERNEL_OK")
</pallas_src>

<mosaic_0001>
module attributes {stable_mosaic.version = 11 : i64} {
  func.func @crf_kernel(%arg0: i32, %arg1: memref<8x4x128xf32, #tpu.memory_space<vmem>>, %arg2: memref<8x128xi32, #tpu.memory_space<vmem>>, %arg3: memref<8x128xi32, #tpu.memory_space<vmem>>, %arg4: memref<4x1xf32, #tpu.memory_space<vmem>>, %arg5: memref<4x1xf32, #tpu.memory_space<vmem>>, %arg6: memref<4x4xf32, #tpu.memory_space<vmem>>, %arg7: memref<8x128xi32, #tpu.memory_space<vmem>>, %arg8: memref<1x128xf32, #tpu.memory_space<vmem>>, %arg9: memref<7x4x128xi32, #tpu.memory_space<vmem>>) attributes {dimension_semantics = [#tpu.dimension_semantics<parallel>], iteration_bounds = array<i64: 1>, scalar_prefetch = 0 : i64, scratch_operands = 1 : i64, tpu.core_type = #tpu.core_type<tc>, window_params = [{transform_indices = @transform_0, window_bounds = array<i64: 8, 4, 128>}, {transform_indices = @transform_1, window_bounds = array<i64: 8, 128>}, {transform_indices = @transform_2, window_bounds = array<i64: 8, 128>}, {pipeline_mode = #tpu.pipeline_mode<synchronous>, transform_indices = @transform_3, window_bounds = array<i64: 4, 1>}, {pipeline_mode = #tpu.pipeline_mode<synchronous>, transform_indices = @transform_4, window_bounds = array<i64: 4, 1>}, {pipeline_mode = #tpu.pipeline_mode<synchronous>, transform_indices = @transform_5, window_bounds = array<i64: 4, 4>}, {transform_indices = @transform_6, window_bounds = array<i64: 8, 128>}, {transform_indices = @transform_7, window_bounds = array<i64: 1, 128>}]} {
    %c0 = arith.constant 0 : index
    %c0_0 = arith.constant 0 : index
    %0 = vector.load %arg4[%c0, %c0_0] : memref<4x1xf32, #tpu.memory_space<vmem>>, vector<4x1xf32>
    %c0_1 = arith.constant 0 : index
    %c0_2 = arith.constant 0 : index
    %1 = vector.load %arg5[%c0_1, %c0_2] : memref<4x1xf32, #tpu.memory_space<vmem>>, vector<4x1xf32>
    %c0_3 = arith.constant 0 : index
    %c0_4 = arith.constant 0 : index
    %2 = vector.load %arg6[%c0_3, %c0_4] : memref<4x4xf32, #tpu.memory_space<vmem>>, vector<4x4xf32>
    %3 = vector.shape_cast %2 : vector<4x4xf32> to vector<4x4x1xf32>
    %4 = vector.shape_cast %3 : vector<4x4x1xf32> to vector<4x4x1xf32>
    %5 = vector.broadcast %4 : vector<4x4x1xf32> to vector<4x4x128xf32>
    %6 = tpu.iota {dimensions = array<i32: 0>} : vector<4x128xi32>
    %7 = tpu.iota {dimensions = array<i32: 1>} : vector<4x4x128xi32>
    %8 = tpu.iota {dimensions = array<i32: 0>} : vector<8x128xi32>
    %c0_5 = arith.constant 0 : index
    %c0_6 = arith.constant 0 : index
    %c0_7 = arith.constant 0 : index
    %9 = vector.load %arg1[%c0_5, %c0_6, %c0_7] : memref<8x4x128xf32, #tpu.memory_space<vmem>>, vector<1x4x128xf32>
    %10 = vector.shape_cast %9 : vector<1x4x128xf32> to vector<4x128xf32>
    %c0_8 = arith.constant 0 : index
    %c0_9 = arith.constant 0 : index
    %11 = vector.load %arg3[%c0_8, %c0_9] : memref<8x128xi32, #tpu.memory_space<vmem>>, vector<1x128xi32>
    %12 = vector.broadcast %11 : vector<1x128xi32> to vector<4x128xi32>
    %13 = arith.cmpi eq, %6, %12 : vector<4x128xi32>
    %14 = arith.extui %13 : vector<4x128xi1> to vector<4x128xi32>
    %15 = arith.sitofp %14 : vector<4x128xi32> to vector<4x128xf32>
    %16 = vector.broadcast %0 : vector<4x1xf32> to vector<4x128xf32>
    %17 = arith.addf %16, %10 : vector<4x128xf32>
    %18 = arith.mulf %17, %15 : vector<4x128xf32>
    %cst = arith.constant dense<0.000000e+00> : vector<128xf32>
    %19 = vector.multi_reduction <add>, %18, %cst [0] : vector<4x128xf32> to vector<128xf32>
    %20 = vector.shape_cast %19 : vector<128xf32> to vector<1x128xf32>
    %c1_i32 = arith.constant 1 : i32
    %21 = arith.index_cast %c1_i32 : i32 to index
    %c0_10 = arith.constant 0 : index
    %c0_11 = arith.constant 0 : index
    %22 = vector.load %arg1[%21, %c0_10, %c0_11] : memref<8x4x128xf32, #tpu.memory_space<vmem>>, vector<1x4x128xf32>
    %23 = vector.shape_cast %22 : vector<1x4x128xf32> to vector<4x128xf32>
    %24 = arith.index_cast %c1_i32 : i32 to index
    %c0_12 = arith.constant 0 : index
    %25 = vector.load %arg2[%24, %c0_12] : memref<8x128xi32, #tpu.memory_space<vmem>>, vector<1x128xi32>
    %c0_i32 = arith.constant 0 : i32
    %26 = vector.broadcast %c0_i32 : i32 to vector<1x128xi32>
    %27 = arith.cmpi sgt, %25, %26 : vector<1x128xi32>
    %28 = vector.shape_cast %17 : vector<4x128xf32> to vector<1x4x128xf32>
    %29 = vector.broadcast %28 : vector<1x4x128xf32> to vector<4x4x128xf32>
    %30 = arith.addf %29, %5 : vector<4x4x128xf32>
    %cst_13 = arith.constant dense<0xFF800000> : vector<4x128xf32>
    %31 = vector.multi_reduction <maximumf>, %30, %cst_13 [1] : vector<4x4x128xf32> to vector<4x128xf32>
    %32 = vector.shape_cast %31 : vector<4x128xf32> to vector<4x1x128xf32>
    %33 = vector.broadcast %32 : vector<4x1x128xf32> to vector<4x4x128xf32>
    %34 = arith.subf %30, %33 : vector<4x4x128xf32>
    %35 = math.exp %34 : vector<4x4x128xf32>
    %cst_14 = arith.constant dense<0.000000e+00> : vector<4x128xf32>
    %36 = vector.multi_reduction <add>, %35, %cst_14 [1] : vector<4x4x128xf32> to vector<4x128xf32>
    %37 = math.log %36 : vector<4x128xf32>
    %38 = arith.addf %31, %37 : vector<4x128xf32>
    %39 = arith.addf %38, %23 : vector<4x128xf32>
    %40 = vector.shape_cast %27 : vector<1x128xi1> to vector<1x128xi1>
    %41 = vector.broadcast %40 : vector<1x128xi1> to vector<4x128xi1>
    %42 = arith.select %41, %39, %17 : vector<4x128xi1>, vector<4x128xf32>
    %43 = vector.shape_cast %17 : vector<4x128xf32> to vector<1x4x128xf32>
    %44 = vector.broadcast %43 : vector<1x4x128xf32> to vector<4x4x128xf32>
    %45 = arith.addf %44, %5 : vector<4x4x128xf32>
    %cst_15 = arith.constant dense<0xFF800000> : vector<4x128xf32>
    %46 = vector.multi_reduction <maximumf>, %45, %cst_15 [1] : vector<4x4x128xf32> to vector<4x128xf32>
    %47 = vector.shape_cast %46 : vector<4x128xf32> to vector<4x1x128xf32>
    %48 = vector.broadcast %47 : vector<4x1x128xf32> to vector<4x4x128xf32>
    %49 = arith.cmpf oeq, %45, %48 : vector<4x4x128xf32>
    %c4_i32 = arith.constant 4 : i32
    %50 = vector.broadcast %c4_i32 : i32 to vector<4x4x128xi32>
    %51 = arith.select %49, %7, %50 : vector<4x4x128xi1>, vector<4x4x128xi32>
    %cst_16 = arith.constant dense<2147483647> : vector<4x128xi32>
    %52 = vector.multi_reduction <minsi>, %51, %cst_16 [1] : vector<4x4x128xi32> to vector<4x128xi32>
    %53 = vector.shape_cast %52 : vector<4x128xi32> to vector<1x4x128xi32>
    %c1_i32_17 = arith.constant 1 : i32
    %54 = arith.subi %c1_i32, %c1_i32_17 : i32
    %55 = arith.index_cast %54 : i32 to index
    %c0_18 = arith.constant 0 : index
    %c0_19 = arith.constant 0 : index
    %56 = vector.load %arg9[%55, %c0_18, %c0_19] : memref<7x4x128xi32, #tpu.memory_space<vmem>>, vector<1x4x128xi32>
    tpu.vector_store %arg9[%55, %c0_18, %c0_19], %53 {strides = array<i32>} : memref<7x4x128xi32, #tpu.memory_space<vmem>>, vector<1x4x128xi32>,
    %57 = arith.addf %46, %23 : vector<4x128xf32>
    %58 = vector.shape_cast %27 : vector<1x128xi1> to vector<1x128xi1>
    %59 = vector.broadcast %58 : vector<1x128xi1> to vector<4x128xi1>
    %60 = arith.select %59, %57, %17 : vector<4x128xi1>, vector<4x128xf32>
    %61 = arith.index_cast %c1_i32 : i32 to index
    %c0_20 = arith.constant 0 : index
    %62 = vector.load %arg3[%61, %c0_20] : memref<8x128xi32, #tpu.memory_space<vmem>>, vector<1x128xi32>
    %63 = vector.broadcast %62 : vector<1x128xi32> to vector<4x128xi32>
    %64 = arith.cmpi eq, %6, %63 : vector<4x128xi32>
    %65 = arith.extui %64 : vector<4x128xi1> to vector<4x128xi32>
    %66 = arith.sitofp %65 : vector<4x128xi32> to vector<4x128xf32>
    %67 = vector.shape_cast %15 : vector<4x128xf32> to vector<1x4x128xf32>
    %68 = vector.broadcast %67 : vector<1x4x128xf32> to vector<4x4x128xf32>
    %69 = arith.mulf %5, %68 : vector<4x4x128xf32>
    %cst_21 = arith.constant dense<0.000000e+00> : vector<4x128xf32>
    %70 = vector.multi_reduction <add>, %69, %cst_21 [1] : vector<4x4x128xf32> to vector<4x128xf32>
    %71 = arith.addf %70, %23 : vector<4x128xf32>
    %72 = arith.mulf %71, %66 : vector<4x128xf32>
    %cst_22 = arith.constant dense<0.000000e+00> : vector<128xf32>
    %73 = vector.multi_reduction <add>, %72, %cst_22 [0] : vector<4x128xf32> to vector<128xf32>
    %74 = vector.shape_cast %73 : vector<128xf32> to vector<1x128xf32>
    %75 = arith.sitofp %25 : vector<1x128xi32> to vector<1x128xf32>
    %76 = arith.mulf %74, %75 : vector<1x128xf32>
    %77 = arith.addf %20, %76 : vector<1x128xf32>
    %c2_i32 = arith.constant 2 : i32
    %78 = arith.index_cast %c2_i32 : i32 to index
    %c0_23 = arith.constant 0 : index
    %c0_24 = arith.constant 0 : index
    %79 = vector.load %arg1[%78, %c0_23, %c0_24] : memref<8x4x128xf32, #tpu.memory_space<vmem>>, vector<1x4x128xf32>
    %80 = vector.shape_cast %79 : vector<1x4x128xf32> to vector<4x128xf32>
    %81 = arith.index_cast %c2_i32 : i32 to index
    %c0_25 = arith.constant 0 : index
    %82 = vector.load %arg2[%81, %c0_25] : memref<8x128xi32, #tpu.memory_space<vmem>>, vector<1x128xi32>
    %c0_i32_26 = arith.constant 0 : i32
    %83 = vector.broadcast %c0_i32_26 : i32 to vector<1x128xi32>
    %84 = arith.cmpi sgt, %82, %83 : vector<1x128xi32>
    %85 = vector.shape_cast %42 : vector<4x128xf32> to vector<1x4x128xf32>
    %86 = vector.broadcast %85 : vector<1x4x128xf32> to vector<4x4x128xf32>
    %87 = arith.addf %86, %5 : vector<4x4x128xf32>
    %cst_27 = arith.constant dense<0xFF800000> : vector<4x128xf32>
    %88 = vector.multi_reduction <maximumf>, %87, %cst_27 [1] : vector<4x4x128xf32> to vector<4x128xf32>
    %89 = vector.shape_cast %88 : vector<4x128xf32> to vector<4x1x128xf32>
    %90 = vector.broadcast %89 : vector<4x1x128xf32> to vector<4x4x128xf32>
    %91 = arith.subf %87, %90 : vector<4x4x128xf32>
    %92 = math.exp %91 : vector<4x4x128xf32>
    %cst_28 = arith.constant dense<0.000000e+00> : vector<4x128xf32>
    %93 = vector.multi_reduction <add>, %92, %cst_28 [1] : vector<4x4x128xf32> to vector<4x128xf32>
    %94 = math.log %93 : vector<4x128xf32>
    %95 = arith.addf %88, %94 : vector<4x128xf32>
    %96 = arith.addf %95, %80 : vector<4x128xf32>
    %97 = vector.shape_cast %84 : vector<1x128xi1> to vector<1x128xi1>
    %98 = vector.broadcast %97 : vector<1x128xi1> to vector<4x128xi1>
    %99 = arith.select %98, %96, %42 : vector<4x128xi1>, vector<4x128xf32>
    %100 = vector.shape_cast %60 : vector<4x128xf32> to vector<1x4x128xf32>
    %101 = vector.broadcast %100 : vector<1x4x128xf32> to vector<4x4x128xf32>
    %102 = arith.addf %101, %5 : vector<4x4x128xf32>
    %cst_29 = arith.constant dense<0xFF800000> : vector<4x128xf32>
    %103 = vector.multi_reduction <maximumf>, %102, %cst_29 [1] : vector<4x4x128xf32> to vector<4x128xf32>
    %104 = vector.shape_cast %103 : vector<4x128xf32> to vector<4x1x128xf32>
    %105 = vector.broadcast %104 : vector<4x1x128xf32> to vector<4x4x128xf32>
    %106 = arith.cmpf oeq, %102, %105 : vector<4x4x128xf32>
    %c4_i32_30 = arith.constant 4 : i32
    %107 = vector.broadcast %c4_i32_30 : i32 to vector<4x4x128xi32>
    %108 = arith.select %106, %7, %107 : vector<4x4x128xi1>, vector<4x4x128xi32>
    %cst_31 = arith.constant dense<2147483647> : vector<4x128xi32>
    %109 = vector.multi_reduction <minsi>, %108, %cst_31 [1] : vector<4x4x128xi32> to vector<4x128xi32>
    %110 = vector.shape_cast %109 : vector<4x128xi32> to vector<1x4x128xi32>
    %c1_i32_32 = arith.constant 1 : i32
    %111 = arith.subi %c2_i32, %c1_i32_32 : i32
    %112 = arith.index_cast %111 : i32 to index
    %c0_33 = arith.constant 0 : index
    %c0_34 = arith.constant 0 : index
    %113 = vector.load %arg9[%112, %c0_33, %c0_34] : memref<7x4x128xi32, #tpu.memory_space<vmem>>, vector<1x4x128xi32>
    tpu.vector_store %arg9[%112, %c0_33, %c0_34], %110 {strides = array<i32>} : memref<7x4x128xi32, #tpu.memory_space<vmem>>, vector<1x4x128xi32>,
    %114 = arith.addf %103, %80 : vector<4x128xf32>
    %115 = vector.shape_cast %84 : vector<1x128xi1> to vector<1x128xi1>
    %116 = vector.broadcast %115 : vector<1x128xi1> to vector<4x128xi1>
    %117 = arith.select %116, %114, %60 : vector<4x128xi1>, vector<4x128xf32>
    %118 = arith.index_cast %c2_i32 : i32 to index
    %c0_35 = arith.constant 0 : index
    %119 = vector.load %arg3[%118, %c0_35] : memref<8x128xi32, #tpu.memory_space<vmem>>, vector<1x128xi32>
    %120 = vector.broadcast %119 : vector<1x128xi32> to vector<4x128xi32>
    %121 = arith.cmpi eq, %6, %120 : vector<4x128xi32>
    %122 = arith.extui %121 : vector<4x128xi1> to vector<4x128xi32>
    %123 = arith.sitofp %122 : vector<4x128xi32> to vector<4x128xf32>
    %124 = vector.shape_cast %66 : vector<4x128xf32> to vector<1x4x128xf32>
    %125 = vector.broadcast %124 : vector<1x4x128xf32> to vector<4x4x128xf32>
    %126 = arith.mulf %5, %125 : vector<4x4x128xf32>
    %cst_36 = arith.constant dense<0.000000e+00> : vector<4x128xf32>
    %127 = vector.multi_reduction <add>, %126, %cst_36 [1] : vector<4x4x128xf32> to vector<4x128xf32>
    %128 = arith.addf %127, %80 : vector<4x128xf32>
    %129 = arith.mulf %128, %123 : vector<4x128xf32>
    %cst_37 = arith.constant dense<0.000000e+00> : vector<128xf32>
    %130 = vector.multi_reduction <add>, %129, %cst_37 [0] : vector<4x128xf32> to vector<128xf32>
    %131 = vector.shape_cast %130 : vector<128xf32> to vector<1x128xf32>
    %132 = arith.sitofp %82 : vector<1x128xi32> to vector<1x128xf32>
    %133 = arith.mulf %131, %132 : vector<1x128xf32>
    %134 = arith.addf %77, %133 : vector<1x128xf32>
    %c3_i32 = arith.constant 3 : i32
    %135 = arith.index_cast %c3_i32 : i32 to index
    %c0_38 = arith.constant 0 : index
    %c0_39 = arith.constant 0 : index
    %136 = vector.load %arg1[%135, %c0_38, %c0_39] : memref<8x4x128xf32, #tpu.memory_space<vmem>>, vector<1x4x128xf32>
    %137 = vector.shape_cast %136 : vector<1x4x128xf32> to vector<4x128xf32>
    %138 = arith.index_cast %c3_i32 : i32 to index
    %c0_40 = arith.constant 0 : index
    %139 = vector.load %arg2[%138, %c0_40] : memref<8x128xi32, #tpu.memory_space<vmem>>, vector<1x128xi32>
    %c0_i32_41 = arith.constant 0 : i32
    %140 = vector.broadcast %c0_i32_41 : i32 to vector<1x128xi32>
    %141 = arith.cmpi sgt, %139, %140 : vector<1x128xi32>
    %142 = vector.shape_cast %99 : vector<4x128xf32> to vector<1x4x128xf32>
    %143 = vector.broadcast %142 : vector<1x4x128xf32> to vector<4x4x128xf32>
    %144 = arith.addf %143, %5 : vector<4x4x128xf32>
    %cst_42 = arith.constant dense<0xFF800000> : vector<4x128xf32>
    %145 = vector.multi_reduction <maximumf>, %144, %cst_42 [1] : vector<4x4x128xf32> to vector<4x128xf32>
    %146 = vector.shape_cast %145 : vector<4x128xf32> to vector<4x1x128xf32>
    %147 = vector.broadcast %146 : vector<4x1x128xf32> to vector<4x4x128xf32>
    %148 = arith.subf %144, %147 : vector<4x4x128xf32>
    %149 = math.exp %148 : vector<4x4x128xf32>
    %cst_43 = arith.constant dense<0.000000e+00> : vector<4x128xf32>
    %150 = vector.multi_reduction <add>, %149, %cst_43 [1] : vector<4x4x128xf32> to vector<4x128xf32>
    %151 = math.log %150 : vector<4x128xf32>
    %152 = arith.addf %145, %151 : vector<4x128xf32>
    %153 = arith.addf %152, %137 : vector<4x128xf32>
    %154 = vector.shape_cast %141 : vector<1x128xi1> to vector<1x128xi1>
    %155 = vector.broadcast %154 : vector<1x128xi1> to vector<4x128xi1>
    %156 = arith.select %155, %153, %99 : vector<4x128xi1>, vector<4x128xf32>
    %157 = vector.shape_cast %117 : vector<4x128xf32> to vector<1x4x128xf32>
    %158 = vector.broadcast %157 : vector<1x4x128xf32> to vector<4x4x128xf32>
    %159 = arith.addf %158, %5 : vector<4x4x128xf32>
    %cst_44 = arith.constant dense<0xFF800000> : vector<4x128xf32>
    %160 = vector.multi_reduction <maximumf>, %159, %cst_44 [1] : vector<4x4x128xf32> to vector<4x128xf32>
    %161 = vector.shape_cast %160 : vector<4x128xf32> to vector<4x1x128xf32>
    %162 = vector.broadcast %161 : vector<4x1x128xf32> to vector<4x4x128xf32>
    %163 = arith.cmpf oeq, %159, %162 : vector<4x4x128xf32>
    %c4_i32_45 = arith.constant 4 : i32
    %164 = vector.broadcast %c4_i32_45 : i32 to vector<4x4x128xi32>
    %165 = arith.select %163, %7, %164 : vector<4x4x128xi1>, vector<4x4x128xi32>
    %cst_46 = arith.constant dense<2147483647> : vector<4x128xi32>
    %166 = vector.multi_reduction <minsi>, %165, %cst_46 [1] : vector<4x4x128xi32> to vector<4x128xi32>
    %167 = vector.shape_cast %166 : vector<4x128xi32> to vector<1x4x128xi32>
    %c1_i32_47 = arith.constant 1 : i32
    %168 = arith.subi %c3_i32, %c1_i32_47 : i32
    %169 = arith.index_cast %168 : i32 to index
    %c0_48 = arith.constant 0 : index
    %c0_49 = arith.constant 0 : index
    %170 = vector.load %arg9[%169, %c0_48, %c0_49] : memref<7x4x128xi32, #tpu.memory_space<vmem>>, vector<1x4x128xi32>
    tpu.vector_store %arg9[%169, %c0_48, %c0_49], %167 {strides = array<i32>} : memref<7x4x128xi32, #tpu.memory_space<vmem>>, vector<1x4x128xi32>,
    %171 = arith.addf %160, %137 : vector<4x128xf32>
    %172 = vector.shape_cast %141 : vector<1x128xi1> to vector<1x128xi1>
    %173 = vector.broadcast %172 : vector<1x128xi1> to vector<4x128xi1>
    %174 = arith.select %173, %171, %117 : vector<4x128xi1>, vector<4x128xf32>
    %175 = arith.index_cast %c3_i32 : i32 to index
    %c0_50 = arith.constant 0 : index
    %176 = vector.load %arg3[%175, %c0_50] : memref<8x128xi32, #tpu.memory_space<vmem>>, vector<1x128xi32>
    %177 = vector.broadcast %176 : vector<1x128xi32> to vector<4x128xi32>
    %178 = arith.cmpi eq, %6, %177 : vector<4x128xi32>
    %179 = arith.extui %178 : vector<4x128xi1> to vector<4x128xi32>
    %180 = arith.sitofp %179 : vector<4x128xi32> to vector<4x128xf32>
    %181 = vector.shape_cast %123 : vector<4x128xf32> to vector<1x4x128xf32>
    %182 = vector.broadcast %181 : vector<1x4x128xf32> to vector<4x4x128xf32>
    %183 = arith.mulf %5, %182 : vector<4x4x128xf32>
    %cst_51 = arith.constant dense<0.000000e+00> : vector<4x128xf32>
    %184 = vector.multi_reduction <add>, %183, %cst_51 [1] : vector<4x4x128xf32> to vector<4x128xf32>
    %185 = arith.addf %184, %137 : vector<4x128xf32>
    %186 = arith.mulf %185, %180 : vector<4x128xf32>
    %cst_52 = arith.constant dense<0.000000e+00> : vector<128xf32>
    %187 = vector.multi_reduction <add>, %186, %cst_52 [0] : vector<4x128xf32> to vector<128xf32>
    %188 = vector.shape_cast %187 : vector<128xf32> to vector<1x128xf32>
    %189 = arith.sitofp %139 : vector<1x128xi32> to vector<1x128xf32>
    %190 = arith.mulf %188, %189 : vector<1x128xf32>
    %191 = arith.addf %134, %190 : vector<1x128xf32>
    %c4_i32_53 = arith.constant 4 : i32
    %192 = arith.index_cast %c4_i32_53 : i32 to index
    %c0_54 = arith.constant 0 : index
    %c0_55 = arith.constant 0 : index
    %193 = vector.load %arg1[%192, %c0_54, %c0_55] : memref<8x4x128xf32, #tpu.memory_space<vmem>>, vector<1x4x128xf32>
    %194 = vector.shape_cast %193 : vector<1x4x128xf32> to vector<4x128xf32>
    %195 = arith.index_cast %c4_i32_53 : i32 to index
    %c0_56 = arith.constant 0 : index
    %196 = vector.load %arg2[%195, %c0_56] : memref<8x128xi32, #tpu.memory_space<vmem>>, vector<1x128xi32>
    %c0_i32_57 = arith.constant 0 : i32
    %197 = vector.broadcast %c0_i32_57 : i32 to vector<1x128xi32>
    %198 = arith.cmpi sgt, %196, %197 : vector<1x128xi32>
    %199 = vector.shape_cast %156 : vector<4x128xf32> to vector<1x4x128xf32>
    %200 = vector.broadcast %199 : vector<1x4x128xf32> to vector<4x4x128xf32>
    %201 = arith.addf %200, %5 : vector<4x4x128xf32>
    %cst_58 = arith.constant dense<0xFF800000> : vector<4x128xf32>
    %202 = vector.multi_reduction <maximumf>, %201, %cst_58 [1] : vector<4x4x128xf32> to vector<4x128xf32>
    %203 = vector.shape_cast %202 : vector<4x128xf32> to vector<4x1x128xf32>
    %204 = vector.broadcast %203 : vector<4x1x128xf32> to vector<4x4x128xf32>
    %205 = arith.subf %201, %204 : vector<4x4x128xf32>
    %206 = math.exp %205 : vector<4x4x128xf32>
    %cst_59 = arith.constant dense<0.000000e+00> : vector<4x128xf32>
    %207 = vector.multi_reduction <add>, %206, %cst_59 [1] : vector<4x4x128xf32> to vector<4x128xf32>
    %208 = math.log %207 : vector<4x128xf32>
    %209 = arith.addf %202, %208 : vector<4x128xf32>
    %210 = arith.addf %209, %194 : vector<4x128xf32>
    %211 = vector.shape_cast %198 : vector<1x128xi1> to vector<1x128xi1>
    %212 = vector.broadcast %211 : vector<1x128xi1> to vector<4x128xi1>
    %213 = arith.select %212, %210, %156 : vector<4x128xi1>, vector<4x128xf32>
    %214 = vector.shape_cast %174 : vector<4x128xf32> to vector<1x4x128xf32>
    %215 = vector.broadcast %214 : vector<1x4x128xf32> to vector<4x4x128xf32>
    %216 = arith.addf %215, %5 : vector<4x4x128xf32>
    %cst_60 = arith.constant dense<0xFF800000> : vector<4x128xf32>
    %217 = vector.multi_reduction <maximumf>, %216, %cst_60 [1] : vector<4x4x128xf32> to vector<4x128xf32>
    %218 = vector.shape_cast %217 : vector<4x128xf32> to vector<4x1x128xf32>
    %219 = vector.broadcast %218 : vector<4x1x128xf32> to vector<4x4x128xf32>
    %220 = arith.cmpf oeq, %216, %219 : vector<4x4x128xf32>
    %c4_i32_61 = arith.constant 4 : i32
    %221 = vector.broadcast %c4_i32_61 : i32 to vector<4x4x128xi32>
    %222 = arith.select %220, %7, %221 : vector<4x4x128xi1>, vector<4x4x128xi32>
    %cst_62 = arith.constant dense<2147483647> : vector<4x128xi32>
    %223 = vector.multi_reduction <minsi>, %222, %cst_62 [1] : vector<4x4x128xi32> to vector<4x128xi32>
    %224 = vector.shape_cast %223 : vector<4x128xi32> to vector<1x4x128xi32>
    %c1_i32_63 = arith.constant 1 : i32
    %225 = arith.subi %c4_i32_53, %c1_i32_63 : i32
    %226 = arith.index_cast %225 : i32 to index
    %c0_64 = arith.constant 0 : index
    %c0_65 = arith.constant 0 : index
    %227 = vector.load %arg9[%226, %c0_64, %c0_65] : memref<7x4x128xi32, #tpu.memory_space<vmem>>, vector<1x4x128xi32>
    tpu.vector_store %arg9[%226, %c0_64, %c0_65], %224 {strides = array<i32>} : memref<7x4x128xi32, #tpu.memory_space<vmem>>, vector<1x4x128xi32>,
    %228 = arith.addf %217, %194 : vector<4x128xf32>
    %229 = vector.shape_cast %198 : vector<1x128xi1> to vector<1x128xi1>
    %230 = vector.broadcast %229 : vector<1x128xi1> to vector<4x128xi1>
    %231 = arith.select %230, %228, %174 : vector<4x128xi1>, vector<4x128xf32>
    %232 = arith.index_cast %c4_i32_53 : i32 to index
    %c0_66 = arith.constant 0 : index
    %233 = vector.load %arg3[%232, %c0_66] : memref<8x128xi32, #tpu.memory_space<vmem>>, vector<1x128xi32>
    %234 = vector.broadcast %233 : vector<1x128xi32> to vector<4x128xi32>
    %235 = arith.cmpi eq, %6, %234 : vector<4x128xi32>
    %236 = arith.extui %235 : vector<4x128xi1> to vector<4x128xi32>
    %237 = arith.sitofp %236 : vector<4x128xi32> to vector<4x128xf32>
    %238 = vector.shape_cast %180 : vector<4x128xf32> to vector<1x4x128xf32>
    %239 = vector.broadcast %238 : vector<1x4x128xf32> to vector<4x4x128xf32>
    %240 = arith.mulf %5, %239 : vector<4x4x128xf32>
    %cst_67 = arith.constant dense<0.000000e+00> : vector<4x128xf32>
    %241 = vector.multi_reduction <add>, %240, %cst_67 [1] : vector<4x4x128xf32> to vector<4x128xf32>
    %242 = arith.addf %241, %194 : vector<4x128xf32>
    %243 = arith.mulf %242, %237 : vector<4x128xf32>
    %cst_68 = arith.constant dense<0.000000e+00> : vector<128xf32>
    %244 = vector.multi_reduction <add>, %243, %cst_68 [0] : vector<4x128xf32> to vector<128xf32>
    %245 = vector.shape_cast %244 : vector<128xf32> to vector<1x128xf32>
    %246 = arith.sitofp %196 : vector<1x128xi32> to vector<1x128xf32>
    %247 = arith.mulf %245, %246 : vector<1x128xf32>
    %248 = arith.addf %191, %247 : vector<1x128xf32>
    %c5_i32 = arith.constant 5 : i32
    %249 = arith.index_cast %c5_i32 : i32 to index
    %c0_69 = arith.constant 0 : index
    %c0_70 = arith.constant 0 : index
    %250 = vector.load %arg1[%249, %c0_69, %c0_70] : memref<8x4x128xf32, #tpu.memory_space<vmem>>, vector<1x4x128xf32>
    %251 = vector.shape_cast %250 : vector<1x4x128xf32> to vector<4x128xf32>
    %252 = arith.index_cast %c5_i32 : i32 to index
    %c0_71 = arith.constant 0 : index
    %253 = vector.load %arg2[%252, %c0_71] : memref<8x128xi32, #tpu.memory_space<vmem>>, vector<1x128xi32>
    %c0_i32_72 = arith.constant 0 : i32
    %254 = vector.broadcast %c0_i32_72 : i32 to vector<1x128xi32>
    %255 = arith.cmpi sgt, %253, %254 : vector<1x128xi32>
    %256 = vector.shape_cast %213 : vector<4x128xf32> to vector<1x4x128xf32>
    %257 = vector.broadcast %256 : vector<1x4x128xf32> to vector<4x4x128xf32>
    %258 = arith.addf %257, %5 : vector<4x4x128xf32>
    %cst_73 = arith.constant dense<0xFF800000> : vector<4x128xf32>
    %259 = vector.multi_reduction <maximumf>, %258, %cst_73 [1] : vector<4x4x128xf32> to vector<4x128xf32>
    %260 = vector.shape_cast %259 : vector<4x128xf32> to vector<4x1x128xf32>
    %261 = vector.broadcast %260 : vector<4x1x128xf32> to vector<4x4x128xf32>
    %262 = arith.subf %258, %261 : vector<4x4x128xf32>
    %263 = math.exp %262 : vector<4x4x128xf32>
    %cst_74 = arith.constant dense<0.000000e+00> : vector<4x128xf32>
    %264 = vector.multi_reduction <add>, %263, %cst_74 [1] : vector<4x4x128xf32> to vector<4x128xf32>
    %265 = math.log %264 : vector<4x128xf32>
    %266 = arith.addf %259, %265 : vector<4x128xf32>
    %267 = arith.addf %266, %251 : vector<4x128xf32>
    %268 = vector.shape_cast %255 : vector<1x128xi1> to vector<1x128xi1>
    %269 = vector.broadcast %268 : vector<1x128xi1> to vector<4x128xi1>
    %270 = arith.select %269, %267, %213 : vector<4x128xi1>, vector<4x128xf32>
    %271 = vector.shape_cast %231 : vector<4x128xf32> to vector<1x4x128xf32>
    %272 = vector.broadcast %271 : vector<1x4x128xf32> to vector<4x4x128xf32>
    %273 = arith.addf %272, %5 : vector<4x4x128xf32>
    %cst_75 = arith.constant dense<0xFF800000> : vector<4x128xf32>
    %274 = vector.multi_reduction <maximumf>, %273, %cst_75 [1] : vector<4x4x128xf32> to vector<4x128xf32>
    %275 = vector.shape_cast %274 : vector<4x128xf32> to vector<4x1x128xf32>
    %276 = vector.broadcast %275 : vector<4x1x128xf32> to vector<4x4x128xf32>
    %277 = arith.cmpf oeq, %273, %276 : vector<4x4x128xf32>
    %c4_i32_76 = arith.constant 4 : i32
    %278 = vector.broadcast %c4_i32_76 : i32 to vector<4x4x128xi32>
    %279 = arith.select %277, %7, %278 : vector<4x4x128xi1>, vector<4x4x128xi32>
    %cst_77 = arith.constant dense<2147483647> : vector<4x128xi32>
    %280 = vector.multi_reduction <minsi>, %279, %cst_77 [1] : vector<4x4x128xi32> to vector<4x128xi32>
    %281 = vector.shape_cast %280 : vector<4x128xi32> to vector<1x4x128xi32>
    %c1_i32_78 = arith.constant 1 : i32
    %282 = arith.subi %c5_i32, %c1_i32_78 : i32
    %283 = arith.index_cast %282 : i32 to index
    %c0_79 = arith.constant 0 : index
    %c0_80 = arith.constant 0 : index
    %284 = vector.load %arg9[%283, %c0_79, %c0_80] : memref<7x4x128xi32, #tpu.memory_space<vmem>>, vector<1x4x128xi32>
    tpu.vector_store %arg9[%283, %c0_79, %c0_80], %281 {strides = array<i32>} : memref<7x4x128xi32, #tpu.memory_space<vmem>>, vector<1x4x128xi32>,
    %285 = arith.addf %274, %251 : vector<4x128xf32>
    %286 = vector.shape_cast %255 : vector<1x128xi1> to vector<1x128xi1>
    %287 = vector.broadcast %286 : vector<1x128xi1> to vector<4x128xi1>
    %288 = arith.select %287, %285, %231 : vector<4x128xi1>, vector<4x128xf32>
    %289 = arith.index_cast %c5_i32 : i32 to index
    %c0_81 = arith.constant 0 : index
    %290 = vector.load %arg3[%289, %c0_81] : memref<8x128xi32, #tpu.memory_space<vmem>>, vector<1x128xi32>
    %291 = vector.broadcast %290 : vector<1x128xi32> to vector<4x128xi32>
    %292 = arith.cmpi eq, %6, %291 : vector<4x128xi32>
    %293 = arith.extui %292 : vector<4x128xi1> to vector<4x128xi32>
    %294 = arith.sitofp %293 : vector<4x128xi32> to vector<4x128xf32>
    %295 = vector.shape_cast %237 : vector<4x128xf32> to vector<1x4x128xf32>
    %296 = vector.broadcast %295 : vector<1x4x128xf32> to vector<4x4x128xf32>
    %297 = arith.mulf %5, %296 : vector<4x4x128xf32>
    %cst_82 = arith.constant dense<0.000000e+00> : vector<4x128xf32>
    %298 = vector.multi_reduction <add>, %297, %cst_82 [1] : vector<4x4x128xf32> to vector<4x128xf32>
    %299 = arith.addf %298, %251 : vector<4x128xf32>
    %300 = arith.mulf %299, %294 : vector<4x128xf32>
    %cst_83 = arith.constant dense<0.000000e+00> : vector<128xf32>
    %301 = vector.multi_reduction <add>, %300, %cst_83 [0] : vector<4x128xf32> to vector<128xf32>
    %302 = vector.shape_cast %301 : vector<128xf32> to vector<1x128xf32>
    %303 = arith.sitofp %253 : vector<1x128xi32> to vector<1x128xf32>
    %304 = arith.mulf %302, %303 : vector<1x128xf32>
    %305 = arith.addf %248, %304 : vector<1x128xf32>
    %c6_i32 = arith.constant 6 : i32
    %306 = arith.index_cast %c6_i32 : i32 to index
    %c0_84 = arith.constant 0 : index
    %c0_85 = arith.constant 0 : index
    %307 = vector.load %arg1[%306, %c0_84, %c0_85] : memref<8x4x128xf32, #tpu.memory_space<vmem>>, vector<1x4x128xf32>
    %308 = vector.shape_cast %307 : vector<1x4x128xf32> to vector<4x128xf32>
    %309 = arith.index_cast %c6_i32 : i32 to index
    %c0_86 = arith.constant 0 : index
    %310 = vector.load %arg2[%309, %c0_86] : memref<8x128xi32, #tpu.memory_space<vmem>>, vector<1x128xi32>
    %c0_i32_87 = arith.constant 0 : i32
    %311 = vector.broadcast %c0_i32_87 : i32 to vector<1x128xi32>
    %312 = arith.cmpi sgt, %310, %311 : vector<1x128xi32>
    %313 = vector.shape_cast %270 : vector<4x128xf32> to vector<1x4x128xf32>
    %314 = vector.broadcast %313 : vector<1x4x128xf32> to vector<4x4x128xf32>
    %315 = arith.addf %314, %5 : vector<4x4x128xf32>
    %cst_88 = arith.constant dense<0xFF800000> : vector<4x128xf32>
    %316 = vector.multi_reduction <maximumf>, %315, %cst_88 [1] : vector<4x4x128xf32> to vector<4x128xf32>
    %317 = vector.shape_cast %316 : vector<4x128xf32> to vector<4x1x128xf32>
    %318 = vector.broadcast %317 : vector<4x1x128xf32> to vector<4x4x128xf32>
    %319 = arith.subf %315, %318 : vector<4x4x128xf32>
    %320 = math.exp %319 : vector<4x4x128xf32>
    %cst_89 = arith.constant dense<0.000000e+00> : vector<4x128xf32>
    %321 = vector.multi_reduction <add>, %320, %cst_89 [1] : vector<4x4x128xf32> to vector<4x128xf32>
    %322 = math.log %321 : vector<4x128xf32>
    %323 = arith.addf %316, %322 : vector<4x128xf32>
    %324 = arith.addf %323, %308 : vector<4x128xf32>
    %325 = vector.shape_cast %312 : vector<1x128xi1> to vector<1x128xi1>
    %326 = vector.broadcast %325 : vector<1x128xi1> to vector<4x128xi1>
    %327 = arith.select %326, %324, %270 : vector<4x128xi1>, vector<4x128xf32>
    %328 = vector.shape_cast %288 : vector<4x128xf32> to vector<1x4x128xf32>
    %329 = vector.broadcast %328 : vector<1x4x128xf32> to vector<4x4x128xf32>
    %330 = arith.addf %329, %5 : vector<4x4x128xf32>
    %cst_90 = arith.constant dense<0xFF800000> : vector<4x128xf32>
    %331 = vector.multi_reduction <maximumf>, %330, %cst_90 [1] : vector<4x4x128xf32> to vector<4x128xf32>
    %332 = vector.shape_cast %331 : vector<4x128xf32> to vector<4x1x128xf32>
    %333 = vector.broadcast %332 : vector<4x1x128xf32> to vector<4x4x128xf32>
    %334 = arith.cmpf oeq, %330, %333 : vector<4x4x128xf32>
    %c4_i32_91 = arith.constant 4 : i32
    %335 = vector.broadcast %c4_i32_91 : i32 to vector<4x4x128xi32>
    %336 = arith.select %334, %7, %335 : vector<4x4x128xi1>, vector<4x4x128xi32>
    %cst_92 = arith.constant dense<2147483647> : vector<4x128xi32>
    %337 = vector.multi_reduction <minsi>, %336, %cst_92 [1] : vector<4x4x128xi32> to vector<4x128xi32>
    %338 = vector.shape_cast %337 : vector<4x128xi32> to vector<1x4x128xi32>
    %c1_i32_93 = arith.constant 1 : i32
    %339 = arith.subi %c6_i32, %c1_i32_93 : i32
    %340 = arith.index_cast %339 : i32 to index
    %c0_94 = arith.constant 0 : index
    %c0_95 = arith.constant 0 : index
    %341 = vector.load %arg9[%340, %c0_94, %c0_95] : memref<7x4x128xi32, #tpu.memory_space<vmem>>, vector<1x4x128xi32>
    tpu.vector_store %arg9[%340, %c0_94, %c0_95], %338 {strides = array<i32>} : memref<7x4x128xi32, #tpu.memory_space<vmem>>, vector<1x4x128xi32>,
    %342 = arith.addf %331, %308 : vector<4x128xf32>
    %343 = vector.shape_cast %312 : vector<1x128xi1> to vector<1x128xi1>
    %344 = vector.broadcast %343 : vector<1x128xi1> to vector<4x128xi1>
    %345 = arith.select %344, %342, %288 : vector<4x128xi1>, vector<4x128xf32>
    %346 = arith.index_cast %c6_i32 : i32 to index
    %c0_96 = arith.constant 0 : index
    %347 = vector.load %arg3[%346, %c0_96] : memref<8x128xi32, #tpu.memory_space<vmem>>, vector<1x128xi32>
    %348 = vector.broadcast %347 : vector<1x128xi32> to vector<4x128xi32>
    %349 = arith.cmpi eq, %6, %348 : vector<4x128xi32>
    %350 = arith.extui %349 : vector<4x128xi1> to vector<4x128xi32>
    %351 = arith.sitofp %350 : vector<4x128xi32> to vector<4x128xf32>
    %352 = vector.shape_cast %294 : vector<4x128xf32> to vector<1x4x128xf32>
    %353 = vector.broadcast %352 : vector<1x4x128xf32> to vector<4x4x128xf32>
    %354 = arith.mulf %5, %353 : vector<4x4x128xf32>
    %cst_97 = arith.constant dense<0.000000e+00> : vector<4x128xf32>
    %355 = vector.multi_reduction <add>, %354, %cst_97 [1] : vector<4x4x128xf32> to vector<4x128xf32>
    %356 = arith.addf %355, %308 : vector<4x128xf32>
    %357 = arith.mulf %356, %351 : vector<4x128xf32>
    %cst_98 = arith.constant dense<0.000000e+00> : vector<128xf32>
    %358 = vector.multi_reduction <add>, %357, %cst_98 [0] : vector<4x128xf32> to vector<128xf32>
    %359 = vector.shape_cast %358 : vector<128xf32> to vector<1x128xf32>
    %360 = arith.sitofp %310 : vector<1x128xi32> to vector<1x128xf32>
    %361 = arith.mulf %359, %360 : vector<1x128xf32>
    %362 = arith.addf %305, %361 : vector<1x128xf32>
    %c7_i32 = arith.constant 7 : i32
    %363 = arith.index_cast %c7_i32 : i32 to index
    %c0_99 = arith.constant 0 : index
    %c0_100 = arith.constant 0 : index
    %364 = vector.load %arg1[%363, %c0_99, %c0_100] : memref<8x4x128xf32, #tpu.memory_space<vmem>>, vector<1x4x128xf32>
    %365 = vector.shape_cast %364 : vector<1x4x128xf32> to vector<4x128xf32>
    %366 = arith.index_cast %c7_i32 : i32 to index
    %c0_101 = arith.constant 0 : index
    %367 = vector.load %arg2[%366, %c0_101] : memref<8x128xi32, #tpu.memory_space<vmem>>, vector<1x128xi32>
    %c0_i32_102 = arith.constant 0 : i32
    %368 = vector.broadcast %c0_i32_102 : i32 to vector<1x128xi32>
    %369 = arith.cmpi sgt, %367, %368 : vector<1x128xi32>
    %370 = vector.shape_cast %327 : vector<4x128xf32> to vector<1x4x128xf32>
    %371 = vector.broadcast %370 : vector<1x4x128xf32> to vector<4x4x128xf32>
    %372 = arith.addf %371, %5 : vector<4x4x128xf32>
    %cst_103 = arith.constant dense<0xFF800000> : vector<4x128xf32>
    %373 = vector.multi_reduction <maximumf>, %372, %cst_103 [1] : vector<4x4x128xf32> to vector<4x128xf32>
    %374 = vector.shape_cast %373 : vector<4x128xf32> to vector<4x1x128xf32>
    %375 = vector.broadcast %374 : vector<4x1x128xf32> to vector<4x4x128xf32>
    %376 = arith.subf %372, %375 : vector<4x4x128xf32>
    %377 = math.exp %376 : vector<4x4x128xf32>
    %cst_104 = arith.constant dense<0.000000e+00> : vector<4x128xf32>
    %378 = vector.multi_reduction <add>, %377, %cst_104 [1] : vector<4x4x128xf32> to vector<4x128xf32>
    %379 = math.log %378 : vector<4x128xf32>
    %380 = arith.addf %373, %379 : vector<4x128xf32>
    %381 = arith.addf %380, %365 : vector<4x128xf32>
    %382 = vector.shape_cast %369 : vector<1x128xi1> to vector<1x128xi1>
    %383 = vector.broadcast %382 : vector<1x128xi1> to vector<4x128xi1>
    %384 = arith.select %383, %381, %327 : vector<4x128xi1>, vector<4x128xf32>
    %385 = vector.shape_cast %345 : vector<4x128xf32> to vector<1x4x128xf32>
    %386 = vector.broadcast %385 : vector<1x4x128xf32> to vector<4x4x128xf32>
    %387 = arith.addf %386, %5 : vector<4x4x128xf32>
    %cst_105 = arith.constant dense<0xFF800000> : vector<4x128xf32>
    %388 = vector.multi_reduction <maximumf>, %387, %cst_105 [1] : vector<4x4x128xf32> to vector<4x128xf32>
    %389 = vector.shape_cast %388 : vector<4x128xf32> to vector<4x1x128xf32>
    %390 = vector.broadcast %389 : vector<4x1x128xf32> to vector<4x4x128xf32>
    %391 = arith.cmpf oeq, %387, %390 : vector<4x4x128xf32>
    %c4_i32_106 = arith.constant 4 : i32
    %392 = vector.broadcast %c4_i32_106 : i32 to vector<4x4x128xi32>
    %393 = arith.select %391, %7, %392 : vector<4x4x128xi1>, vector<4x4x128xi32>
    %cst_107 = arith.constant dense<2147483647> : vector<4x128xi32>
    %394 = vector.multi_reduction <minsi>, %393, %cst_107 [1] : vector<4x4x128xi32> to vector<4x128xi32>
    %395 = vector.shape_cast %394 : vector<4x128xi32> to vector<1x4x128xi32>
    %c1_i32_108 = arith.constant 1 : i32
    %396 = arith.subi %c7_i32, %c1_i32_108 : i32
    %397 = arith.index_cast %396 : i32 to index
    %c0_109 = arith.constant 0 : index
    %c0_110 = arith.constant 0 : index
    %398 = vector.load %arg9[%397, %c0_109, %c0_110] : memref<7x4x128xi32, #tpu.memory_space<vmem>>, vector<1x4x128xi32>
    tpu.vector_store %arg9[%397, %c0_109, %c0_110], %395 {strides = array<i32>} : memref<7x4x128xi32, #tpu.memory_space<vmem>>, vector<1x4x128xi32>,
    %399 = arith.addf %388, %365 : vector<4x128xf32>
    %400 = vector.shape_cast %369 : vector<1x128xi1> to vector<1x128xi1>
    %401 = vector.broadcast %400 : vector<1x128xi1> to vector<4x128xi1>
    %402 = arith.select %401, %399, %345 : vector<4x128xi1>, vector<4x128xf32>
    %403 = arith.index_cast %c7_i32 : i32 to index
    %c0_111 = arith.constant 0 : index
    %404 = vector.load %arg3[%403, %c0_111] : memref<8x128xi32, #tpu.memory_space<vmem>>, vector<1x128xi32>
    %405 = vector.broadcast %404 : vector<1x128xi32> to vector<4x128xi32>
    %406 = arith.cmpi eq, %6, %405 : vector<4x128xi32>
    %407 = arith.extui %406 : vector<4x128xi1> to vector<4x128xi32>
    %408 = arith.sitofp %407 : vector<4x128xi32> to vector<4x128xf32>
    %409 = vector.shape_cast %351 : vector<4x128xf32> to vector<1x4x128xf32>
    %410 = vector.broadcast %409 : vector<1x4x128xf32> to vector<4x4x128xf32>
    %411 = arith.mulf %5, %410 : vector<4x4x128xf32>
    %cst_112 = arith.constant dense<0.000000e+00> : vector<4x128xf32>
    %412 = vector.multi_reduction <add>, %411, %cst_112 [1] : vector<4x4x128xf32> to vector<4x128xf32>
    %413 = arith.addf %412, %365 : vector<4x128xf32>
    %414 = arith.mulf %413, %408 : vector<4x128xf32>
    %cst_113 = arith.constant dense<0.000000e+00> : vector<128xf32>
    %415 = vector.multi_reduction <add>, %414, %cst_113 [0] : vector<4x128xf32> to vector<128xf32>
    %416 = vector.shape_cast %415 : vector<128xf32> to vector<1x128xf32>
    %417 = arith.sitofp %367 : vector<1x128xi32> to vector<1x128xf32>
    %418 = arith.mulf %416, %417 : vector<1x128xf32>
    %419 = arith.addf %362, %418 : vector<1x128xf32>
    %c7_i32_114 = arith.constant 7 : i32
    %c0_115 = arith.constant 0 : index
    %c0_116 = arith.constant 0 : index
    %420 = vector.load %arg2[%c0_115, %c0_116] : memref<8x128xi32, #tpu.memory_space<vmem>>, vector<8x128xi32>
    %c0_117 = arith.constant 0 : index
    %c0_118 = arith.constant 0 : index
    %421 = vector.load %arg3[%c0_117, %c0_118] : memref<8x128xi32, #tpu.memory_space<vmem>>, vector<8x128xi32>
    %cst_119 = arith.constant dense<0> : vector<128xi32>
    %422 = vector.multi_reduction <add>, %420, %cst_119 [0] : vector<8x128xi32> to vector<128xi32>
    %423 = vector.shape_cast %422 : vector<128xi32> to vector<1x128xi32>
    %c1_i32_120 = arith.constant 1 : i32
    %424 = vector.broadcast %c1_i32_120 : i32 to vector<1x128xi32>
    %425 = arith.subi %423, %424 : vector<1x128xi32>
    %426 = vector.broadcast %425 : vector<1x128xi32> to vector<8x128xi32>
    %427 = arith.cmpi eq, %8, %426 : vector<8x128xi32>
    %c0_i32_121 = arith.constant 0 : i32
    %428 = vector.broadcast %c0_i32_121 : i32 to vector<8x128xi32>
    %429 = arith.select %427, %421, %428 : vector<8x128xi1>, vector<8x128xi32>
    %cst_122 = arith.constant dense<0> : vector<128xi32>
    %430 = vector.multi_reduction <add>, %429, %cst_122 [0] : vector<8x128xi32> to vector<128xi32>
    %431 = vector.shape_cast %430 : vector<128xi32> to vector<1x128xi32>
    %432 = vector.broadcast %431 : vector<1x128xi32> to vector<4x128xi32>
    %433 = arith.cmpi eq, %6, %432 : vector<4x128xi32>
    %434 = arith.extui %433 : vector<4x128xi1> to vector<4x128xi32>
    %435 = arith.sitofp %434 : vector<4x128xi32> to vector<4x128xf32>
    %436 = vector.broadcast %1 : vector<4x1xf32> to vector<4x128xf32>
    %437 = arith.mulf %436, %435 : vector<4x128xf32>
    %cst_123 = arith.constant dense<0.000000e+00> : vector<128xf32>
    %438 = vector.multi_reduction <add>, %437, %cst_123 [0] : vector<4x128xf32> to vector<128xf32>
    %439 = vector.shape_cast %438 : vector<128xf32> to vector<1x128xf32>
    %440 = arith.addf %419, %439 : vector<1x128xf32>
    %441 = vector.broadcast %1 : vector<4x1xf32> to vector<4x128xf32>
    %442 = arith.addf %384, %441 : vector<4x128xf32>
    %cst_124 = arith.constant dense<0xFF800000> : vector<128xf32>
    %443 = vector.multi_reduction <maximumf>, %442, %cst_124 [0] : vector<4x128xf32> to vector<128xf32>
    %444 = vector.shape_cast %443 : vector<128xf32> to vector<1x128xf32>
    %445 = vector.broadcast %444 : vector<1x128xf32> to vector<4x128xf32>
    %446 = arith.subf %442, %445 : vector<4x128xf32>
    %447 = math.exp %446 : vector<4x128xf32>
    %cst_125 = arith.constant dense<0.000000e+00> : vector<128xf32>
    %448 = vector.multi_reduction <add>, %447, %cst_125 [0] : vector<4x128xf32> to vector<128xf32>
    %449 = vector.shape_cast %448 : vector<128xf32> to vector<1x128xf32>
    %450 = math.log %449 : vector<1x128xf32>
    %451 = arith.addf %444, %450 : vector<1x128xf32>
    %452 = arith.subf %451, %440 : vector<1x128xf32>
    %c0_126 = arith.constant 0 : index
    %c0_127 = arith.constant 0 : index
    %453 = vector.load %arg8[%c0_126, %c0_127] : memref<1x128xf32, #tpu.memory_space<vmem>>, vector<1x128xf32>
    tpu.vector_store %arg8[%c0_126, %c0_127], %452 {strides = array<i32>} : memref<1x128xf32, #tpu.memory_space<vmem>>, vector<1x128xf32>,
    %454 = vector.broadcast %1 : vector<4x1xf32> to vector<4x128xf32>
    %455 = arith.addf %402, %454 : vector<4x128xf32>
    %cst_128 = arith.constant dense<0xFF800000> : vector<128xf32>
    %456 = vector.multi_reduction <maximumf>, %455, %cst_128 [0] : vector<4x128xf32> to vector<128xf32>
    %457 = vector.shape_cast %456 : vector<128xf32> to vector<1x128xf32>
    %458 = vector.broadcast %457 : vector<1x128xf32> to vector<4x128xf32>
    %459 = arith.cmpf oeq, %455, %458 : vector<4x128xf32>
    %c4_i32_129 = arith.constant 4 : i32
    %460 = vector.broadcast %c4_i32_129 : i32 to vector<4x128xi32>
    %461 = arith.select %459, %6, %460 : vector<4x128xi1>, vector<4x128xi32>
    %cst_130 = arith.constant dense<2147483647> : vector<128xi32>
    %462 = vector.multi_reduction <minsi>, %461, %cst_130 [0] : vector<4x128xi32> to vector<128xi32>
    %463 = vector.shape_cast %462 : vector<128xi32> to vector<1x128xi32>
    %464 = vector.broadcast %425 : vector<1x128xi32> to vector<8x128xi32>
    %465 = arith.cmpi eq, %8, %464 : vector<8x128xi32>
    %c0_i32_131 = arith.constant 0 : i32
    %466 = vector.shape_cast %463 : vector<1x128xi32> to vector<1x128xi32>
    %467 = vector.broadcast %466 : vector<1x128xi32> to vector<8x128xi32>
    %468 = vector.broadcast %c0_i32_131 : i32 to vector<8x128xi32>
    %469 = arith.select %465, %467, %468 : vector<8x128xi1>, vector<8x128xi32>
    %c0_132 = arith.constant 0 : index
    %c0_133 = arith.constant 0 : index
    %470 = vector.load %arg7[%c0_132, %c0_133] : memref<8x128xi32, #tpu.memory_space<vmem>>, vector<8x128xi32>
    tpu.vector_store %arg7[%c0_132, %c0_133], %469 {strides = array<i32>} : memref<8x128xi32, #tpu.memory_space<vmem>>, vector<8x128xi32>,
    %c0_i32_134 = arith.constant 0 : i32
    %c7_i32_135 = arith.constant 7 : i32
    %471 = arith.subi %c7_i32_135, %c0_i32_134 : i32
    %c1_i32_136 = arith.constant 1 : i32
    %472 = arith.subi %471, %c1_i32_136 : i32
    %473 = arith.index_cast %472 : i32 to index
    %c0_137 = arith.constant 0 : index
    %c0_138 = arith.constant 0 : index
    %474 = vector.load %arg9[%473, %c0_137, %c0_138] : memref<7x4x128xi32, #tpu.memory_space<vmem>>, vector<1x4x128xi32>
    %475 = vector.shape_cast %474 : vector<1x4x128xi32> to vector<4x128xi32>
    %476 = vector.broadcast %471 : i32 to vector<1x128xi32>
    %477 = arith.cmpi sge, %425, %476 : vector<1x128xi32>
    %478 = vector.broadcast %463 : vector<1x128xi32> to vector<4x128xi32>
    %479 = arith.cmpi eq, %6, %478 : vector<4x128xi32>
    %c0_i32_139 = arith.constant 0 : i32
    %480 = vector.broadcast %c0_i32_139 : i32 to vector<4x128xi32>
    %481 = arith.select %479, %475, %480 : vector<4x128xi1>, vector<4x128xi32>
    %cst_140 = arith.constant dense<0> : vector<128xi32>
    %482 = vector.multi_reduction <add>, %481, %cst_140 [0] : vector<4x128xi32> to vector<128xi32>
    %483 = vector.shape_cast %482 : vector<128xi32> to vector<1x128xi32>
    %484 = arith.select %477, %483, %463 : vector<1x128xi1>, vector<1x128xi32>
    %c1_i32_141 = arith.constant 1 : i32
    %485 = arith.subi %471, %c1_i32_141 : i32
    %486 = arith.index_cast %485 : i32 to index
    %c0_142 = arith.constant 0 : index
    %487 = vector.load %arg7[%486, %c0_142] : memref<8x128xi32, #tpu.memory_space<vmem>>, vector<1x128xi32>
    tpu.vector_store %arg7[%486, %c0_142], %484 masked %477 {strides = array<i32>} : memref<8x128xi32, #tpu.memory_space<vmem>>, vector<1x128xi32>, vector<1x128xi1>
    %c1_i32_143 = arith.constant 1 : i32
    %c7_i32_144 = arith.constant 7 : i32
    %488 = arith.subi %c7_i32_144, %c1_i32_143 : i32
    %c1_i32_145 = arith.constant 1 : i32
    %489 = arith.subi %488, %c1_i32_145 : i32
    %490 = arith.index_cast %489 : i32 to index
    %c0_146 = arith.constant 0 : index
    %c0_147 = arith.constant 0 : index
    %491 = vector.load %arg9[%490, %c0_146, %c0_147] : memref<7x4x128xi32, #tpu.memory_space<vmem>>, vector<1x4x128xi32>
    %492 = vector.shape_cast %491 : vector<1x4x128xi32> to vector<4x128xi32>
    %493 = vector.broadcast %488 : i32 to vector<1x128xi32>
    %494 = arith.cmpi sge, %425, %493 : vector<1x128xi32>
    %495 = vector.broadcast %484 : vector<1x128xi32> to vector<4x128xi32>
    %496 = arith.cmpi eq, %6, %495 : vector<4x128xi32>
    %c0_i32_148 = arith.constant 0 : i32
    %497 = vector.broadcast %c0_i32_148 : i32 to vector<4x128xi32>
    %498 = arith.select %496, %492, %497 : vector<4x128xi1>, vector<4x128xi32>
    %cst_149 = arith.constant dense<0> : vector<128xi32>
    %499 = vector.multi_reduction <add>, %498, %cst_149 [0] : vector<4x128xi32> to vector<128xi32>
    %500 = vector.shape_cast %499 : vector<128xi32> to vector<1x128xi32>
    %501 = arith.select %494, %500, %484 : vector<1x128xi1>, vector<1x128xi32>
    %c1_i32_150 = arith.constant 1 : i32
    %502 = arith.subi %488, %c1_i32_150 : i32
    %503 = arith.index_cast %502 : i32 to index
    %c0_151 = arith.constant 0 : index
    %504 = vector.load %arg7[%503, %c0_151] : memref<8x128xi32, #tpu.memory_space<vmem>>, vector<1x128xi32>
    tpu.vector_store %arg7[%503, %c0_151], %501 masked %494 {strides = array<i32>} : memref<8x128xi32, #tpu.memory_space<vmem>>, vector<1x128xi32>, vector<1x128xi1>
    %c2_i32_152 = arith.constant 2 : i32
    %c7_i32_153 = arith.constant 7 : i32
    %505 = arith.subi %c7_i32_153, %c2_i32_152 : i32
    %c1_i32_154 = arith.constant 1 : i32
    %506 = arith.subi %505, %c1_i32_154 : i32
    %507 = arith.index_cast %506 : i32 to index
    %c0_155 = arith.constant 0 : index
    %c0_156 = arith.constant 0 : index
    %508 = vector.load %arg9[%507, %c0_155, %c0_156] : memref<7x4x128xi32, #tpu.memory_space<vmem>>, vector<1x4x128xi32>
    %509 = vector.shape_cast %508 : vector<1x4x128xi32> to vector<4x128xi32>
    %510 = vector.broadcast %505 : i32 to vector<1x128xi32>
    %511 = arith.cmpi sge, %425, %510 : vector<1x128xi32>
    %512 = vector.broadcast %501 : vector<1x128xi32> to vector<4x128xi32>
    %513 = arith.cmpi eq, %6, %512 : vector<4x128xi32>
    %c0_i32_157 = arith.constant 0 : i32
    %514 = vector.broadcast %c0_i32_157 : i32 to vector<4x128xi32>
    %515 = arith.select %513, %509, %514 : vector<4x128xi1>, vector<4x128xi32>
    %cst_158 = arith.constant dense<0> : vector<128xi32>
    %516 = vector.multi_reduction <add>, %515, %cst_158 [0] : vector<4x128xi32> to vector<128xi32>
    %517 = vector.shape_cast %516 : vector<128xi32> to vector<1x128xi32>
    %518 = arith.select %511, %517, %501 : vector<1x128xi1>, vector<1x128xi32>
    %c1_i32_159 = arith.constant 1 : i32
    %519 = arith.subi %505, %c1_i32_159 : i32
    %520 = arith.index_cast %519 : i32 to index
    %c0_160 = arith.constant 0 : index
    %521 = vector.load %arg7[%520, %c0_160] : memref<8x128xi32, #tpu.memory_space<vmem>>, vector<1x128xi32>
    tpu.vector_store %arg7[%520, %c0_160], %518 masked %511 {strides = array<i32>} : memref<8x128xi32, #tpu.memory_space<vmem>>, vector<1x128xi32>, vector<1x128xi1>
    %c3_i32_161 = arith.constant 3 : i32
    %c7_i32_162 = arith.constant 7 : i32
    %522 = arith.subi %c7_i32_162, %c3_i32_161 : i32
    %c1_i32_163 = arith.constant 1 : i32
    %523 = arith.subi %522, %c1_i32_163 : i32
    %524 = arith.index_cast %523 : i32 to index
    %c0_164 = arith.constant 0 : index
    %c0_165 = arith.constant 0 : index
    %525 = vector.load %arg9[%524, %c0_164, %c0_165] : memref<7x4x128xi32, #tpu.memory_space<vmem>>, vector<1x4x128xi32>
    %526 = vector.shape_cast %525 : vector<1x4x128xi32> to vector<4x128xi32>
    %527 = vector.broadcast %522 : i32 to vector<1x128xi32>
    %528 = arith.cmpi sge, %425, %527 : vector<1x128xi32>
    %529 = vector.broadcast %518 : vector<1x128xi32> to vector<4x128xi32>
    %530 = arith.cmpi eq, %6, %529 : vector<4x128xi32>
    %c0_i32_166 = arith.constant 0 : i32
    %531 = vector.broadcast %c0_i32_166 : i32 to vector<4x128xi32>
    %532 = arith.select %530, %526, %531 : vector<4x128xi1>, vector<4x128xi32>
    %cst_167 = arith.constant dense<0> : vector<128xi32>
    %533 = vector.multi_reduction <add>, %532, %cst_167 [0] : vector<4x128xi32> to vector<128xi32>
    %534 = vector.shape_cast %533 : vector<128xi32> to vector<1x128xi32>
    %535 = arith.select %528, %534, %518 : vector<1x128xi1>, vector<1x128xi32>
    %c1_i32_168 = arith.constant 1 : i32
    %536 = arith.subi %522, %c1_i32_168 : i32
    %537 = arith.index_cast %536 : i32 to index
    %c0_169 = arith.constant 0 : index
    %538 = vector.load %arg7[%537, %c0_169] : memref<8x128xi32, #tpu.memory_space<vmem>>, vector<1x128xi32>
    tpu.vector_store %arg7[%537, %c0_169], %535 masked %528 {strides = array<i32>} : memref<8x128xi32, #tpu.memory_space<vmem>>, vector<1x128xi32>, vector<1x128xi1>
    %c4_i32_170 = arith.constant 4 : i32
    %c7_i32_171 = arith.constant 7 : i32
    %539 = arith.subi %c7_i32_171, %c4_i32_170 : i32
    %c1_i32_172 = arith.constant 1 : i32
    %540 = arith.subi %539, %c1_i32_172 : i32
    %541 = arith.index_cast %540 : i32 to index
    %c0_173 = arith.constant 0 : index
    %c0_174 = arith.constant 0 : index
    %542 = vector.load %arg9[%541, %c0_173, %c0_174] : memref<7x4x128xi32, #tpu.memory_space<vmem>>, vector<1x4x128xi32>
    %543 = vector.shape_cast %542 : vector<1x4x128xi32> to vector<4x128xi32>
    %544 = vector.broadcast %539 : i32 to vector<1x128xi32>
    %545 = arith.cmpi sge, %425, %544 : vector<1x128xi32>
    %546 = vector.broadcast %535 : vector<1x128xi32> to vector<4x128xi32>
    %547 = arith.cmpi eq, %6, %546 : vector<4x128xi32>
    %c0_i32_175 = arith.constant 0 : i32
    %548 = vector.broadcast %c0_i32_175 : i32 to vector<4x128xi32>
    %549 = arith.select %547, %543, %548 : vector<4x128xi1>, vector<4x128xi32>
    %cst_176 = arith.constant dense<0> : vector<128xi32>
    %550 = vector.multi_reduction <add>, %549, %cst_176 [0] : vector<4x128xi32> to vector<128xi32>
    %551 = vector.shape_cast %550 : vector<128xi32> to vector<1x128xi32>
    %552 = arith.select %545, %551, %535 : vector<1x128xi1>, vector<1x128xi32>
    %c1_i32_177 = arith.constant 1 : i32
    %553 = arith.subi %539, %c1_i32_177 : i32
    %554 = arith.index_cast %553 : i32 to index
    %c0_178 = arith.constant 0 : index
    %555 = vector.load %arg7[%554, %c0_178] : memref<8x128xi32, #tpu.memory_space<vmem>>, vector<1x128xi32>
    tpu.vector_store %arg7[%554, %c0_178], %552 masked %545 {strides = array<i32>} : memref<8x128xi32, #tpu.memory_space<vmem>>, vector<1x128xi32>, vector<1x128xi1>
    %c5_i32_179 = arith.constant 5 : i32
    %c7_i32_180 = arith.constant 7 : i32
    %556 = arith.subi %c7_i32_180, %c5_i32_179 : i32
    %c1_i32_181 = arith.constant 1 : i32
    %557 = arith.subi %556, %c1_i32_181 : i32
    %558 = arith.index_cast %557 : i32 to index
    %c0_182 = arith.constant 0 : index
    %c0_183 = arith.constant 0 : index
    %559 = vector.load %arg9[%558, %c0_182, %c0_183] : memref<7x4x128xi32, #tpu.memory_space<vmem>>, vector<1x4x128xi32>
    %560 = vector.shape_cast %559 : vector<1x4x128xi32> to vector<4x128xi32>
    %561 = vector.broadcast %556 : i32 to vector<1x128xi32>
    %562 = arith.cmpi sge, %425, %561 : vector<1x128xi32>
    %563 = vector.broadcast %552 : vector<1x128xi32> to vector<4x128xi32>
    %564 = arith.cmpi eq, %6, %563 : vector<4x128xi32>
    %c0_i32_184 = arith.constant 0 : i32
    %565 = vector.broadcast %c0_i32_184 : i32 to vector<4x128xi32>
    %566 = arith.select %564, %560, %565 : vector<4x128xi1>, vector<4x128xi32>
    %cst_185 = arith.constant dense<0> : vector<128xi32>
    %567 = vector.multi_reduction <add>, %566, %cst_185 [0] : vector<4x128xi32> to vector<128xi32>
    %568 = vector.shape_cast %567 : vector<128xi32> to vector<1x128xi32>
    %569 = arith.select %562, %568, %552 : vector<1x128xi1>, vector<1x128xi32>
    %c1_i32_186 = arith.constant 1 : i32
    %570 = arith.subi %556, %c1_i32_186 : i32
    %571 = arith.index_cast %570 : i32 to index
    %c0_187 = arith.constant 0 : index
    %572 = vector.load %arg7[%571, %c0_187] : memref<8x128xi32, #tpu.memory_space<vmem>>, vector<1x128xi32>
    tpu.vector_store %arg7[%571, %c0_187], %569 masked %562 {strides = array<i32>} : memref<8x128xi32, #tpu.memory_space<vmem>>, vector<1x128xi32>, vector<1x128xi1>
    %c6_i32_188 = arith.constant 6 : i32
    %c7_i32_189 = arith.constant 7 : i32
    %573 = arith.subi %c7_i32_189, %c6_i32_188 : i32
    %c1_i32_190 = arith.constant 1 : i32
    %574 = arith.subi %573, %c1_i32_190 : i32
    %575 = arith.index_cast %574 : i32 to index
    %c0_191 = arith.constant 0 : index
    %c0_192 = arith.constant 0 : index
    %576 = vector.load %arg9[%575, %c0_191, %c0_192] : memref<7x4x128xi32, #tpu.memory_space<vmem>>, vector<1x4x128xi32>
    %577 = vector.shape_cast %576 : vector<1x4x128xi32> to vector<4x128xi32>
    %578 = vector.broadcast %573 : i32 to vector<1x128xi32>
    %579 = arith.cmpi sge, %425, %578 : vector<1x128xi32>
    %580 = vector.broadcast %569 : vector<1x128xi32> to vector<4x128xi32>
    %581 = arith.cmpi eq, %6, %580 : vector<4x128xi32>
    %c0_i32_193 = arith.constant 0 : i32
    %582 = vector.broadcast %c0_i32_193 : i32 to vector<4x128xi32>
    %583 = arith.select %581, %577, %582 : vector<4x128xi1>, vector<4x128xi32>
    %cst_194 = arith.constant dense<0> : vector<128xi32>
    %584 = vector.multi_reduction <add>, %583, %cst_194 [0] : vector<4x128xi32> to vector<128xi32>
    %585 = vector.shape_cast %584 : vector<128xi32> to vector<1x128xi32>
    %586 = arith.select %579, %585, %569 : vector<1x128xi1>, vector<1x128xi32>
    %c1_i32_195 = arith.constant 1 : i32
    %587 = arith.subi %573, %c1_i32_195 : i32
    %588 = arith.index_cast %587 : i32 to index
    %c0_196 = arith.constant 0 : index
    %589 = vector.load %arg7[%588, %c0_196] : memref<8x128xi32, #tpu.memory_space<vmem>>, vector<1x128xi32>
    tpu.vector_store %arg7[%588, %c0_196], %586 masked %579 {strides = array<i32>} : memref<8x128xi32, #tpu.memory_space<vmem>>, vector<1x128xi32>, vector<1x128xi1>
    %c7_i32_197 = arith.constant 7 : i32
    return
  }
  func.func @transform_0(%arg0: i32) -> (i32, i32, i32) {
    %c0_i32 = arith.constant 0 : i32
    %c0_i32_0 = arith.constant 0 : i32
    %c0_i32_1 = arith.constant 0 : i32
    return %c0_i32, %c0_i32_0, %arg0 : i32, i32, i32
  }
  func.func @transform_1(%arg0: i32) -> (i32, i32) {
    %c0_i32 = arith.constant 0 : i32
    %c0_i32_0 = arith.constant 0 : i32
    return %c0_i32, %arg0 : i32, i32
  }
  func.func @transform_2(%arg0: i32) -> (i32, i32) {
    %c0_i32 = arith.constant 0 : i32
    %c0_i32_0 = arith.constant 0 : i32
    return %c0_i32, %arg0 : i32, i32
  }
  func.func @transform_3(%arg0: i32) -> (i32, i32) {
    %c0_i32 = arith.constant 0 : i32
    %c0_i32_0 = arith.constant 0 : i32
    %c0_i32_1 = arith.constant 0 : i32
    return %c0_i32, %c0_i32_0 : i32, i32
  }
  func.func @transform_4(%arg0: i32) -> (i32, i32) {
    %c0_i32 = arith.constant 0 : i32
    %c0_i32_0 = arith.constant 0 : i32
    %c0_i32_1 = arith.constant 0 : i32
    return %c0_i32, %c0_i32_0 : i32, i32
  }
  func.func @transform_5(%arg0: i32) -> (i32, i32) {
    %c0_i32 = arith.constant 0 : i32
    %c0_i32_0 = arith.constant 0 : i32
    %c0_i32_1 = arith.constant 0 : i32
    return %c0_i32, %c0_i32_0 : i32, i32
  }
  func.func @transform_6(%arg0: i32) -> (i32, i32) {
    %c0_i32 = arith.constant 0 : i32
    %c0_i32_0 = arith.constant 0 : i32
    return %c0_i32, %arg0 : i32, i32
  }
  func.func @transform_7(%arg0: i32) -> (i32, i32) {
    %c0_i32 = arith.constant 0 : i32
    %c0_i32_0 = arith.constant 0 : i32
    return %c0_i32, %arg0 : i32, i32
  }
}

</mosaic_0001>

<llo_original>
// kernel: tpu_custom_call.1
$region0: #{tpu_custom_call.1}
  #allocation0 [shape = 'u32[]', space=smem, size = 0x4, offset = 0x4, fixed_abs, tag = 'smem constant byte address 0x4 - core index']
  #allocation1 [shape = 'u32[144,128]{1,0:T(1,128)}', space=vmem, size = 0x12000, scoped, tag = 'internal scratch']
  #allocation2 [shape = 's32[7,4,128]{2,1,0:T(4,128)}', space=vmem, size = 0x3800, scoped, tag = 'scratch operand']
  %s0 = inlined_call_operand.hbm [shape: f32[8,4,128], index: 0, kind: input, shape index: {}]
  %s1 = inlined_call_operand.vmem [shape: s32[8,128], index: 1, kind: input, shape index: {}]
  %s2 = inlined_call_operand.vmem [shape: s32[8,128], index: 2, kind: input, shape index: {}]
  %s3 = inlined_call_operand.vmem [shape: f32[4,1], index: 3, kind: input, shape index: {}]
  %s4 = inlined_call_operand.vmem [shape: f32[4,1], index: 4, kind: input, shape index: {}]
  %s5 = inlined_call_operand.vmem [shape: f32[4,4], index: 5, kind: input, shape index: {}]
  %s6 = inlined_call_operand.hbm [shape: s32[8,128], index: 6, kind: output, shape index: {0}]
  %s7 = inlined_call_operand.hbm [shape: f32[1,128], index: 7, kind: output, shape index: {1}]
  %8 = xla_tuple %s6, %s7
  %s9 = sld [smem:[#allocation0]]
  $region46: #{tpu_custom_call.1} parent=0
    _
  %s11 = ssub.s32 1, %s9
  %s12 = scalar_select 0, %s11, %s9
  $region1: #{tpu_custom_call.1} parent=0
    #allocation3 [shape = 'u8[16384]{0}', space=vmem, size = 0x4000, scoped, tag = 'input window, operand 0, single buffered']
    #allocation4 [shape = 's32[1]{0}', space=sflag, size = 0x4, scoped, tag = 'scoped memory for tpu_custom_call.1']
    #allocation5 [shape = 's32[1]{0}', space=sflag, size = 0x4, scoped, tag = 'scoped memory for tpu_custom_call.1']
    #allocation6 [shape = 'u8[4096]{0}', space=vmem, size = 0x1000, scoped, tag = 'output window, operand 0, single buffered']
    #allocation7 [shape = 'u8[512]{0}', space=vmem, size = 0x400, scoped, tag = 'output window, operand 1, single buffered']
    #allocation8 [shape = 's32[1]{0}', space=sflag, size = 0x4, scoped, tag = 'scoped memory for tpu_custom_call.1']
    %13 = vsyncpa [#allocation4], 0
    %14 = vsyncpa [#allocation5], 0
    %15 = vsyncpa [#allocation8], 0
    // Predicated region
    $region2: #{tpu_custom_call.1} parent=1 // pred_check
      _
    $region3: #{tpu_custom_call.1} parent=1 // pred_check_branch
      %17 = sbr.rel (0) target = $region5
    $region4: #{tpu_custom_call.1} parent=1 // pred_region
      %s19 = ssub.s32 512, 512
      %20 = vsyncadd [#allocation4], %s19
      %s21 = sshll.u32 [#allocation3], 4
      %s22 = int_to_ptr.vmem [resolvable:$true] %s21
      %27 = dma.hbm_to_vmem [thread:$0]  %s0, 512, %s22, [#allocation4], 64, 64, 4
    $region5: #{tpu_custom_call.1} parent=1 // pred_fallthru
      _
    // Predicated region
    $region6: #{tpu_custom_call.1} parent=1 // pred_check
      _
    $region7: #{tpu_custom_call.1} parent=1 // pred_check_branch
      %29 = sbr.rel (0) target = $region9
    $region8: #{tpu_custom_call.1} parent=1 // pred_region
      _
    $region9: #{tpu_custom_call.1} parent=1 // pred_fallthru
      _
    // Predicated region
    $region10: #{tpu_custom_call.1} parent=1 // pred_check
      _
    $region11: #{tpu_custom_call.1} parent=1 // pred_check_branch
      %31 = sbr.rel (0) target = $region13
    $region12: #{tpu_custom_call.1} parent=1 // pred_region
      _
    $region13: #{tpu_custom_call.1} parent=1 // pred_fallthru
      _
    // Predicated region
    $region14: #{tpu_custom_call.1} parent=1 // pred_check
      _
    $region15: #{tpu_custom_call.1} parent=1 // pred_check_branch
      %33 = sbr.rel (0) target = $region17
    $region16: #{tpu_custom_call.1} parent=1 // pred_region
      _
    $region17: #{tpu_custom_call.1} parent=1 // pred_fallthru
      _
    // Predicated region
    $region18: #{tpu_custom_call.1} parent=1 // pred_check
      _
    $region19: #{tpu_custom_call.1} parent=1 // pred_check_branch
      %35 = sbr.rel (0) target = $region21
    $region20: #{tpu_custom_call.1} parent=1 // pred_region
      _
    $region21: #{tpu_custom_call.1} parent=1 // pred_fallthru
      _
    // Predicated region
    $region22: #{tpu_custom_call.1} parent=1 // pred_check
      _
    $region23: #{tpu_custom_call.1} parent=1 // pred_check_branch
      %37 = sbr.rel (0) target = $region25
    $region24: #{tpu_custom_call.1} parent=1 // pred_region
      _
    $region25: #{tpu_custom_call.1} parent=1 // pred_fallthru
      _
    // Predicated region
    $region26: #{tpu_custom_call.1} parent=1 // pred_check
      _
    $region27: #{tpu_custom_call.1} parent=1 // pred_check_branch
      %39 = sbr.rel (0) target = $region29
    $region28: #{tpu_custom_call.1} parent=1 // pred_region
      %40 = dma.done [#allocation4], 512
    $region29: #{tpu_custom_call.1} parent=1 // pred_fallthru
      _
    %v41 = vld [vmem:[%s3] sm:$0xf]
    %v42 = vld [vmem:[%s4] sm:$0xf]
    %v43 = vld [vmem:[%s5] sm:$0xf]
    %v44 = vlaneseq
    %v45 = vshrl.u32 %v44, 7
    %v46 = vsub.s32 0, %v45
    %v47 = vrot.slane %v43, %v46
    %49 = vbcast.lane.b32.xlu0 %v47, 256
    %v50 = vpop.permute.xlu0 %49
    %v51 = vlaneseq
    %v52 = vshrl.u32 %v51, 7
    %v53 = vsub.s32 1, %v52
    %v54 = vrot.slane %v43, %v53
    %56 = vbcast.lane.b32.xlu0 %v54, 256
    %v57 = vpop.permute.xlu0 %56
    %v58 = vlaneseq
    %v59 = vshrl.u32 %v58, 7
    %v60 = vsub.s32 2, %v59
    %v61 = vrot.slane %v43, %v60
    %63 = vbcast.lane.b32.xlu0 %v61, 256
    %v64 = vpop.permute.xlu0 %63
    %v65 = vlaneseq
    %v66 = vshrl.u32 %v65, 7
    %v67 = vsub.s32 3, %v66
    %v68 = vrot.slane %v43, %v67
    %70 = vbcast.lane.b32.xlu0 %v68, 256
    %v71 = vpop.permute.xlu0 %70
    %v72 = vlaneseq
    %v73 = vshrl.u32 %v72, 7
    %v74 = vld [vmem:[#allocation3] sm:$0xf]
    %v75 = vld [vmem:[%s2] sm:$0x1]
    %v76 = vlaneseq
    %v77 = vshrl.u32 %v76, 7
    %v78 = vsub.s32 0, %v77
    %v79 = vrot.slane %v75, %v78
    %vm80 = vcmp.eq.s32.totalorder %v73, %v79
    %v81 = vsel %vm80, 1, 0
    %v82 = vcvt.s32.f32 %v81
    %84 = vset.pattern.permute.xlu0 0
    %85 = vperm.xlu0 %84, %v41
    %v86 = vpop.permute.xlu0 %85
    %v88 = vadd.f32 %v86, %v74
    %v89 = vmul.f32 %v88, %v82
    %vm90 = vcmask 1043456
    %v91 = vsel %vm90, %v89, 0.0
    %v92 = vrot.slane %v91, 4
    %v93 = vadd.f32 %v91, %v92
    %v94 = vrot.slane %v93, 2
    %v95 = vadd.f32 %v93, %v94
    %v96 = vrot.slane %v95, 1
    %v97 = vadd.f32 %v95, %v96
    %s98 = scalar_lea.vmem [#allocation3], 4
    %v99 = vld [vmem:[%s98] sm:$0xf]
    %v100 = vld [vmem:[%s1 + $0x1] sm:$0x1]
    %vm101 = vcmp.gt.s32.totalorder %v100, 0
    %v102 = vadd.f32 %v88, %v50
    %v103 = vadd.f32 %v88, %v57
    %v104 = vadd.f32 %v88, %v64
    %v105 = vadd.f32 %v88, %v71
    %v106 = vsel %vm90, %v102, -inf
    %v107 = vrot.slane %v106, 4
    %v108 = vmax.f32 %v106, %v107
    %v109 = vrot.slane %v108, 2
    %v110 = vmax.f32 %v108, %v109
    %v111 = vrot.slane %v110, 1
    %v112 = vmax.f32 %v110, %v111
    %v113 = vsel %vm90, %v103, -inf
    %v114 = vrot.slane %v113, 4
    %v115 = vmax.f32 %v113, %v114
    %v116 = vrot.slane %v115, 2
    %v117 = vmax.f32 %v115, %v116
    %v118 = vrot.slane %v117, 1
    %v119 = vmax.f32 %v117, %v118
    %v120 = vsel %vm90, %v104, -inf
    %v121 = vrot.slane %v120, 4
    %v122 = vmax.f32 %v120, %v121
    %v123 = vrot.slane %v122, 2
    %v124 = vmax.f32 %v122, %v123
    %v125 = vrot.slane %v124, 1
    %v126 = vmax.f32 %v124, %v125
    %v127 = vsel %vm90, %v105, -inf
    %v128 = vrot.slane %v127, 4
    %v129 = vmax.f32 %v127, %v128
    %v130 = vrot.slane %v129, 2
    %v131 = vmax.f32 %v129, %v130
    %v132 = vrot.slane %v131, 1
    %v133 = vmax.f32 %v131, %v132
    %v134 = vsub.f32 %v102, %v112
    %v135 = vsub.f32 %v103, %v119
    %v136 = vsub.f32 %v104, %v126
    %v137 = vsub.f32 %v105, %v133
    %v138 = vmul.f32 %v134, 1.442695
    %v139 = vpow.pop %v138
    %v140 = vmul.f32 %v135, 1.442695
    %v141 = vpow.pop %v140
    %v142 = vmul.f32 %v136, 1.442695
    %v143 = vpow.pop %v142
    %v144 = vmul.f32 %v137, 1.442695
    %v145 = vpow.pop %v144
    %v146 = vsel %vm90, %v139, 0.0
    %v147 = vrot.slane %v146, 4
    %v148 = vadd.f32 %v146, %v147
    %v149 = vrot.slane %v148, 2
    %v150 = vadd.f32 %v148, %v149
    %v151 = vrot.slane %v150, 1
    %v152 = vadd.f32 %v150, %v151
    %v153 = vsel %vm90, %v141, 0.0
    %v154 = vrot.slane %v153, 4
    %v155 = vadd.f32 %v153, %v154
    %v156 = vrot.slane %v155, 2
    %v157 = vadd.f32 %v155, %v156
    %v158 = vrot.slane %v157, 1
    %v159 = vadd.f32 %v157, %v158
    %v160 = vsel %vm90, %v143, 0.0
    %v161 = vrot.slane %v160, 4
    %v162 = vadd.f32 %v160, %v161
    %v163 = vrot.slane %v162, 2
    %v164 = vadd.f32 %v162, %v163
    %v165 = vrot.slane %v164, 1
    %v166 = vadd.f32 %v164, %v165
    %v167 = vsel %vm90, %v145, 0.0
    %v168 = vrot.slane %v167, 4
    %v169 = vadd.f32 %v167, %v168
    %v170 = vrot.slane %v169, 2
    %v171 = vadd.f32 %v169, %v170
    %v172 = vrot.slane %v171, 1
    %v173 = vadd.f32 %v171, %v172
    %v174 = vlog2.pop %v152
    %v175 = vmul.f32 %v174, 0.6931472
    %v176 = vlog2.pop %v159
    %v177 = vmul.f32 %v176, 0.6931472
    %v178 = vlog2.pop %v166
    %v179 = vmul.f32 %v178, 0.6931472
    %v180 = vlog2.pop %v173
    %v181 = vmul.f32 %v180, 0.6931472
    %v182 = vadd.f32 %v112, %v175
    %v183 = vadd.f32 %v119, %v177
    %v184 = vadd.f32 %v126, %v179
    %v185 = vadd.f32 %v133, %v181
    %v187 = vrot.slane %v99, 1
    %v188 = vrot.slane %v99, 2
    %v189 = vrot.slane %v99, 3
    %v194 = vadd.f32 %v182, %v99
    %v195 = vadd.f32 %v183, %v187
    %v196 = vadd.f32 %v184, %v188
    %v197 = vadd.f32 %v185, %v189
    %v198 = vsel %vm101, 1, 0
    %v199 = vlaneseq
    %v200 = vshrl.u32 %v199, 7
    %v201 = vsub.s32 0, %v200
    %v202 = vrot.slane %v198, %v201
    %vm203 = vcmp.eq.s32.totalorder %v202, 1
    %v208 = vrot.slane %v195, 7
    %vm209 = vcmask 1041409
    %v210 = vsel %vm209, %v208, %v194
    %v211 = vrot.slane %v196, 6
    %vm212 = vcmask 1042434
    %v213 = vsel %vm212, %v211, %v210
    %v214 = vrot.slane %v197, 5
    %vm215 = vcmask 1043459
    %v216 = vsel %vm215, %v214, %v213
    %v218 = vsel %vm203, %v216, %v88
    %vm219 = vcmp.eq.f32.partialorder %v102, %v112
    %vm220 = vcmp.eq.f32.partialorder %v103, %v119
    %vm221 = vcmp.eq.f32.partialorder %v104, %v126
    %vm222 = vcmp.eq.f32.partialorder %v105, %v133
    %v223 = vsel %vm219, %v73, 4
    %v224 = vsel %vm220, %v73, 4
    %v225 = vsel %vm221, %v73, 4
    %v226 = vsel %vm222, %v73, 4
    %v227 = vsel %vm90, %v223, 2147483647
    %v228 = vrot.slane %v227, 4
    %vm229 = vcmp.lt.s32.totalorder %v227, %v228
    %v230 = vsel %vm229, %v227, %v228
    %v231 = vrot.slane %v230, 2
    %vm232 = vcmp.lt.s32.totalorder %v230, %v231
    %v233 = vsel %vm232, %v230, %v231
    %v234 = vrot.slane %v233, 1
    %vm235 = vcmp.lt.s32.totalorder %v233, %v234
    %v236 = vsel %vm235, %v233, %v234
    %v237 = vsel %vm90, %v224, 2147483647
    %v238 = vrot.slane %v237, 4
    %vm239 = vcmp.lt.s32.totalorder %v237, %v238
    %v240 = vsel %vm239, %v237, %v238
    %v241 = vrot.slane %v240, 2
    %vm242 = vcmp.lt.s32.totalorder %v240, %v241
    %v243 = vsel %vm242, %v240, %v241
    %v244 = vrot.slane %v243, 1
    %vm245 = vcmp.lt.s32.totalorder %v243, %v244
    %v246 = vsel %vm245, %v243, %v244
    %v247 = vsel %vm90, %v225, 2147483647
    %v248 = vrot.slane %v247, 4
    %vm249 = vcmp.lt.s32.totalorder %v247, %v248
    %v250 = vsel %vm249, %v247, %v248
    %v251 = vrot.slane %v250, 2
    %vm252 = vcmp.lt.s32.totalorder %v250, %v251
    %v253 = vsel %vm252, %v250, %v251
    %v254 = vrot.slane %v253, 1
    %vm255 = vcmp.lt.s32.totalorder %v253, %v254
    %v256 = vsel %vm255, %v253, %v254
    %v257 = vsel %vm90, %v226, 2147483647
    %v258 = vrot.slane %v257, 4
    %vm259 = vcmp.lt.s32.totalorder %v257, %v258
    %v260 = vsel %vm259, %v257, %v258
    %v261 = vrot.slane %v260, 2
    %vm262 = vcmp.lt.s32.totalorder %v260, %v261
    %v263 = vsel %vm262, %v260, %v261
    %v264 = vrot.slane %v263, 1
    %vm265 = vcmp.lt.s32.totalorder %v263, %v264
    %v266 = vsel %vm265, %v263, %v264
    %v267 = vsel %vm209, %v246, %v236
    %v268 = vsel %vm212, %v256, %v267
    %v269 = vsel %vm215, %v266, %v268
    %270 = vst [vmem:[#allocation2] sm:$0xf] %v269
    %v271 = vadd.f32 %v112, %v99
    %v272 = vadd.f32 %v119, %v187
    %v273 = vadd.f32 %v126, %v188
    %v274 = vadd.f32 %v133, %v189
    %v279 = vrot.slane %v272, 7
    %v280 = vsel %vm209, %v279, %v271
    %v281 = vrot.slane %v273, 6
    %v282 = vsel %vm212, %v281, %v280
    %v283 = vrot.slane %v274, 5
    %v284 = vsel %vm215, %v283, %v282
    %v286 = vsel %vm203, %v284, %v88
    %v287 = vld [vmem:[%s2 + $0x1] sm:$0x1]
    %v288 = vlaneseq
    %v289 = vshrl.u32 %v288, 7
    %v290 = vsub.s32 0, %v289
    %v291 = vrot.slane %v287, %v290
    %vm292 = vcmp.eq.s32.totalorder %v73, %v291
    %v293 = vsel %vm292, 1, 0
    %v294 = vcvt.s32.f32 %v293
    %v295 = vmul.f32 %v50, %v82
    %v296 = vmul.f32 %v57, %v82
    %v297 = vmul.f32 %v64, %v82
    %v298 = vmul.f32 %v71, %v82
    %v299 = vsel %vm90, %v295, 0.0
    %v300 = vrot.slane %v299, 4
    %v301 = vadd.f32 %v299, %v300
    %v302 = vrot.slane %v301, 2
    %v303 = vadd.f32 %v301, %v302
    %v304 = vrot.slane %v303, 1
    %v305 = vadd.f32 %v303, %v304
    %v306 = vsel %vm90, %v296, 0.0
    %v307 = vrot.slane %v306, 4
    %v308 = vadd.f32 %v306, %v307
    %v309 = vrot.slane %v308, 2
    %v310 = vadd.f32 %v308, %v309
    %v311 = vrot.slane %v310, 1
    %v312 = vadd.f32 %v310, %v311
    %v313 = vsel %vm90, %v297, 0.0
    %v314 = vrot.slane %v313, 4
    %v315 = vadd.f32 %v313, %v314
    %v316 = vrot.slane %v315, 2
    %v317 = vadd.f32 %v315, %v316
    %v318 = vrot.slane %v317, 1
    %v319 = vadd.f32 %v317, %v318
    %v320 = vsel %vm90, %v298, 0.0
    %v321 = vrot.slane %v320, 4
    %v322 = vadd.f32 %v320, %v321
    %v323 = vrot.slane %v322, 2
    %v324 = vadd.f32 %v322, %v323
    %v325 = vrot.slane %v324, 1
    %v326 = vadd.f32 %v324, %v325
    %v327 = vadd.f32 %v305, %v99
    %v328 = vadd.f32 %v312, %v187
    %v329 = vadd.f32 %v319, %v188
    %v330 = vadd.f32 %v326, %v189
    %v332 = vrot.slane %v294, 1
    %v333 = vrot.slane %v294, 2
    %v334 = vrot.slane %v294, 3
    %v339 = vmul.f32 %v327, %v294
    %v340 = vmul.f32 %v328, %v332
    %v341 = vmul.f32 %v329, %v333
    %v342 = vmul.f32 %v330, %v334
    %v347 = vrot.slane %v340, 7
    %v348 = vsel %vm209, %v347, %v339
    %v349 = vrot.slane %v341, 6
    %v350 = vsel %vm212, %v349, %v348
    %v351 = vrot.slane %v342, 5
    %v352 = vsel %vm215, %v351, %v350
    %v354 = vsel %vm90, %v352, 0.0
    %v355 = vrot.slane %v354, 4
    %v356 = vadd.f32 %v354, %v355
    %v357 = vrot.slane %v356, 2
    %v358 = vadd.f32 %v356, %v357
    %v359 = vrot.slane %v358, 1
    %v360 = vadd.f32 %v358, %v359
    %v361 = vcvt.s32.f32 %v100
    %v362 = vmul.f32 %v360, %v361
    %v363 = vadd.f32 %v97, %v362
    %s364 = scalar_lea.vmem [#allocation3], 8
    %v365 = vld [vmem:[%s364] sm:$0xf]
    %v366 = vld [vmem:[%s1 + $0x2] sm:$0x1]
    %vm367 = vcmp.gt.s32.totalorder %v366, 0
    %v368 = vadd.f32 %v218, %v50
    %v369 = vadd.f32 %v218, %v57
    %v370 = vadd.f32 %v218, %v64
    %v371 = vadd.f32 %v218, %v71
    %v372 = vsel %vm90, %v368, -inf
    %v373 = vrot.slane %v372, 4
    %v374 = vmax.f32 %v372, %v373
    %v375 = vrot.slane %v374, 2
    %v376 = vmax.f32 %v374, %v375
    %v377 = vrot.slane %v376, 1
    %v378 = vmax.f32 %v376, %v377
    %v379 = vsel %vm90, %v369, -inf
    %v380 = vrot.slane %v379, 4
    %v381 = vmax.f32 %v379, %v380
    %v382 = vrot.slane %v381, 2
    %v383 = vmax.f32 %v381, %v382
    %v384 = vrot.slane %v383, 1
    %v385 = vmax.f32 %v383, %v384
    %v386 = vsel %vm90, %v370, -inf
    %v387 = vrot.slane %v386, 4
    %v388 = vmax.f32 %v386, %v387
    %v389 = vrot.slane %v388, 2
    %v390 = vmax.f32 %v388, %v389
    %v391 = vrot.slane %v390, 1
    %v392 = vmax.f32 %v390, %v391
    %v393 = vsel %vm90, %v371, -inf
    %v394 = vrot.slane %v393, 4
    %v395 = vmax.f32 %v393, %v394
    %v396 = vrot.slane %v395, 2
    %v397 = vmax.f32 %v395, %v396
    %v398 = vrot.slane %v397, 1
    %v399 = vmax.f32 %v397, %v398
    %v400 = vsub.f32 %v368, %v378
    %v401 = vsub.f32 %v369, %v385
    %v402 = vsub.f32 %v370, %v392
    %v403 = vsub.f32 %v371, %v399
    %v404 = vmul.f32 %v400, 1.442695
    %v405 = vpow.pop %v404
    %v406 = vmul.f32 %v401, 1.442695
    %v407 = vpow.pop %v406
    %v408 = vmul.f32 %v402, 1.442695
    %v409 = vpow.pop %v408
    %v410 = vmul.f32 %v403, 1.442695
    %v411 = vpow.pop %v410
    %v412 = vsel %vm90, %v405, 0.0
    %v413 = vrot.slane %v412, 4
    %v414 = vadd.f32 %v412, %v413
    %v415 = vrot.slane %v414, 2
    %v416 = vadd.f32 %v414, %v415
    %v417 = vrot.slane %v416, 1
    %v418 = vadd.f32 %v416, %v417
    %v419 = vsel %vm90, %v407, 0.0
    %v420 = vrot.slane %v419, 4
    %v421 = vadd.f32 %v419, %v420
    %v422 = vrot.slane %v421, 2
    %v423 = vadd.f32 %v421, %v422
    %v424 = vrot.slane %v423, 1
    %v425 = vadd.f32 %v423, %v424
    %v426 = vsel %vm90, %v409, 0.0
    %v427 = vrot.slane %v426, 4
    %v428 = vadd.f32 %v426, %v427
    %v429 = vrot.slane %v428, 2
    %v430 = vadd.f32 %v428, %v429
    %v431 = vrot.slane %v430, 1
    %v432 = vadd.f32 %v430, %v431
    %v433 = vsel %vm90, %v411, 0.0
    %v434 = vrot.slane %v433, 4
    %v435 = vadd.f32 %v433, %v434
    %v436 = vrot.slane %v435, 2
    %v437 = vadd.f32 %v435, %v436
    %v438 = vrot.slane %v437, 1
    %v439 = vadd.f32 %v437, %v438
    %v440 = vlog2.pop %v418
    %v441 = vmul.f32 %v440, 0.6931472
    %v442 = vlog2.pop %v425
    %v443 = vmul.f32 %v442, 0.6931472
    %v444 = vlog2.pop %v432
    %v445 = vmul.f32 %v444, 0.6931472
    %v446 = vlog2.pop %v439
    %v447 = vmul.f32 %v446, 0.6931472
    %v448 = vadd.f32 %v378, %v441
    %v449 = vadd.f32 %v385, %v443
    %v450 = vadd.f32 %v392, %v445
    %v451 = vadd.f32 %v399, %v447
    %v453 = vrot.slane %v365, 1
    %v454 = vrot.slane %v365, 2
    %v455 = vrot.slane %v365, 3
    %v460 = vadd.f32 %v448, %v365
    %v461 = vadd.f32 %v449, %v453
    %v462 = vadd.f32 %v450, %v454
    %v463 = vadd.f32 %v451, %v455
    %v464 = vsel %vm367, 1, 0
    %v465 = vlaneseq
    %v466 = vshrl.u32 %v465, 7
    %v467 = vsub.s32 0, %v466
    %v468 = vrot.slane %v464, %v467
    %vm469 = vcmp.eq.s32.totalorder %v468, 1
    %v474 = vrot.slane %v461, 7
    %v475 = vsel %vm209, %v474, %v460
    %v476 = vrot.slane %v462, 6
    %v477 = vsel %vm212, %v476, %v475
    %v478 = vrot.slane %v463, 5
    %v479 = vsel %vm215, %v478, %v477
    %v481 = vsel %vm469, %v479, %v218
    %v482 = vadd.f32 %v286, %v50
    %v483 = vadd.f32 %v286, %v57
    %v484 = vadd.f32 %v286, %v64
    %v485 = vadd.f32 %v286, %v71
    %v486 = vsel %vm90, %v482, -inf
    %v487 = vrot.slane %v486, 4
    %v488 = vmax.f32 %v486, %v487
    %v489 = vrot.slane %v488, 2
    %v490 = vmax.f32 %v488, %v489
    %v491 = vrot.slane %v490, 1
    %v492 = vmax.f32 %v490, %v491
    %v493 = vsel %vm90, %v483, -inf
    %v494 = vrot.slane %v493, 4
    %v495 = vmax.f32 %v493, %v494
    %v496 = vrot.slane %v495, 2
    %v497 = vmax.f32 %v495, %v496
    %v498 = vrot.slane %v497, 1
    %v499 = vmax.f32 %v497, %v498
    %v500 = vsel %vm90, %v484, -inf
    %v501 = vrot.slane %v500, 4
    %v502 = vmax.f32 %v500, %v501
    %v503 = vrot.slane %v502, 2
    %v504 = vmax.f32 %v502, %v503
    %v505 = vrot.slane %v504, 1
    %v506 = vmax.f32 %v504, %v505
    %v507 = vsel %vm90, %v485, -inf
    %v508 = vrot.slane %v507, 4
    %v509 = vmax.f32 %v507, %v508
    %v510 = vrot.slane %v509, 2
    %v511 = vmax.f32 %v509, %v510
    %v512 = vrot.slane %v511, 1
    %v513 = vmax.f32 %v511, %v512
    %vm514 = vcmp.eq.f32.partialorder %v482, %v492
    %vm515 = vcmp.eq.f32.partialorder %v483, %v499
    %vm516 = vcmp.eq.f32.partialorder %v484, %v506
    %vm517 = vcmp.eq.f32.partialorder %v485, %v513
    %v518 = vsel %vm514, %v73, 4
    %v519 = vsel %vm515, %v73, 4
    %v520 = vsel %vm516, %v73, 4
    %v521 = vsel %vm517, %v73, 4
    %v522 = vsel %vm90, %v518, 2147483647
    %v523 = vrot.slane %v522, 4
    %vm524 = vcmp.lt.s32.totalorder %v522, %v523
    %v525 = vsel %vm524, %v522, %v523
    %v526 = vrot.slane %v525, 2
    %vm527 = vcmp.lt.s32.totalorder %v525, %v526
    %v528 = vsel %vm527, %v525, %v526
    %v529 = vrot.slane %v528, 1
    %vm530 = vcmp.lt.s32.totalorder %v528, %v529
    %v531 = vsel %vm530, %v528, %v529
    %v532 = vsel %vm90, %v519, 2147483647
    %v533 = vrot.slane %v532, 4
    %vm534 = vcmp.lt.s32.totalorder %v532, %v533
    %v535 = vsel %vm534, %v532, %v533
    %v536 = vrot.slane %v535, 2
    %vm537 = vcmp.lt.s32.totalorder %v535, %v536
    %v538 = vsel %vm537, %v535, %v536
    %v539 = vrot.slane %v538, 1
    %vm540 = vcmp.lt.s32.totalorder %v538, %v539
    %v541 = vsel %vm540, %v538, %v539
    %v542 = vsel %vm90, %v520, 2147483647
    %v543 = vrot.slane %v542, 4
    %vm544 = vcmp.lt.s32.totalorder %v542, %v543
    %v545 = vsel %vm544, %v542, %v543
    %v546 = vrot.slane %v545, 2
    %vm547 = vcmp.lt.s32.totalorder %v545, %v546
    %v548 = vsel %vm547, %v545, %v546
    %v549 = vrot.slane %v548, 1
    %vm550 = vcmp.lt.s32.totalorder %v548, %v549
    %v551 = vsel %vm550, %v548, %v549
    %v552 = vsel %vm90, %v521, 2147483647
    %v553 = vrot.slane %v552, 4
    %vm554 = vcmp.lt.s32.totalorder %v552, %v553
    %v555 = vsel %vm554, %v552, %v553
    %v556 = vrot.slane %v555, 2
    %vm557 = vcmp.lt.s32.totalorder %v555, %v556
    %v558 = vsel %vm557, %v555, %v556
    %v559 = vrot.slane %v558, 1
    %vm560 = vcmp.lt.s32.totalorder %v558, %v559
    %v561 = vsel %vm560, %v558, %v559
    %v562 = vsel %vm209, %v541, %v531
    %v563 = vsel %vm212, %v551, %v562
    %v564 = vsel %vm215, %v561, %v563
    %s565 = scalar_lea.vmem [#allocation2], 4
    %566 = vst [vmem:[%s565] sm:$0xf] %v564
    %v567 = vadd.f32 %v492, %v365
    %v568 = vadd.f32 %v499, %v453
    %v569 = vadd.f32 %v506, %v454
    %v570 = vadd.f32 %v513, %v455
    %v575 = vrot.slane %v568, 7
    %v576 = vsel %vm209, %v575, %v567
    %v577 = vrot.slane %v569, 6
    %v578 = vsel %vm212, %v577, %v576
    %v579 = vrot.slane %v570, 5
    %v580 = vsel %vm215, %v579, %v578
    %v582 = vsel %vm469, %v580, %v286
    %v583 = vld [vmem:[%s2 + $0x2] sm:$0x1]
    %v584 = vlaneseq
    %v585 = vshrl.u32 %v584, 7
    %v586 = vsub.s32 0, %v585
    %v587 = vrot.slane %v583, %v586
    %vm588 = vcmp.eq.s32.totalorder %v73, %v587
    %v589 = vsel %vm588, 1, 0
    %v590 = vcvt.s32.f32 %v589
    %v591 = vmul.f32 %v50, %v294
    %v592 = vmul.f32 %v57, %v294
    %v593 = vmul.f32 %v64, %v294
    %v594 = vmul.f32 %v71, %v294
    %v595 = vsel %vm90, %v591, 0.0
    %v596 = vrot.slane %v595, 4
    %v597 = vadd.f32 %v595, %v596
    %v598 = vrot.slane %v597, 2
    %v599 = vadd.f32 %v597, %v598
    %v600 = vrot.slane %v599, 1
    %v601 = vadd.f32 %v599, %v600
    %v602 = vsel %vm90, %v592, 0.0
    %v603 = vrot.slane %v602, 4
    %v604 = vadd.f32 %v602, %v603
    %v605 = vrot.slane %v604, 2
    %v606 = vadd.f32 %v604, %v605
    %v607 = vrot.slane %v606, 1
    %v608 = vadd.f32 %v606, %v607
    %v609 = vsel %vm90, %v593, 0.0
    %v610 = vrot.slane %v609, 4
    %v611 = vadd.f32 %v609, %v610
    %v612 = vrot.slane %v611, 2
    %v613 = vadd.f32 %v611, %v612
    %v614 = vrot.slane %v613, 1
    %v615 = vadd.f32 %v613, %v614
    %v616 = vsel %vm90, %v594, 0.0
    %v617 = vrot.slane %v616, 4
    %v618 = vadd.f32 %v616, %v617
    %v619 = vrot.slane %v618, 2
    %v620 = vadd.f32 %v618, %v619
    %v621 = vrot.slane %v620, 1
    %v622 = vadd.f32 %v620, %v621
    %v623 = vadd.f32 %v601, %v365
    %v624 = vadd.f32 %v608, %v453
    %v625 = vadd.f32 %v615, %v454
    %v626 = vadd.f32 %v622, %v455
    %v628 = vrot.slane %v590, 1
    %v629 = vrot.slane %v590, 2
    %v630 = vrot.slane %v590, 3
    %v635 = vmul.f32 %v623, %v590
    %v636 = vmul.f32 %v624, %v628
    %v637 = vmul.f32 %v625, %v629
    %v638 = vmul.f32 %v626, %v630
    %v643 = vrot.slane %v636, 7
    %v644 = vsel %vm209, %v643, %v635
    %v645 = vrot.slane %v637, 6
    %v646 = vsel %vm212, %v645, %v644
    %v647 = vrot.slane %v638, 5
    %v648 = vsel %vm215, %v647, %v646
    %v650 = vsel %vm90, %v648, 0.0
    %v651 = vrot.slane %v650, 4
    %v652 = vadd.f32 %v650, %v651
    %v653 = vrot.slane %v652, 2
    %v654 = vadd.f32 %v652, %v653
    %v655 = vrot.slane %v654, 1
    %v656 = vadd.f32 %v654, %v655
    %v657 = vcvt.s32.f32 %v366
    %v658 = vmul.f32 %v656, %v657
    %v659 = vadd.f32 %v363, %v658
    %s660 = scalar_lea.vmem [#allocation3], 12
    %v661 = vld [vmem:[%s660] sm:$0xf]
    %v662 = vld [vmem:[%s1 + $0x3] sm:$0x1]
    %vm663 = vcmp.gt.s32.totalorder %v662, 0
    %v664 = vadd.f32 %v481, %v50
    %v665 = vadd.f32 %v481, %v57
    %v666 = vadd.f32 %v481, %v64
    %v667 = vadd.f32 %v481, %v71
    %v668 = vsel %vm90, %v664, -inf
    %v669 = vrot.slane %v668, 4
    %v670 = vmax.f32 %v668, %v669
    %v671 = vrot.slane %v670, 2
    %v672 = vmax.f32 %v670, %v671
    %v673 = vrot.slane %v672, 1
    %v674 = vmax.f32 %v672, %v673
    %v675 = vsel %vm90, %v665, -inf
    %v676 = vrot.slane %v675, 4
    %v677 = vmax.f32 %v675, %v676
    %v678 = vrot.slane %v677, 2
    %v679 = vmax.f32 %v677, %v678
    %v680 = vrot.slane %v679, 1
    %v681 = vmax.f32 %v679, %v680
    %v682 = vsel %vm90, %v666, -inf
    %v683 = vrot.slane %v682, 4
    %v684 = vmax.f32 %v682, %v683
    %v685 = vrot.slane %v684, 2
    %v686 = vmax.f32 %v684, %v685
    %v687 = vrot.slane %v686, 1
    %v688 = vmax.f32 %v686, %v687
    %v689 = vsel %vm90, %v667, -inf
    %v690 = vrot.slane %v689, 4
    %v691 = vmax.f32 %v689, %v690
    %v692 = vrot.slane %v691, 2
    %v693 = vmax.f32 %v691, %v692
    %v694 = vrot.slane %v693, 1
    %v695 = vmax.f32 %v693, %v694
    %v696 = vsub.f32 %v664, %v674
    %v697 = vsub.f32 %v665, %v681
    %v698 = vsub.f32 %v666, %v688
    %v699 = vsub.f32 %v667, %v695
    %v700 = vmul.f32 %v696, 1.442695
    %v701 = vpow.pop %v700
    %v702 = vmul.f32 %v697, 1.442695
    %v703 = vpow.pop %v702
    %v704 = vmul.f32 %v698, 1.442695
    %v705 = vpow.pop %v704
    %v706 = vmul.f32 %v699, 1.442695
    %v707 = vpow.pop %v706
    %v708 = vsel %vm90, %v701, 0.0
    %v709 = vrot.slane %v708, 4
    %v710 = vadd.f32 %v708, %v709
    %v711 = vrot.slane %v710, 2
    %v712 = vadd.f32 %v710, %v711
    %v713 = vrot.slane %v712, 1
    %v714 = vadd.f32 %v712, %v713
    %v715 = vsel %vm90, %v703, 0.0
    %v716 = vrot.slane %v715, 4
    %v717 = vadd.f32 %v715, %v716
    %v718 = vrot.slane %v717, 2
    %v719 = vadd.f32 %v717, %v718
    %v720 = vrot.slane %v719, 1
    %v721 = vadd.f32 %v719, %v720
    %v722 = vsel %vm90, %v705, 0.0
    %v723 = vrot.slane %v722, 4
    %v724 = vadd.f32 %v722, %v723
    %v725 = vrot.slane %v724, 2
    %v726 = vadd.f32 %v724, %v725
    %v727 = vrot.slane %v726, 1
    %v728 = vadd.f32 %v726, %v727
    %v729 = vsel %vm90, %v707, 0.0
    %v730 = vrot.slane %v729, 4
    %v731 = vadd.f32 %v729, %v730
    %v732 = vrot.slane %v731, 2
    %v733 = vadd.f32 %v731, %v732
    %v734 = vrot.slane %v733, 1
    %v735 = vadd.f32 %v733, %v734
    %v736 = vlog2.pop %v714
    %v737 = vmul.f32 %v736, 0.6931472
    %v738 = vlog2.pop %v721
    %v739 = vmul.f32 %v738, 0.6931472
    %v740 = vlog2.pop %v728
    %v741 = vmul.f32 %v740, 0.6931472
    %v742 = vlog2.pop %v735
    %v743 = vmul.f32 %v742, 0.6931472
    %v744 = vadd.f32 %v674, %v737
    %v745 = vadd.f32 %v681, %v739
    %v746 = vadd.f32 %v688, %v741
    %v747 = vadd.f32 %v695, %v743
    %v749 = vrot.slane %v661, 1
    %v750 = vrot.slane %v661, 2
    %v751 = vrot.slane %v661, 3
    %v756 = vadd.f32 %v744, %v661
    %v757 = vadd.f32 %v745, %v749
    %v758 = vadd.f32 %v746, %v750
    %v759 = vadd.f32 %v747, %v751
    %v760 = vsel %vm663, 1, 0
    %v761 = vlaneseq
    %v762 = vshrl.u32 %v761, 7
    %v763 = vsub.s32 0, %v762
    %v764 = vrot.slane %v760, %v763
    %vm765 = vcmp.eq.s32.totalorder %v764, 1
    %v770 = vrot.slane %v757, 7
    %v771 = vsel %vm209, %v770, %v756
    %v772 = vrot.slane %v758, 6
    %v773 = vsel %vm212, %v772, %v771
    %v774 = vrot.slane %v759, 5
    %v775 = vsel %vm215, %v774, %v773
    %v777 = vsel %vm765, %v775, %v481
    %v778 = vadd.f32 %v582, %v50
    %v779 = vadd.f32 %v582, %v57
    %v780 = vadd.f32 %v582, %v64
    %v781 = vadd.f32 %v582, %v71
    %v782 = vsel %vm90, %v778, -inf
    %v783 = vrot.slane %v782, 4
    %v784 = vmax.f32 %v782, %v783
    %v785 = vrot.slane %v784, 2
    %v786 = vmax.f32 %v784, %v785
    %v787 = vrot.slane %v786, 1
    %v788 = vmax.f32 %v786, %v787
    %v789 = vsel %vm90, %v779, -inf
    %v790 = vrot.slane %v789, 4
    %v791 = vmax.f32 %v789, %v790
    %v792 = vrot.slane %v791, 2
    %v793 = vmax.f32 %v791, %v792
    %v794 = vrot.slane %v793, 1
    %v795 = vmax.f32 %v793, %v794
    %v796 = vsel %vm90, %v780, -inf
    %v797 = vrot.slane %v796, 4
    %v798 = vmax.f32 %v796, %v797
    %v799 = vrot.slane %v798, 2
    %v800 = vmax.f32 %v798, %v799
    %v801 = vrot.slane %v800, 1
    %v802 = vmax.f32 %v800, %v801
    %v803 = vsel %vm90, %v781, -inf
    %v804 = vrot.slane %v803, 4
    %v805 = vmax.f32 %v803, %v804
    %v806 = vrot.slane %v805, 2
    %v807 = vmax.f32 %v805, %v806
    %v808 = vrot.slane %v807, 1
    %v809 = vmax.f32 %v807, %v808
    %vm810 = vcmp.eq.f32.partialorder %v778, %v788
    %vm811 = vcmp.eq.f32.partialorder %v779, %v795
    %vm812 = vcmp.eq.f32.partialorder %v780, %v802
    %vm813 = vcmp.eq.f32.partialorder %v781, %v809
    %v814 = vsel %vm810, %v73, 4
    %v815 = vsel %vm811, %v73, 4
    %v816 = vsel %vm812, %v73, 4
    %v817 = vsel %vm813, %v73, 4
    %v818 = vsel %vm90, %v814, 2147483647
    %v819 = vrot.slane %v818, 4
    %vm820 = vcmp.lt.s32.totalorder %v818, %v819
    %v821 = vsel %vm820, %v818, %v819
    %v822 = vrot.slane %v821, 2
    %vm823 = vcmp.lt.s32.totalorder %v821, %v822
    %v824 = vsel %vm823, %v821, %v822
    %v825 = vrot.slane %v824, 1
    %vm826 = vcmp.lt.s32.totalorder %v824, %v825
    %v827 = vsel %vm826, %v824, %v825
    %v828 = vsel %vm90, %v815, 2147483647
    %v829 = vrot.slane %v828, 4
    %vm830 = vcmp.lt.s32.totalorder %v828, %v829
    %v831 = vsel %vm830, %v828, %v829
    %v832 = vrot.slane %v831, 2
    %vm833 = vcmp.lt.s32.totalorder %v831, %v832
    %v834 = vsel %vm833, %v831, %v832
    %v835 = vrot.slane %v834, 1
    %vm836 = vcmp.lt.s32.totalorder %v834, %v835
    %v837 = vsel %vm836, %v834, %v835
    %v838 = vsel %vm90, %v816, 2147483647
    %v839 = vrot.slane %v838, 4
    %vm840 = vcmp.lt.s32.totalorder %v838, %v839
    %v841 = vsel %vm840, %v838, %v839
    %v842 = vrot.slane %v841, 2
    %vm843 = vcmp.lt.s32.totalorder %v841, %v842
    %v844 = vsel %vm843, %v841, %v842
    %v845 = vrot.slane %v844, 1
    %vm846 = vcmp.lt.s32.totalorder %v844, %v845
    %v847 = vsel %vm846, %v844, %v845
    %v848 = vsel %vm90, %v817, 2147483647
    %v849 = vrot.slane %v848, 4
    %vm850 = vcmp.lt.s32.totalorder %v848, %v849
    %v851 = vsel %vm850, %v848, %v849
    %v852 = vrot.slane %v851, 2
    %vm853 = vcmp.lt.s32.totalorder %v851, %v852
    %v854 = vsel %vm853, %v851, %v852
    %v855 = vrot.slane %v854, 1
    %vm856 = vcmp.lt.s32.totalorder %v854, %v855
    %v857 = vsel %vm856, %v854, %v855
    %v858 = vsel %vm209, %v837, %v827
    %v859 = vsel %vm212, %v847, %v858
    %v860 = vsel %vm215, %v857, %v859
    %s861 = scalar_lea.vmem [#allocation2], 8
    %862 = vst [vmem:[%s861] sm:$0xf] %v860
    %v863 = vadd.f32 %v788, %v661
    %v864 = vadd.f32 %v795, %v749
    %v865 = vadd.f32 %v802, %v750
    %v866 = vadd.f32 %v809, %v751
    %v871 = vrot.slane %v864, 7
    %v872 = vsel %vm209, %v871, %v863
    %v873 = vrot.slane %v865, 6
    %v874 = vsel %vm212, %v873, %v872
    %v875 = vrot.slane %v866, 5
    %v876 = vsel %vm215, %v875, %v874
    %v878 = vsel %vm765, %v876, %v582
    %v879 = vld [vmem:[%s2 + $0x3] sm:$0x1]
    %v880 = vlaneseq
    %v881 = vshrl.u32 %v880, 7
    %v882 = vsub.s32 0, %v881
    %v883 = vrot.slane %v879, %v882
    %vm884 = vcmp.eq.s32.totalorder %v73, %v883
    %v885 = vsel %vm884, 1, 0
    %v886 = vcvt.s32.f32 %v885
    %v887 = vmul.f32 %v50, %v590
    %v888 = vmul.f32 %v57, %v590
    %v889 = vmul.f32 %v64, %v590
    %v890 = vmul.f32 %v71, %v590
    %v891 = vsel %vm90, %v887, 0.0
    %v892 = vrot.slane %v891, 4
    %v893 = vadd.f32 %v891, %v892
    %v894 = vrot.slane %v893, 2
    %v895 = vadd.f32 %v893, %v894
    %v896 = vrot.slane %v895, 1
    %v897 = vadd.f32 %v895, %v896
    %v898 = vsel %vm90, %v888, 0.0
    %v899 = vrot.slane %v898, 4
    %v900 = vadd.f32 %v898, %v899
    %v901 = vrot.slane %v900, 2
    %v902 = vadd.f32 %v900, %v901
    %v903 = vrot.slane %v902, 1
    %v904 = vadd.f32 %v902, %v903
    %v905 = vsel %vm90, %v889, 0.0
    %v906 = vrot.slane %v905, 4
    %v907 = vadd.f32 %v905, %v906
    %v908 = vrot.slane %v907, 2
    %v909 = vadd.f32 %v907, %v908
    %v910 = vrot.slane %v909, 1
    %v911 = vadd.f32 %v909, %v910
    %v912 = vsel %vm90, %v890, 0.0
    %v913 = vrot.slane %v912, 4
    %v914 = vadd.f32 %v912, %v913
    %v915 = vrot.slane %v914, 2
    %v916 = vadd.f32 %v914, %v915
    %v917 = vrot.slane %v916, 1
    %v918 = vadd.f32 %v916, %v917
    %v919 = vadd.f32 %v897, %v661
    %v920 = vadd.f32 %v904, %v749
    %v921 = vadd.f32 %v911, %v750
    %v922 = vadd.f32 %v918, %v751
    %v924 = vrot.slane %v886, 1
    %v925 = vrot.slane %v886, 2
    %v926 = vrot.slane %v886, 3
    %v931 = vmul.f32 %v919, %v886
    %v932 = vmul.f32 %v920, %v924
    %v933 = vmul.f32 %v921, %v925
    %v934 = vmul.f32 %v922, %v926
    %v939 = vrot.slane %v932, 7
    %v940 = vsel %vm209, %v939, %v931
    %v941 = vrot.slane %v933, 6
    %v942 = vsel %vm212, %v941, %v940
    %v943 = vrot.slane %v934, 5
    %v944 = vsel %vm215, %v943, %v942
    %v946 = vsel %vm90, %v944, 0.0
    %v947 = vrot.slane %v946, 4
    %v948 = vadd.f32 %v946, %v947
    %v949 = vrot.slane %v948, 2
    %v950 = vadd.f32 %v948, %v949
    %v951 = vrot.slane %v950, 1
    %v952 = vadd.f32 %v950, %v951
    %v953 = vcvt.s32.f32 %v662
    %v954 = vmul.f32 %v952, %v953
    %v955 = vadd.f32 %v659, %v954
    %s956 = scalar_lea.vmem [#allocation3], 16
    %v957 = vld [vmem:[%s956] sm:$0xf]
    %v958 = vld [vmem:[%s1 + $0x4] sm:$0x1]
    %vm959 = vcmp.gt.s32.totalorder %v958, 0
    %v960 = vadd.f32 %v777, %v50
    %v961 = vadd.f32 %v777, %v57
    %v962 = vadd.f32 %v777, %v64
    %v963 = vadd.f32 %v777, %v71
    %v964 = vsel %vm90, %v960, -inf
    %v965 = vrot.slane %v964, 4
    %v966 = vmax.f32 %v964, %v965
    %v967 = vrot.slane %v966, 2
    %v968 = vmax.f32 %v966, %v967
    %v969 = vrot.slane %v968, 1
    %v970 = vmax.f32 %v968, %v969
    %v971 = vsel %vm90, %v961, -inf
    %v972 = vrot.slane %v971, 4
    %v973 = vmax.f32 %v971, %v972
    %v974 = vrot.slane %v973, 2
    %v975 = vmax.f32 %v973, %v974
    %v976 = vrot.slane %v975, 1
    %v977 = vmax.f32 %v975, %v976
    %v978 = vsel %vm90, %v962, -inf
    %v979 = vrot.slane %v978, 4
    %v980 = vmax.f32 %v978, %v979
    %v981 = vrot.slane %v980, 2
    %v982 = vmax.f32 %v980, %v981
    %v983 = vrot.slane %v982, 1
    %v984 = vmax.f32 %v982, %v983
    %v985 = vsel %vm90, %v963, -inf
    %v986 = vrot.slane %v985, 4
    %v987 = vmax.f32 %v985, %v986
    %v988 = vrot.slane %v987, 2
    %v989 = vmax.f32 %v987, %v988
    %v990 = vrot.slane %v989, 1
    %v991 = vmax.f32 %v989, %v990
    %v992 = vsub.f32 %v960, %v970
    %v993 = vsub.f32 %v961, %v977
    %v994 = vsub.f32 %v962, %v984
    %v995 = vsub.f32 %v963, %v991
    %v996 = vmul.f32 %v992, 1.442695
    %v997 = vpow.pop %v996
    %v998 = vmul.f32 %v993, 1.442695
    %v999 = vpow.pop %v998
    %v1000 = vmul.f32 %v994, 1.442695
    %v1001 = vpow.pop %v1000
    %v1002 = vmul.f32 %v995, 1.442695
    %v1003 = vpow.pop %v1002
    %v1004 = vsel %vm90, %v997, 0.0
    %v1005 = vrot.slane %v1004, 4
    %v1006 = vadd.f32 %v1004, %v1005
    %v1007 = vrot.slane %v1006, 2
    %v1008 = vadd.f32 %v1006, %v1007
    %v1009 = vrot.slane %v1008, 1
    %v1010 = vadd.f32 %v1008, %v1009
    %v1011 = vsel %vm90, %v999, 0.0
    %v1012 = vrot.slane %v1011, 4
    %v1013 = vadd.f32 %v1011, %v1012
    %v1014 = vrot.slane %v1013, 2
    %v1015 = vadd.f32 %v1013, %v1014
    %v1016 = vrot.slane %v1015, 1
    %v1017 = vadd.f32 %v1015, %v1016
    %v1018 = vsel %vm90, %v1001, 0.0
    %v1019 = vrot.slane %v1018, 4
    %v1020 = vadd.f32 %v1018, %v1019
    %v1021 = vrot.slane %v1020, 2
    %v1022 = vadd.f32 %v1020, %v1021
    %v1023 = vrot.slane %v1022, 1
    %v1024 = vadd.f32 %v1022, %v1023
    %v1025 = vsel %vm90, %v1003, 0.0
    %v1026 = vrot.slane %v1025, 4
    %v1027 = vadd.f32 %v1025, %v1026
    %v1028 = vrot.slane %v1027, 2
    %v1029 = vadd.f32 %v1027, %v1028
    %v1030 = vrot.slane %v1029, 1
    %v1031 = vadd.f32 %v1029, %v1030
    %v1032 = vlog2.pop %v1010
    %v1033 = vmul.f32 %v1032, 0.6931472
    %v1034 = vlog2.pop %v1017
    %v1035 = vmul.f32 %v1034, 0.6931472
    %v1036 = vlog2.pop %v1024
    %v1037 = vmul.f32 %v1036, 0.6931472
    %v1038 = vlog2.pop %v1031
    %v1039 = vmul.f32 %v1038, 0.6931472
    %v1040 = vadd.f32 %v970, %v1033
    %v1041 = vadd.f32 %v977, %v1035
    %v1042 = vadd.f32 %v984, %v1037
    %v1043 = vadd.f32 %v991, %v1039
    %v1045 = vrot.slane %v957, 1
    %v1046 = vrot.slane %v957, 2
    %v1047 = vrot.slane %v957, 3
    %v1052 = vadd.f32 %v1040, %v957
    %v1053 = vadd.f32 %v1041, %v1045
    %v1054 = vadd.f32 %v1042, %v1046
    %v1055 = vadd.f32 %v1043, %v1047
    %v1056 = vsel %vm959, 1, 0
    %v1057 = vlaneseq
    %v1058 = vshrl.u32 %v1057, 7
    %v1059 = vsub.s32 0, %v1058
    %v1060 = vrot.slane %v1056, %v1059
    %vm1061 = vcmp.eq.s32.totalorder %v1060, 1
    %v1066 = vrot.slane %v1053, 7
    %v1067 = vsel %vm209, %v1066, %v1052
    %v1068 = vrot.slane %v1054, 6
    %v1069 = vsel %vm212, %v1068, %v1067
    %v1070 = vrot.slane %v1055, 5
    %v1071 = vsel %vm215, %v1070, %v1069
    %v1073 = vsel %vm1061, %v1071, %v777
    %v1074 = vadd.f32 %v878, %v50
    %v1075 = vadd.f32 %v878, %v57
    %v1076 = vadd.f32 %v878, %v64
    %v1077 = vadd.f32 %v878, %v71
    %v1078 = vsel %vm90, %v1074, -inf
    %v1079 = vrot.slane %v1078, 4
    %v1080 = vmax.f32 %v1078, %v1079
    %v1081 = vrot.slane %v1080, 2
    %v1082 = vmax.f32 %v1080, %v1081
    %v1083 = vrot.slane %v1082, 1
    %v1084 = vmax.f32 %v1082, %v1083
    %v1085 = vsel %vm90, %v1075, -inf
    %v1086 = vrot.slane %v1085, 4
    %v1087 = vmax.f32 %v1085, %v1086
    %v1088 = vrot.slane %v1087, 2
    %v1089 = vmax.f32 %v1087, %v1088
    %v1090 = vrot.slane %v1089, 1
    %v1091 = vmax.f32 %v1089, %v1090
    %v1092 = vsel %vm90, %v1076, -inf
    %v1093 = vrot.slane %v1092, 4
    %v1094 = vmax.f32 %v1092, %v1093
    %v1095 = vrot.slane %v1094, 2
    %v1096 = vmax.f32 %v1094, %v1095
    %v1097 = vrot.slane %v1096, 1
    %v1098 = vmax.f32 %v1096, %v1097
    %v1099 = vsel %vm90, %v1077, -inf
    %v1100 = vrot.slane %v1099, 4
    %v1101 = vmax.f32 %v1099, %v1100
    %v1102 = vrot.slane %v1101, 2
    %v1103 = vmax.f32 %v1101, %v1102
    %v1104 = vrot.slane %v1103, 1
    %v1105 = vmax.f32 %v1103, %v1104
    %vm1106 = vcmp.eq.f32.partialorder %v1074, %v1084
    %vm1107 = vcmp.eq.f32.partialorder %v1075, %v1091
    %vm1108 = vcmp.eq.f32.partialorder %v1076, %v1098
    %vm1109 = vcmp.eq.f32.partialorder %v1077, %v1105
    %v1110 = vsel %vm1106, %v73, 4
    %v1111 = vsel %vm1107, %v73, 4
    %v1112 = vsel %vm1108, %v73, 4
    %v1113 = vsel %vm1109, %v73, 4
    %v1114 = vsel %vm90, %v1110, 2147483647
    %v1115 = vrot.slane %v1114, 4
    %vm1116 = vcmp.lt.s32.totalorder %v1114, %v1115
    %v1117 = vsel %vm1116, %v1114, %v1115
    %v1118 = vrot.slane %v1117, 2
    %vm1119 = vcmp.lt.s32.totalorder %v1117, %v1118
    %v1120 = vsel %vm1119, %v1117, %v1118
    %v1121 = vrot.slane %v1120, 1
    %vm1122 = vcmp.lt.s32.totalorder %v1120, %v1121
    %v1123 = vsel %vm1122, %v1120, %v1121
    %v1124 = vsel %vm90, %v1111, 2147483647
    %v1125 = vrot.slane %v1124, 4
    %vm1126 = vcmp.lt.s32.totalorder %v1124, %v1125
    %v1127 = vsel %vm1126, %v1124, %v1125
    %v1128 = vrot.slane %v1127, 2
    %vm1129 = vcmp.lt.s32.totalorder %v1127, %v1128
    %v1130 = vsel %vm1129, %v1127, %v1128
    %v1131 = vrot.slane %v1130, 1
    %vm1132 = vcmp.lt.s32.totalorder %v1130, %v1131
    %v1133 = vsel %vm1132, %v1130, %v1131
    %v1134 = vsel %vm90, %v1112, 2147483647
    %v1135 = vrot.slane %v1134, 4
    %vm1136 = vcmp.lt.s32.totalorder %v1134, %v1135
    %v1137 = vsel %vm1136, %v1134, %v1135
    %v1138 = vrot.slane %v1137, 2
    %vm1139 = vcmp.lt.s32.totalorder %v1137, %v1138
    %v1140 = vsel %vm1139, %v1137, %v1138
    %v1141 = vrot.slane %v1140, 1
    %vm1142 = vcmp.lt.s32.totalorder %v1140, %v1141
    %v1143 = vsel %vm1142, %v1140, %v1141
    %v1144 = vsel %vm90, %v1113, 2147483647
    %v1145 = vrot.slane %v1144, 4
    %vm1146 = vcmp.lt.s32.totalorder %v1144, %v1145
    %v1147 = vsel %vm1146, %v1144, %v1145
    %v1148 = vrot.slane %v1147, 2
    %vm1149 = vcmp.lt.s32.totalorder %v1147, %v1148
    %v1150 = vsel %vm1149, %v1147, %v1148
    %v1151 = vrot.slane %v1150, 1
    %vm1152 = vcmp.lt.s32.totalorder %v1150, %v1151
    %v1153 = vsel %vm1152, %v1150, %v1151
    %v1154 = vsel %vm209, %v1133, %v1123
    %v1155 = vsel %vm212, %v1143, %v1154
    %v1156 = vsel %vm215, %v1153, %v1155
    %s1157 = scalar_lea.vmem [#allocation2], 12
    %1158 = vst [vmem:[%s1157] sm:$0xf] %v1156
    %v1159 = vadd.f32 %v1084, %v957
    %v1160 = vadd.f32 %v1091, %v1045
    %v1161 = vadd.f32 %v1098, %v1046
    %v1162 = vadd.f32 %v1105, %v1047
    %v1167 = vrot.slane %v1160, 7
    %v1168 = vsel %vm209, %v1167, %v1159
    %v1169 = vrot.slane %v1161, 6
    %v1170 = vsel %vm212, %v1169, %v1168
    %v1171 = vrot.slane %v1162, 5
    %v1172 = vsel %vm215, %v1171, %v1170
    %v1174 = vsel %vm1061, %v1172, %v878
    %v1175 = vld [vmem:[%s2 + $0x4] sm:$0x1]
    %v1176 = vlaneseq
    %v1177 = vshrl.u32 %v1176, 7
    %v1178 = vsub.s32 0, %v1177
    %v1179 = vrot.slane %v1175, %v1178
    %vm1180 = vcmp.eq.s32.totalorder %v73, %v1179
    %v1181 = vsel %vm1180, 1, 0
    %v1182 = vcvt.s32.f32 %v1181
    %v1183 = vmul.f32 %v50, %v886
    %v1184 = vmul.f32 %v57, %v886
    %v1185 = vmul.f32 %v64, %v886
    %v1186 = vmul.f32 %v71, %v886
    %v1187 = vsel %vm90, %v1183, 0.0
    %v1188 = vrot.slane %v1187, 4
    %v1189 = vadd.f32 %v1187, %v1188
    %v1190 = vrot.slane %v1189, 2
    %v1191 = vadd.f32 %v1189, %v1190
    %v1192 = vrot.slane %v1191, 1
    %v1193 = vadd.f32 %v1191, %v1192
    %v1194 = vsel %vm90, %v1184, 0.0
    %v1195 = vrot.slane %v1194, 4
    %v1196 = vadd.f32 %v1194, %v1195
    %v1197 = vrot.slane %v1196, 2
    %v1198 = vadd.f32 %v1196, %v1197
    %v1199 = vrot.slane %v1198, 1
    %v1200 = vadd.f32 %v1198, %v1199
    %v1201 = vsel %vm90, %v1185, 0.0
    %v1202 = vrot.slane %v1201, 4
    %v1203 = vadd.f32 %v1201, %v1202
    %v1204 = vrot.slane %v1203, 2
    %v1205 = vadd.f32 %v1203, %v1204
    %v1206 = vrot.slane %v1205, 1
    %v1207 = vadd.f32 %v1205, %v1206
    %v1208 = vsel %vm90, %v1186, 0.0
    %v1209 = vrot.slane %v1208, 4
    %v1210 = vadd.f32 %v1208, %v1209
    %v1211 = vrot.slane %v1210, 2
    %v1212 = vadd.f32 %v1210, %v1211
    %v1213 = vrot.slane %v1212, 1
    %v1214 = vadd.f32 %v1212, %v1213
    %v1215 = vadd.f32 %v1193, %v957
    %v1216 = vadd.f32 %v1200, %v1045
    %v1217 = vadd.f32 %v1207, %v1046
    %v1218 = vadd.f32 %v1214, %v1047
    %v1220 = vrot.slane %v1182, 1
    %v1221 = vrot.slane %v1182, 2
    %v1222 = vrot.slane %v1182, 3
    %v1227 = vmul.f32 %v1215, %v1182
    %v1228 = vmul.f32 %v1216, %v1220
    %v1229 = vmul.f32 %v1217, %v1221
    %v1230 = vmul.f32 %v1218, %v1222
    %v1235 = vrot.slane %v1228, 7
    %v1236 = vsel %vm209, %v1235, %v1227
    %v1237 = vrot.slane %v1229, 6
    %v1238 = vsel %vm212, %v1237, %v1236
    %v1239 = vrot.slane %v1230, 5
    %v1240 = vsel %vm215, %v1239, %v1238
    %v1242 = vsel %vm90, %v1240, 0.0
    %v1243 = vrot.slane %v1242, 4
    %v1244 = vadd.f32 %v1242, %v1243
    %v1245 = vrot.slane %v1244, 2
    %v1246 = vadd.f32 %v1244, %v1245
    %v1247 = vrot.slane %v1246, 1
    %v1248 = vadd.f32 %v1246, %v1247
    %v1249 = vcvt.s32.f32 %v958
    %v1250 = vmul.f32 %v1248, %v1249
    %v1251 = vadd.f32 %v955, %v1250
    %s1252 = scalar_lea.vmem [#allocation3], 20
    %v1253 = vld [vmem:[%s1252] sm:$0xf]
    %v1254 = vld [vmem:[%s1 + $0x5] sm:$0x1]
    %vm1255 = vcmp.gt.s32.totalorder %v1254, 0
    %v1256 = vadd.f32 %v1073, %v50
    %v1257 = vadd.f32 %v1073, %v57
    %v1258 = vadd.f32 %v1073, %v64
    %v1259 = vadd.f32 %v1073, %v71
    %v1260 = vsel %vm90, %v1256, -inf
    %v1261 = vrot.slane %v1260, 4
    %v1262 = vmax.f32 %v1260, %v1261
    %v1263 = vrot.slane %v1262, 2
    %v1264 = vmax.f32 %v1262, %v1263
    %v1265 = vrot.slane %v1264, 1
    %v1266 = vmax.f32 %v1264, %v1265
    %v1267 = vsel %vm90, %v1257, -inf
    %v1268 = vrot.slane %v1267, 4
    %v1269 = vmax.f32 %v1267, %v1268
    %v1270 = vrot.slane %v1269, 2
    %v1271 = vmax.f32 %v1269, %v1270
    %v1272 = vrot.slane %v1271, 1
    %v1273 = vmax.f32 %v1271, %v1272
    %v1274 = vsel %vm90, %v1258, -inf
    %v1275 = vrot.slane %v1274, 4
    %v1276 = vmax.f32 %v1274, %v1275
    %v1277 = vrot.slane %v1276, 2
    %v1278 = vmax.f32 %v1276, %v1277
    %v1279 = vrot.slane %v1278, 1
    %v1280 = vmax.f32 %v1278, %v1279
    %v1281 = vsel %vm90, %v1259, -inf
    %v1282 = vrot.slane %v1281, 4
    %v1283 = vmax.f32 %v1281, %v1282
    %v1284 = vrot.slane %v1283, 2
    %v1285 = vmax.f32 %v1283, %v1284
    %v1286 = vrot.slane %v1285, 1
    %v1287 = vmax.f32 %v1285, %v1286
    %v1288 = vsub.f32 %v1256, %v1266
    %v1289 = vsub.f32 %v1257, %v1273
    %v1290 = vsub.f32 %v1258, %v1280
    %v1291 = vsub.f32 %v1259, %v1287
    %v1292 = vmul.f32 %v1288, 1.442695
    %v1293 = vpow.pop %v1292
    %v1294 = vmul.f32 %v1289, 1.442695
    %v1295 = vpow.pop %v1294
    %v1296 = vmul.f32 %v1290, 1.442695
    %v1297 = vpow.pop %v1296
    %v1298 = vmul.f32 %v1291, 1.442695
    %v1299 = vpow.pop %v1298
    %v1300 = vsel %vm90, %v1293, 0.0
    %v1301 = vrot.slane %v1300, 4
    %v1302 = vadd.f32 %v1300, %v1301
    %v1303 = vrot.slane %v1302, 2
    %v1304 = vadd.f32 %v1302, %v1303
    %v1305 = vrot.slane %v1304, 1
    %v1306 = vadd.f32 %v1304, %v1305
    %v1307 = vsel %vm90, %v1295, 0.0
    %v1308 = vrot.slane %v1307, 4
    %v1309 = vadd.f32 %v1307, %v1308
    %v1310 = vrot.slane %v1309, 2
    %v1311 = vadd.f32 %v1309, %v1310
    %v1312 = vrot.slane %v1311, 1
    %v1313 = vadd.f32 %v1311, %v1312
    %v1314 = vsel %vm90, %v1297, 0.0
    %v1315 = vrot.slane %v1314, 4
    %v1316 = vadd.f32 %v1314, %v1315
    %v1317 = vrot.slane %v1316, 2
    %v1318 = vadd.f32 %v1316, %v1317
    %v1319 = vrot.slane %v1318, 1
    %v1320 = vadd.f32 %v1318, %v1319
    %v1321 = vsel %vm90, %v1299, 0.0
    %v1322 = vrot.slane %v1321, 4
    %v1323 = vadd.f32 %v1321, %v1322
    %v1324 = vrot.slane %v1323, 2
    %v1325 = vadd.f32 %v1323, %v1324
    %v1326 = vrot.slane %v1325, 1
    %v1327 = vadd.f32 %v1325, %v1326
    %v1328 = vlog2.pop %v1306
    %v1329 = vmul.f32 %v1328, 0.6931472
    %v1330 = vlog2.pop %v1313
    %v1331 = vmul.f32 %v1330, 0.6931472
    %v1332 = vlog2.pop %v1320
    %v1333 = vmul.f32 %v1332, 0.6931472
    %v1334 = vlog2.pop %v1327
    %v1335 = vmul.f32 %v1334, 0.6931472
    %v1336 = vadd.f32 %v1266, %v1329
    %v1337 = vadd.f32 %v1273, %v1331
    %v1338 = vadd.f32 %v1280, %v1333
    %v1339 = vadd.f32 %v1287, %v1335
    %v1341 = vrot.slane %v1253, 1
    %v1342 = vrot.slane %v1253, 2
    %v1343 = vrot.slane %v1253, 3
    %v1348 = vadd.f32 %v1336, %v1253
    %v1349 = vadd.f32 %v1337, %v1341
    %v1350 = vadd.f32 %v1338, %v1342
    %v1351 = vadd.f32 %v1339, %v1343
    %v1352 = vsel %vm1255, 1, 0
    %v1353 = vlaneseq
    %v1354 = vshrl.u32 %v1353, 7
    %v1355 = vsub.s32 0, %v1354
    %v1356 = vrot.slane %v1352, %v1355
    %vm1357 = vcmp.eq.s32.totalorder %v1356, 1
    %v1362 = vrot.slane %v1349, 7
    %v1363 = vsel %vm209, %v1362, %v1348
    %v1364 = vrot.slane %v1350, 6
    %v1365 = vsel %vm212, %v1364, %v1363
    %v1366 = vrot.slane %v1351, 5
    %v1367 = vsel %vm215, %v1366, %v1365
    %v1369 = vsel %vm1357, %v1367, %v1073
    %v1370 = vadd.f32 %v1174, %v50
    %v1371 = vadd.f32 %v1174, %v57
    %v1372 = vadd.f32 %v1174, %v64
    %v1373 = vadd.f32 %v1174, %v71
    %v1374 = vsel %vm90, %v1370, -inf
    %v1375 = vrot.slane %v1374, 4
    %v1376 = vmax.f32 %v1374, %v1375
    %v1377 = vrot.slane %v1376, 2
    %v1378 = vmax.f32 %v1376, %v1377
    %v1379 = vrot.slane %v1378, 1
    %v1380 = vmax.f32 %v1378, %v1379
    %v1381 = vsel %vm90, %v1371, -inf
    %v1382 = vrot.slane %v1381, 4
    %v1383 = vmax.f32 %v1381, %v1382
    %v1384 = vrot.slane %v1383, 2
    %v1385 = vmax.f32 %v1383, %v1384
    %v1386 = vrot.slane %v1385, 1
    %v1387 = vmax.f32 %v1385, %v1386
    %v1388 = vsel %vm90, %v1372, -inf
    %v1389 = vrot.slane %v1388, 4
    %v1390 = vmax.f32 %v1388, %v1389
    %v1391 = vrot.slane %v1390, 2
    %v1392 = vmax.f32 %v1390, %v1391
    %v1393 = vrot.slane %v1392, 1
    %v1394 = vmax.f32 %v1392, %v1393
    %v1395 = vsel %vm90, %v1373, -inf
    %v1396 = vrot.slane %v1395, 4
    %v1397 = vmax.f32 %v1395, %v1396
    %v1398 = vrot.slane %v1397, 2
    %v1399 = vmax.f32 %v1397, %v1398
    %v1400 = vrot.slane %v1399, 1
    %v1401 = vmax.f32 %v1399, %v1400
    %vm1402 = vcmp.eq.f32.partialorder %v1370, %v1380
    %vm1403 = vcmp.eq.f32.partialorder %v1371, %v1387
    %vm1404 = vcmp.eq.f32.partialorder %v1372, %v1394
    %vm1405 = vcmp.eq.f32.partialorder %v1373, %v1401
    %v1406 = vsel %vm1402, %v73, 4
    %v1407 = vsel %vm1403, %v73, 4
    %v1408 = vsel %vm1404, %v73, 4
    %v1409 = vsel %vm1405, %v73, 4
    %v1410 = vsel %vm90, %v1406, 2147483647
    %v1411 = vrot.slane %v1410, 4
    %vm1412 = vcmp.lt.s32.totalorder %v1410, %v1411
    %v1413 = vsel %vm1412, %v1410, %v1411
    %v1414 = vrot.slane %v1413, 2
    %vm1415 = vcmp.lt.s32.totalorder %v1413, %v1414
    %v1416 = vsel %vm1415, %v1413, %v1414
    %v1417 = vrot.slane %v1416, 1
    %vm1418 = vcmp.lt.s32.totalorder %v1416, %v1417
    %v1419 = vsel %vm1418, %v1416, %v1417
    %v1420 = vsel %vm90, %v1407, 2147483647
    %v1421 = vrot.slane %v1420, 4
    %vm1422 = vcmp.lt.s32.totalorder %v1420, %v1421
    %v1423 = vsel %vm1422, %v1420, %v1421
    %v1424 = vrot.slane %v1423, 2
    %vm1425 = vcmp.lt.s32.totalorder %v1423, %v1424
    %v1426 = vsel %vm1425, %v1423, %v1424
    %v1427 = vrot.slane %v1426, 1
    %vm1428 = vcmp.lt.s32.totalorder %v1426, %v1427
    %v1429 = vsel %vm1428, %v1426, %v1427
    %v1430 = vsel %vm90, %v1408, 2147483647
    %v1431 = vrot.slane %v1430, 4
    %vm1432 = vcmp.lt.s32.totalorder %v1430, %v1431
    %v1433 = vsel %vm1432, %v1430, %v1431
    %v1434 = vrot.slane %v1433, 2
    %vm1435 = vcmp.lt.s32.totalorder %v1433, %v1434
    %v1436 = vsel %vm1435, %v1433, %v1434
    %v1437 = vrot.slane %v1436, 1
    %vm1438 = vcmp.lt.s32.totalorder %v1436, %v1437
    %v1439 = vsel %vm1438, %v1436, %v1437
    %v1440 = vsel %vm90, %v1409, 2147483647
    %v1441 = vrot.slane %v1440, 4
    %vm1442 = vcmp.lt.s32.totalorder %v1440, %v1441
    %v1443 = vsel %vm1442, %v1440, %v1441
    %v1444 = vrot.slane %v1443, 2
    %vm1445 = vcmp.lt.s32.totalorder %v1443, %v1444
    %v1446 = vsel %vm1445, %v1443, %v1444
    %v1447 = vrot.slane %v1446, 1
    %vm1448 = vcmp.lt.s32.totalorder %v1446, %v1447
    %v1449 = vsel %vm1448, %v1446, %v1447
    %v1450 = vsel %vm209, %v1429, %v1419
    %v1451 = vsel %vm212, %v1439, %v1450
    %v1452 = vsel %vm215, %v1449, %v1451
    %s1453 = scalar_lea.vmem [#allocation2], 16
    %1454 = vst [vmem:[%s1453] sm:$0xf] %v1452
    %v1455 = vadd.f32 %v1380, %v1253
    %v1456 = vadd.f32 %v1387, %v1341
    %v1457 = vadd.f32 %v1394, %v1342
    %v1458 = vadd.f32 %v1401, %v1343
    %v1463 = vrot.slane %v1456, 7
    %v1464 = vsel %vm209, %v1463, %v1455
    %v1465 = vrot.slane %v1457, 6
    %v1466 = vsel %vm212, %v1465, %v1464
    %v1467 = vrot.slane %v1458, 5
    %v1468 = vsel %vm215, %v1467, %v1466
    %v1470 = vsel %vm1357, %v1468, %v1174
    %v1471 = vld [vmem:[%s2 + $0x5] sm:$0x1]
    %v1472 = vlaneseq
    %v1473 = vshrl.u32 %v1472, 7
    %v1474 = vsub.s32 0, %v1473
    %v1475 = vrot.slane %v1471, %v1474
    %vm1476 = vcmp.eq.s32.totalorder %v73, %v1475
    %v1477 = vsel %vm1476, 1, 0
    %v1478 = vcvt.s32.f32 %v1477
    %v1479 = vmul.f32 %v50, %v1182
    %v1480 = vmul.f32 %v57, %v1182
    %v1481 = vmul.f32 %v64, %v1182
    %v1482 = vmul.f32 %v71, %v1182
    %v1483 = vsel %vm90, %v1479, 0.0
    %v1484 = vrot.slane %v1483, 4
    %v1485 = vadd.f32 %v1483, %v1484
    %v1486 = vrot.slane %v1485, 2
    %v1487 = vadd.f32 %v1485, %v1486
    %v1488 = vrot.slane %v1487, 1
    %v1489 = vadd.f32 %v1487, %v1488
    %v1490 = vsel %vm90, %v1480, 0.0
    %v1491 = vrot.slane %v1490, 4
    %v1492 = vadd.f32 %v1490, %v1491
    %v1493 = vrot.slane %v1492, 2
    %v1494 = vadd.f32 %v1492, %v1493
    %v1495 = vrot.slane %v1494, 1
    %v1496 = vadd.f32 %v1494, %v1495
    %v1497 = vsel %vm90, %v1481, 0.0
    %v1498 = vrot.slane %v1497, 4
    %v1499 = vadd.f32 %v1497, %v1498
    %v1500 = vrot.slane %v1499, 2
    %v1501 = vadd.f32 %v1499, %v1500
    %v1502 = vrot.slane %v1501, 1
    %v1503 = vadd.f32 %v1501, %v1502
    %v1504 = vsel %vm90, %v1482, 0.0
    %v1505 = vrot.slane %v1504, 4
    %v1506 = vadd.f32 %v1504, %v1505
    %v1507 = vrot.slane %v1506, 2
    %v1508 = vadd.f32 %v1506, %v1507
    %v1509 = vrot.slane %v1508, 1
    %v1510 = vadd.f32 %v1508, %v1509
    %v1511 = vadd.f32 %v1489, %v1253
    %v1512 = vadd.f32 %v1496, %v1341
    %v1513 = vadd.f32 %v1503, %v1342
    %v1514 = vadd.f32 %v1510, %v1343
    %v1516 = vrot.slane %v1478, 1
    %v1517 = vrot.slane %v1478, 2
    %v1518 = vrot.slane %v1478, 3
    %v1523 = vmul.f32 %v1511, %v1478
    %v1524 = vmul.f32 %v1512, %v1516
    %v1525 = vmul.f32 %v1513, %v1517
    %v1526 = vmul.f32 %v1514, %v1518
    %v1531 = vrot.slane %v1524, 7
    %v1532 = vsel %vm209, %v1531, %v1523
    %v1533 = vrot.slane %v1525, 6
    %v1534 = vsel %vm212, %v1533, %v1532
    %v1535 = vrot.slane %v1526, 5
    %v1536 = vsel %vm215, %v1535, %v1534
    %v1538 = vsel %vm90, %v1536, 0.0
    %v1539 = vrot.slane %v1538, 4
    %v1540 = vadd.f32 %v1538, %v1539
    %v1541 = vrot.slane %v1540, 2
    %v1542 = vadd.f32 %v1540, %v1541
    %v1543 = vrot.slane %v1542, 1
    %v1544 = vadd.f32 %v1542, %v1543
    %v1545 = vcvt.s32.f32 %v1254
    %v1546 = vmul.f32 %v1544, %v1545
    %v1547 = vadd.f32 %v1251, %v1546
    %s1548 = scalar_lea.vmem [#allocation3], 24
    %v1549 = vld [vmem:[%s1548] sm:$0xf]
    %v1550 = vld [vmem:[%s1 + $0x6] sm:$0x1]
    %vm1551 = vcmp.gt.s32.totalorder %v1550, 0
    %v1552 = vadd.f32 %v1369, %v50
    %v1553 = vadd.f32 %v1369, %v57
    %v1554 = vadd.f32 %v1369, %v64
    %v1555 = vadd.f32 %v1369, %v71
    %v1556 = vsel %vm90, %v1552, -inf
    %v1557 = vrot.slane %v1556, 4
    %v1558 = vmax.f32 %v1556, %v1557
    %v1559 = vrot.slane %v1558, 2
    %v1560 = vmax.f32 %v1558, %v1559
    %v1561 = vrot.slane %v1560, 1
    %v1562 = vmax.f32 %v1560, %v1561
    %v1563 = vsel %vm90, %v1553, -inf
    %v1564 = vrot.slane %v1563, 4
    %v1565 = vmax.f32 %v1563, %v1564
    %v1566 = vrot.slane %v1565, 2
    %v1567 = vmax.f32 %v1565, %v1566
    %v1568 = vrot.slane %v1567, 1
    %v1569 = vmax.f32 %v1567, %v1568
    %v1570 = vsel %vm90, %v1554, -inf
    %v1571 = vrot.slane %v1570, 4
    %v1572 = vmax.f32 %v1570, %v1571
    %v1573 = vrot.slane %v1572, 2
    %v1574 = vmax.f32 %v1572, %v1573
    %v1575 = vrot.slane %v1574, 1
    %v1576 = vmax.f32 %v1574, %v1575
    %v1577 = vsel %vm90, %v1555, -inf
    %v1578 = vrot.slane %v1577, 4
    %v1579 = vmax.f32 %v1577, %v1578
    %v1580 = vrot.slane %v1579, 2
    %v1581 = vmax.f32 %v1579, %v1580
    %v1582 = vrot.slane %v1581, 1
    %v1583 = vmax.f32 %v1581, %v1582
    %v1584 = vsub.f32 %v1552, %v1562
    %v1585 = vsub.f32 %v1553, %v1569
    %v1586 = vsub.f32 %v1554, %v1576
    %v1587 = vsub.f32 %v1555, %v1583
    %v1588 = vmul.f32 %v1584, 1.442695
    %v1589 = vpow.pop %v1588
    %v1590 = vmul.f32 %v1585, 1.442695
    %v1591 = vpow.pop %v1590
    %v1592 = vmul.f32 %v1586, 1.442695
    %v1593 = vpow.pop %v1592
    %v1594 = vmul.f32 %v1587, 1.442695
    %v1595 = vpow.pop %v1594
    %v1596 = vsel %vm90, %v1589, 0.0
    %v1597 = vrot.slane %v1596, 4
    %v1598 = vadd.f32 %v1596, %v1597
    %v1599 = vrot.slane %v1598, 2
    %v1600 = vadd.f32 %v1598, %v1599
    %v1601 = vrot.slane %v1600, 1
    %v1602 = vadd.f32 %v1600, %v1601
    %v1603 = vsel %vm90, %v1591, 0.0
    %v1604 = vrot.slane %v1603, 4
    %v1605 = vadd.f32 %v1603, %v1604
    %v1606 = vrot.slane %v1605, 2
    %v1607 = vadd.f32 %v1605, %v1606
    %v1608 = vrot.slane %v1607, 1
    %v1609 = vadd.f32 %v1607, %v1608
    %v1610 = vsel %vm90, %v1593, 0.0
    %v1611 = vrot.slane %v1610, 4
    %v1612 = vadd.f32 %v1610, %v1611
    %v1613 = vrot.slane %v1612, 2
    %v1614 = vadd.f32 %v1612, %v1613
    %v1615 = vrot.slane %v1614, 1
    %v1616 = vadd.f32 %v1614, %v1615
    %v1617 = vsel %vm90, %v1595, 0.0
    %v1618 = vrot.slane %v1617, 4
    %v1619 = vadd.f32 %v1617, %v1618
    %v1620 = vrot.slane %v1619, 2
    %v1621 = vadd.f32 %v1619, %v1620
    %v1622 = vrot.slane %v1621, 1
    %v1623 = vadd.f32 %v1621, %v1622
    %v1624 = vlog2.pop %v1602
    %v1625 = vmul.f32 %v1624, 0.6931472
    %v1626 = vlog2.pop %v1609
    %v1627 = vmul.f32 %v1626, 0.6931472
    %v1628 = vlog2.pop %v1616
    %v1629 = vmul.f32 %v1628, 0.6931472
    %v1630 = vlog2.pop %v1623
    %v1631 = vmul.f32 %v1630, 0.6931472
    %v1632 = vadd.f32 %v1562, %v1625
    %v1633 = vadd.f32 %v1569, %v1627
    %v1634 = vadd.f32 %v1576, %v1629
    %v1635 = vadd.f32 %v1583, %v1631
    %v1637 = vrot.slane %v1549, 1
    %v1638 = vrot.slane %v1549, 2
    %v1639 = vrot.slane %v1549, 3
    %v1644 = vadd.f32 %v1632, %v1549
    %v1645 = vadd.f32 %v1633, %v1637
    %v1646 = vadd.f32 %v1634, %v1638
    %v1647 = vadd.f32 %v1635, %v1639
    %v1648 = vsel %vm1551, 1, 0
    %v1649 = vlaneseq
    %v1650 = vshrl.u32 %v1649, 7
    %v1651 = vsub.s32 0, %v1650
    %v1652 = vrot.slane %v1648, %v1651
    %vm1653 = vcmp.eq.s32.totalorder %v1652, 1
    %v1658 = vrot.slane %v1645, 7
    %v1659 = vsel %vm209, %v1658, %v1644
    %v1660 = vrot.slane %v1646, 6
    %v1661 = vsel %vm212, %v1660, %v1659
    %v1662 = vrot.slane %v1647, 5
    %v1663 = vsel %vm215, %v1662, %v1661
    %v1665 = vsel %vm1653, %v1663, %v1369
    %v1666 = vadd.f32 %v1470, %v50
    %v1667 = vadd.f32 %v1470, %v57
    %v1668 = vadd.f32 %v1470, %v64
    %v1669 = vadd.f32 %v1470, %v71
    %v1670 = vsel %vm90, %v1666, -inf
    %v1671 = vrot.slane %v1670, 4
    %v1672 = vmax.f32 %v1670, %v1671
    %v1673 = vrot.slane %v1672, 2
    %v1674 = vmax.f32 %v1672, %v1673
    %v1675 = vrot.slane %v1674, 1
    %v1676 = vmax.f32 %v1674, %v1675
    %v1677 = vsel %vm90, %v1667, -inf
    %v1678 = vrot.slane %v1677, 4
    %v1679 = vmax.f32 %v1677, %v1678
    %v1680 = vrot.slane %v1679, 2
    %v1681 = vmax.f32 %v1679, %v1680
    %v1682 = vrot.slane %v1681, 1
    %v1683 = vmax.f32 %v1681, %v1682
    %v1684 = vsel %vm90, %v1668, -inf
    %v1685 = vrot.slane %v1684, 4
    %v1686 = vmax.f32 %v1684, %v1685
    %v1687 = vrot.slane %v1686, 2
    %v1688 = vmax.f32 %v1686, %v1687
    %v1689 = vrot.slane %v1688, 1
    %v1690 = vmax.f32 %v1688, %v1689
    %v1691 = vsel %vm90, %v1669, -inf
    %v1692 = vrot.slane %v1691, 4
    %v1693 = vmax.f32 %v1691, %v1692
    %v1694 = vrot.slane %v1693, 2
    %v1695 = vmax.f32 %v1693, %v1694
    %v1696 = vrot.slane %v1695, 1
    %v1697 = vmax.f32 %v1695, %v1696
    %vm1698 = vcmp.eq.f32.partialorder %v1666, %v1676
    %vm1699 = vcmp.eq.f32.partialorder %v1667, %v1683
    %vm1700 = vcmp.eq.f32.partialorder %v1668, %v1690
    %vm1701 = vcmp.eq.f32.partialorder %v1669, %v1697
    %v1702 = vsel %vm1698, %v73, 4
    %v1703 = vsel %vm1699, %v73, 4
    %v1704 = vsel %vm1700, %v73, 4
    %v1705 = vsel %vm1701, %v73, 4
    %v1706 = vsel %vm90, %v1702, 2147483647
    %v1707 = vrot.slane %v1706, 4
    %vm1708 = vcmp.lt.s32.totalorder %v1706, %v1707
    %v1709 = vsel %vm1708, %v1706, %v1707
    %v1710 = vrot.slane %v1709, 2
    %vm1711 = vcmp.lt.s32.totalorder %v1709, %v1710
    %v1712 = vsel %vm1711, %v1709, %v1710
    %v1713 = vrot.slane %v1712, 1
    %vm1714 = vcmp.lt.s32.totalorder %v1712, %v1713
    %v1715 = vsel %vm1714, %v1712, %v1713
    %v1716 = vsel %vm90, %v1703, 2147483647
    %v1717 = vrot.slane %v1716, 4
    %vm1718 = vcmp.lt.s32.totalorder %v1716, %v1717
    %v1719 = vsel %vm1718, %v1716, %v1717
    %v1720 = vrot.slane %v1719, 2
    %vm1721 = vcmp.lt.s32.totalorder %v1719, %v1720
    %v1722 = vsel %vm1721, %v1719, %v1720
    %v1723 = vrot.slane %v1722, 1
    %vm1724 = vcmp.lt.s32.totalorder %v1722, %v1723
    %v1725 = vsel %vm1724, %v1722, %v1723
    %v1726 = vsel %vm90, %v1704, 2147483647
    %v1727 = vrot.slane %v1726, 4
    %vm1728 = vcmp.lt.s32.totalorder %v1726, %v1727
    %v1729 = vsel %vm1728, %v1726, %v1727
    %v1730 = vrot.slane %v1729, 2
    %vm1731 = vcmp.lt.s32.totalorder %v1729, %v1730
    %v1732 = vsel %vm1731, %v1729, %v1730
    %v1733 = vrot.slane %v1732, 1
    %vm1734 = vcmp.lt.s32.totalorder %v1732, %v1733
    %v1735 = vsel %vm1734, %v1732, %v1733
    %v1736 = vsel %vm90, %v1705, 2147483647
    %v1737 = vrot.slane %v1736, 4
    %vm1738 = vcmp.lt.s32.totalorder %v1736, %v1737
    %v1739 = vsel %vm1738, %v1736, %v1737
    %v1740 = vrot.slane %v1739, 2
    %vm1741 = vcmp.lt.s32.totalorder %v1739, %v1740
    %v1742 = vsel %vm1741, %v1739, %v1740
    %v1743 = vrot.slane %v1742, 1
    %vm1744 = vcmp.lt.s32.totalorder %v1742, %v1743
    %v1745 = vsel %vm1744, %v1742, %v1743
    %v1746 = vsel %vm209, %v1725, %v1715
    %v1747 = vsel %vm212, %v1735, %v1746
    %v1748 = vsel %vm215, %v1745, %v1747
    %s1749 = scalar_lea.vmem [#allocation2], 20
    %1750 = vst [vmem:[%s1749] sm:$0xf] %v1748
    %v1751 = vadd.f32 %v1676, %v1549
    %v1752 = vadd.f32 %v1683, %v1637
    %v1753 = vadd.f32 %v1690, %v1638
    %v1754 = vadd.f32 %v1697, %v1639
    %v1759 = vrot.slane %v1752, 7
    %v1760 = vsel %vm209, %v1759, %v1751
    %v1761 = vrot.slane %v1753, 6
    %v1762 = vsel %vm212, %v1761, %v1760
    %v1763 = vrot.slane %v1754, 5
    %v1764 = vsel %vm215, %v1763, %v1762
    %v1766 = vsel %vm1653, %v1764, %v1470
    %v1767 = vld [vmem:[%s2 + $0x6] sm:$0x1]
    %v1768 = vlaneseq
    %v1769 = vshrl.u32 %v1768, 7
    %v1770 = vsub.s32 0, %v1769
    %v1771 = vrot.slane %v1767, %v1770
    %vm1772 = vcmp.eq.s32.totalorder %v73, %v1771
    %v1773 = vsel %vm1772, 1, 0
    %v1774 = vcvt.s32.f32 %v1773
    %v1775 = vmul.f32 %v50, %v1478
    %v1776 = vmul.f32 %v57, %v1478
    %v1777 = vmul.f32 %v64, %v1478
    %v1778 = vmul.f32 %v71, %v1478
    %v1779 = vsel %vm90, %v1775, 0.0
    %v1780 = vrot.slane %v1779, 4
    %v1781 = vadd.f32 %v1779, %v1780
    %v1782 = vrot.slane %v1781, 2
    %v1783 = vadd.f32 %v1781, %v1782
    %v1784 = vrot.slane %v1783, 1
    %v1785 = vadd.f32 %v1783, %v1784
    %v1786 = vsel %vm90, %v1776, 0.0
    %v1787 = vrot.slane %v1786, 4
    %v1788 = vadd.f32 %v1786, %v1787
    %v1789 = vrot.slane %v1788, 2
    %v1790 = vadd.f32 %v1788, %v1789
    %v1791 = vrot.slane %v1790, 1
    %v1792 = vadd.f32 %v1790, %v1791
    %v1793 = vsel %vm90, %v1777, 0.0
    %v1794 = vrot.slane %v1793, 4
    %v1795 = vadd.f32 %v1793, %v1794
    %v1796 = vrot.slane %v1795, 2
    %v1797 = vadd.f32 %v1795, %v1796
    %v1798 = vrot.slane %v1797, 1
    %v1799 = vadd.f32 %v1797, %v1798
    %v1800 = vsel %vm90, %v1778, 0.0
    %v1801 = vrot.slane %v1800, 4
    %v1802 = vadd.f32 %v1800, %v1801
    %v1803 = vrot.slane %v1802, 2
    %v1804 = vadd.f32 %v1802, %v1803
    %v1805 = vrot.slane %v1804, 1
    %v1806 = vadd.f32 %v1804, %v1805
    %v1807 = vadd.f32 %v1785, %v1549
    %v1808 = vadd.f32 %v1792, %v1637
    %v1809 = vadd.f32 %v1799, %v1638
    %v1810 = vadd.f32 %v1806, %v1639
    %v1812 = vrot.slane %v1774, 1
    %v1813 = vrot.slane %v1774, 2
    %v1814 = vrot.slane %v1774, 3
    %v1819 = vmul.f32 %v1807, %v1774
    %v1820 = vmul.f32 %v1808, %v1812
    %v1821 = vmul.f32 %v1809, %v1813
    %v1822 = vmul.f32 %v1810, %v1814
    %v1827 = vrot.slane %v1820, 7
    %v1828 = vsel %vm209, %v1827, %v1819
    %v1829 = vrot.slane %v1821, 6
    %v1830 = vsel %vm212, %v1829, %v1828
    %v1831 = vrot.slane %v1822, 5
    %v1832 = vsel %vm215, %v1831, %v1830
    %v1834 = vsel %vm90, %v1832, 0.0
    %v1835 = vrot.slane %v1834, 4
    %v1836 = vadd.f32 %v1834, %v1835
    %v1837 = vrot.slane %v1836, 2
    %v1838 = vadd.f32 %v1836, %v1837
    %v1839 = vrot.slane %v1838, 1
    %v1840 = vadd.f32 %v1838, %v1839
    %v1841 = vcvt.s32.f32 %v1550
    %v1842 = vmul.f32 %v1840, %v1841
    %v1843 = vadd.f32 %v1547, %v1842
    %s1844 = scalar_lea.vmem [#allocation3], 28
    %v1845 = vld [vmem:[%s1844] sm:$0xf]
    %v1846 = vld [vmem:[%s1 + $0x7] sm:$0x1]
    %vm1847 = vcmp.gt.s32.totalorder %v1846, 0
    %v1848 = vadd.f32 %v1665, %v50
    %v1849 = vadd.f32 %v1665, %v57
    %v1850 = vadd.f32 %v1665, %v64
    %v1851 = vadd.f32 %v1665, %v71
    %v1852 = vsel %vm90, %v1848, -inf
    %v1853 = vrot.slane %v1852, 4
    %v1854 = vmax.f32 %v1852, %v1853
    %v1855 = vrot.slane %v1854, 2
    %v1856 = vmax.f32 %v1854, %v1855
    %v1857 = vrot.slane %v1856, 1
    %v1858 = vmax.f32 %v1856, %v1857
    %v1859 = vsel %vm90, %v1849, -inf
    %v1860 = vrot.slane %v1859, 4
    %v1861 = vmax.f32 %v1859, %v1860
    %v1862 = vrot.slane %v1861, 2
    %v1863 = vmax.f32 %v1861, %v1862
    %v1864 = vrot.slane %v1863, 1
    %v1865 = vmax.f32 %v1863, %v1864
    %v1866 = vsel %vm90, %v1850, -inf
    %v1867 = vrot.slane %v1866, 4
    %v1868 = vmax.f32 %v1866, %v1867
    %v1869 = vrot.slane %v1868, 2
    %v1870 = vmax.f32 %v1868, %v1869
    %v1871 = vrot.slane %v1870, 1
    %v1872 = vmax.f32 %v1870, %v1871
    %v1873 = vsel %vm90, %v1851, -inf
    %v1874 = vrot.slane %v1873, 4
    %v1875 = vmax.f32 %v1873, %v1874
    %v1876 = vrot.slane %v1875, 2
    %v1877 = vmax.f32 %v1875, %v1876
    %v1878 = vrot.slane %v1877, 1
    %v1879 = vmax.f32 %v1877, %v1878
    %v1880 = vsub.f32 %v1848, %v1858
    %v1881 = vsub.f32 %v1849, %v1865
    %v1882 = vsub.f32 %v1850, %v1872
    %v1883 = vsub.f32 %v1851, %v1879
    %v1884 = vmul.f32 %v1880, 1.442695
    %v1885 = vpow.pop %v1884
    %v1886 = vmul.f32 %v1881, 1.442695
    %v1887 = vpow.pop %v1886
    %v1888 = vmul.f32 %v1882, 1.442695
    %v1889 = vpow.pop %v1888
    %v1890 = vmul.f32 %v1883, 1.442695
    %v1891 = vpow.pop %v1890
    %v1892 = vsel %vm90, %v1885, 0.0
    %v1893 = vrot.slane %v1892, 4
    %v1894 = vadd.f32 %v1892, %v1893
    %v1895 = vrot.slane %v1894, 2
    %v1896 = vadd.f32 %v1894, %v1895
    %v1897 = vrot.slane %v1896, 1
    %v1898 = vadd.f32 %v1896, %v1897
    %v1899 = vsel %vm90, %v1887, 0.0
    %v1900 = vrot.slane %v1899, 4
    %v1901 = vadd.f32 %v1899, %v1900
    %v1902 = vrot.slane %v1901, 2
    %v1903 = vadd.f32 %v1901, %v1902
    %v1904 = vrot.slane %v1903, 1
    %v1905 = vadd.f32 %v1903, %v1904
    %v1906 = vsel %vm90, %v1889, 0.0
    %v1907 = vrot.slane %v1906, 4
    %v1908 = vadd.f32 %v1906, %v1907
    %v1909 = vrot.slane %v1908, 2
    %v1910 = vadd.f32 %v1908, %v1909
    %v1911 = vrot.slane %v1910, 1
    %v1912 = vadd.f32 %v1910, %v1911
    %v1913 = vsel %vm90, %v1891, 0.0
    %v1914 = vrot.slane %v1913, 4
    %v1915 = vadd.f32 %v1913, %v1914
    %v1916 = vrot.slane %v1915, 2
    %v1917 = vadd.f32 %v1915, %v1916
    %v1918 = vrot.slane %v1917, 1
    %v1919 = vadd.f32 %v1917, %v1918
    %v1920 = vlog2.pop %v1898
    %v1921 = vmul.f32 %v1920, 0.6931472
    %v1922 = vlog2.pop %v1905
    %v1923 = vmul.f32 %v1922, 0.6931472
    %v1924 = vlog2.pop %v1912
    %v1925 = vmul.f32 %v1924, 0.6931472
    %v1926 = vlog2.pop %v1919
    %v1927 = vmul.f32 %v1926, 0.6931472
    %v1928 = vadd.f32 %v1858, %v1921
    %v1929 = vadd.f32 %v1865, %v1923
    %v1930 = vadd.f32 %v1872, %v1925
    %v1931 = vadd.f32 %v1879, %v1927
    %v1933 = vrot.slane %v1845, 1
    %v1934 = vrot.slane %v1845, 2
    %v1935 = vrot.slane %v1845, 3
    %v1940 = vadd.f32 %v1928, %v1845
    %v1941 = vadd.f32 %v1929, %v1933
    %v1942 = vadd.f32 %v1930, %v1934
    %v1943 = vadd.f32 %v1931, %v1935
    %v1944 = vsel %vm1847, 1, 0
    %v1945 = vlaneseq
    %v1946 = vshrl.u32 %v1945, 7
    %v1947 = vsub.s32 0, %v1946
    %v1948 = vrot.slane %v1944, %v1947
    %vm1949 = vcmp.eq.s32.totalorder %v1948, 1
    %v1954 = vrot.slane %v1941, 7
    %v1955 = vsel %vm209, %v1954, %v1940
    %v1956 = vrot.slane %v1942, 6
    %v1957 = vsel %vm212, %v1956, %v1955
    %v1958 = vrot.slane %v1943, 5
    %v1959 = vsel %vm215, %v1958, %v1957
    %v1961 = vsel %vm1949, %v1959, %v1665
    %v1962 = vadd.f32 %v1766, %v50
    %v1963 = vadd.f32 %v1766, %v57
    %v1964 = vadd.f32 %v1766, %v64
    %v1965 = vadd.f32 %v1766, %v71
    %v1966 = vsel %vm90, %v1962, -inf
    %v1967 = vrot.slane %v1966, 4
    %v1968 = vmax.f32 %v1966, %v1967
    %v1969 = vrot.slane %v1968, 2
    %v1970 = vmax.f32 %v1968, %v1969
    %v1971 = vrot.slane %v1970, 1
    %v1972 = vmax.f32 %v1970, %v1971
    %v1973 = vsel %vm90, %v1963, -inf
    %v1974 = vrot.slane %v1973, 4
    %v1975 = vmax.f32 %v1973, %v1974
    %v1976 = vrot.slane %v1975, 2
    %v1977 = vmax.f32 %v1975, %v1976
    %v1978 = vrot.slane %v1977, 1
    %v1979 = vmax.f32 %v1977, %v1978
    %v1980 = vsel %vm90, %v1964, -inf
    %v1981 = vrot.slane %v1980, 4
    %v1982 = vmax.f32 %v1980, %v1981
    %v1983 = vrot.slane %v1982, 2
    %v1984 = vmax.f32 %v1982, %v1983
    %v1985 = vrot.slane %v1984, 1
    %v1986 = vmax.f32 %v1984, %v1985
    %v1987 = vsel %vm90, %v1965, -inf
    %v1988 = vrot.slane %v1987, 4
    %v1989 = vmax.f32 %v1987, %v1988
    %v1990 = vrot.slane %v1989, 2
    %v1991 = vmax.f32 %v1989, %v1990
    %v1992 = vrot.slane %v1991, 1
    %v1993 = vmax.f32 %v1991, %v1992
    %vm1994 = vcmp.eq.f32.partialorder %v1962, %v1972
    %vm1995 = vcmp.eq.f32.partialorder %v1963, %v1979
    %vm1996 = vcmp.eq.f32.partialorder %v1964, %v1986
    %vm1997 = vcmp.eq.f32.partialorder %v1965, %v1993
    %v1998 = vsel %vm1994, %v73, 4
    %v1999 = vsel %vm1995, %v73, 4
    %v2000 = vsel %vm1996, %v73, 4
    %v2001 = vsel %vm1997, %v73, 4
    %v2002 = vsel %vm90, %v1998, 2147483647
    %v2003 = vrot.slane %v2002, 4
    %vm2004 = vcmp.lt.s32.totalorder %v2002, %v2003
    %v2005 = vsel %vm2004, %v2002, %v2003
    %v2006 = vrot.slane %v2005, 2
    %vm2007 = vcmp.lt.s32.totalorder %v2005, %v2006
    %v2008 = vsel %vm2007, %v2005, %v2006
    %v2009 = vrot.slane %v2008, 1
    %vm2010 = vcmp.lt.s32.totalorder %v2008, %v2009
    %v2011 = vsel %vm2010, %v2008, %v2009
    %v2012 = vsel %vm90, %v1999, 2147483647
    %v2013 = vrot.slane %v2012, 4
    %vm2014 = vcmp.lt.s32.totalorder %v2012, %v2013
    %v2015 = vsel %vm2014, %v2012, %v2013
    %v2016 = vrot.slane %v2015, 2
    %vm2017 = vcmp.lt.s32.totalorder %v2015, %v2016
    %v2018 = vsel %vm2017, %v2015, %v2016
    %v2019 = vrot.slane %v2018, 1
    %vm2020 = vcmp.lt.s32.totalorder %v2018, %v2019
    %v2021 = vsel %vm2020, %v2018, %v2019
    %v2022 = vsel %vm90, %v2000, 2147483647
    %v2023 = vrot.slane %v2022, 4
    %vm2024 = vcmp.lt.s32.totalorder %v2022, %v2023
    %v2025 = vsel %vm2024, %v2022, %v2023
    %v2026 = vrot.slane %v2025, 2
    %vm2027 = vcmp.lt.s32.totalorder %v2025, %v2026
    %v2028 = vsel %vm2027, %v2025, %v2026
    %v2029 = vrot.slane %v2028, 1
    %vm2030 = vcmp.lt.s32.totalorder %v2028, %v2029
    %v2031 = vsel %vm2030, %v2028, %v2029
    %v2032 = vsel %vm90, %v2001, 2147483647
    %v2033 = vrot.slane %v2032, 4
    %vm2034 = vcmp.lt.s32.totalorder %v2032, %v2033
    %v2035 = vsel %vm2034, %v2032, %v2033
    %v2036 = vrot.slane %v2035, 2
    %vm2037 = vcmp.lt.s32.totalorder %v2035, %v2036
    %v2038 = vsel %vm2037, %v2035, %v2036
    %v2039 = vrot.slane %v2038, 1
    %vm2040 = vcmp.lt.s32.totalorder %v2038, %v2039
    %v2041 = vsel %vm2040, %v2038, %v2039
    %v2042 = vsel %vm209, %v2021, %v2011
    %v2043 = vsel %vm212, %v2031, %v2042
    %v2044 = vsel %vm215, %v2041, %v2043
    %s2045 = scalar_lea.vmem [#allocation2], 24
    %2046 = vst [vmem:[%s2045] sm:$0xf] %v2044
    %v2047 = vadd.f32 %v1972, %v1845
    %v2048 = vadd.f32 %v1979, %v1933
    %v2049 = vadd.f32 %v1986, %v1934
    %v2050 = vadd.f32 %v1993, %v1935
    %v2055 = vrot.slane %v2048, 7
    %v2056 = vsel %vm209, %v2055, %v2047
    %v2057 = vrot.slane %v2049, 6
    %v2058 = vsel %vm212, %v2057, %v2056
    %v2059 = vrot.slane %v2050, 5
    %v2060 = vsel %vm215, %v2059, %v2058
    %v2062 = vsel %vm1949, %v2060, %v1766
    %v2063 = vld [vmem:[%s2 + $0x7] sm:$0x1]
    %v2064 = vlaneseq
    %v2065 = vshrl.u32 %v2064, 7
    %v2066 = vsub.s32 0, %v2065
    %v2067 = vrot.slane %v2063, %v2066
    %vm2068 = vcmp.eq.s32.totalorder %v73, %v2067
    %v2069 = vsel %vm2068, 1, 0
    %v2070 = vcvt.s32.f32 %v2069
    %v2071 = vmul.f32 %v50, %v1774
    %v2072 = vmul.f32 %v57, %v1774
    %v2073 = vmul.f32 %v64, %v1774
    %v2074 = vmul.f32 %v71, %v1774
    %v2075 = vsel %vm90, %v2071, 0.0
    %v2076 = vrot.slane %v2075, 4
    %v2077 = vadd.f32 %v2075, %v2076
    %v2078 = vrot.slane %v2077, 2
    %v2079 = vadd.f32 %v2077, %v2078
    %v2080 = vrot.slane %v2079, 1
    %v2081 = vadd.f32 %v2079, %v2080
    %v2082 = vsel %vm90, %v2072, 0.0
    %v2083 = vrot.slane %v2082, 4
    %v2084 = vadd.f32 %v2082, %v2083
    %v2085 = vrot.slane %v2084, 2
    %v2086 = vadd.f32 %v2084, %v2085
    %v2087 = vrot.slane %v2086, 1
    %v2088 = vadd.f32 %v2086, %v2087
    %v2089 = vsel %vm90, %v2073, 0.0
    %v2090 = vrot.slane %v2089, 4
    %v2091 = vadd.f32 %v2089, %v2090
    %v2092 = vrot.slane %v2091, 2
    %v2093 = vadd.f32 %v2091, %v2092
    %v2094 = vrot.slane %v2093, 1
    %v2095 = vadd.f32 %v2093, %v2094
    %v2096 = vsel %vm90, %v2074, 0.0
    %v2097 = vrot.slane %v2096, 4
    %v2098 = vadd.f32 %v2096, %v2097
    %v2099 = vrot.slane %v2098, 2
    %v2100 = vadd.f32 %v2098, %v2099
    %v2101 = vrot.slane %v2100, 1
    %v2102 = vadd.f32 %v2100, %v2101
    %v2103 = vadd.f32 %v2081, %v1845
    %v2104 = vadd.f32 %v2088, %v1933
    %v2105 = vadd.f32 %v2095, %v1934
    %v2106 = vadd.f32 %v2102, %v1935
    %v2108 = vrot.slane %v2070, 1
    %v2109 = vrot.slane %v2070, 2
    %v2110 = vrot.slane %v2070, 3
    %v2115 = vmul.f32 %v2103, %v2070
    %v2116 = vmul.f32 %v2104, %v2108
    %v2117 = vmul.f32 %v2105, %v2109
    %v2118 = vmul.f32 %v2106, %v2110
    %v2123 = vrot.slane %v2116, 7
    %v2124 = vsel %vm209, %v2123, %v2115
    %v2125 = vrot.slane %v2117, 6
    %v2126 = vsel %vm212, %v2125, %v2124
    %v2127 = vrot.slane %v2118, 5
    %v2128 = vsel %vm215, %v2127, %v2126
    %v2130 = vsel %vm90, %v2128, 0.0
    %v2131 = vrot.slane %v2130, 4
    %v2132 = vadd.f32 %v2130, %v2131
    %v2133 = vrot.slane %v2132, 2
    %v2134 = vadd.f32 %v2132, %v2133
    %v2135 = vrot.slane %v2134, 1
    %v2136 = vadd.f32 %v2134, %v2135
    %v2137 = vcvt.s32.f32 %v1846
    %v2138 = vmul.f32 %v2136, %v2137
    %v2139 = vadd.f32 %v1843, %v2138
    %v2140 = vld [vmem:[%s1] sm:$0xff]
    %v2141 = vld [vmem:[%s2] sm:$0xff]
    %v2142 = vrot.slane %v2140, 4
    %v2143 = vadd.s32 %v2140, %v2142
    %v2144 = vrot.slane %v2143, 2
    %v2145 = vadd.s32 %v2143, %v2144
    %v2146 = vrot.slane %v2145, 1
    %v2147 = vadd.s32 %v2145, %v2146
    %v2148 = vsub.s32 %v2147, 1
    %vm2149 = vcmp.eq.s32.totalorder %v73, %v2148
    %v2150 = vsel %vm2149, %v2141, 0
    %v2151 = vrot.slane %v2150, 4
    %v2152 = vadd.s32 %v2150, %v2151
    %v2153 = vrot.slane %v2152, 2
    %v2154 = vadd.s32 %v2152, %v2153
    %v2155 = vrot.slane %v2154, 1
    %v2156 = vadd.s32 %v2154, %v2155
    %vm2157 = vcmp.eq.s32.totalorder %v73, %v2156
    %v2158 = vsel %vm2157, 1, 0
    %v2159 = vcvt.s32.f32 %v2158
    %2161 = vset.pattern.permute.xlu0 0
    %2162 = vperm.xlu0 %2161, %v42
    %v2163 = vpop.permute.xlu0 %2162
    %v2165 = vmul.f32 %v2163, %v2159
    %v2166 = vsel %vm90, %v2165, 0.0
    %v2167 = vrot.slane %v2166, 4
    %v2168 = vadd.f32 %v2166, %v2167
    %v2169 = vrot.slane %v2168, 2
    %v2170 = vadd.f32 %v2168, %v2169
    %v2171 = vrot.slane %v2170, 1
    %v2172 = vadd.f32 %v2170, %v2171
    %v2173 = vadd.f32 %v2139, %v2172
    %v2174 = vadd.f32 %v1961, %v2163
    %v2175 = vsel %vm90, %v2174, -inf
    %v2176 = vrot.slane %v2175, 4
    %v2177 = vmax.f32 %v2175, %v2176
    %v2178 = vrot.slane %v2177, 2
    %v2179 = vmax.f32 %v2177, %v2178
    %v2180 = vrot.slane %v2179, 1
    %v2181 = vmax.f32 %v2179, %v2180
    %v2182 = vsub.f32 %v2174, %v2181
    %v2183 = vmul.f32 %v2182, 1.442695
    %v2184 = vpow.pop %v2183
    %v2185 = vsel %vm90, %v2184, 0.0
    %v2186 = vrot.slane %v2185, 4
    %v2187 = vadd.f32 %v2185, %v2186
    %v2188 = vrot.slane %v2187, 2
    %v2189 = vadd.f32 %v2187, %v2188
    %v2190 = vrot.slane %v2189, 1
    %v2191 = vadd.f32 %v2189, %v2190
    %v2192 = vlog2.pop %v2191
    %v2193 = vmul.f32 %v2192, 0.6931472
    %v2194 = vadd.f32 %v2181, %v2193
    %v2195 = vsub.f32 %v2194, %v2173
    %2196 = vst [vmem:[#allocation7] sm:$0x1] %v2195
    %v2197 = vadd.f32 %v2062, %v2163
    %v2198 = vsel %vm90, %v2197, -inf
    %v2199 = vrot.slane %v2198, 4
    %v2200 = vmax.f32 %v2198, %v2199
    %v2201 = vrot.slane %v2200, 2
    %v2202 = vmax.f32 %v2200, %v2201
    %v2203 = vrot.slane %v2202, 1
    %v2204 = vmax.f32 %v2202, %v2203
    %vm2205 = vcmp.eq.f32.partialorder %v2197, %v2204
    %v2206 = vsel %vm2205, %v73, 4
    %v2207 = vsel %vm90, %v2206, 2147483647
    %v2208 = vrot.slane %v2207, 4
    %vm2209 = vcmp.lt.s32.totalorder %v2207, %v2208
    %v2210 = vsel %vm2209, %v2207, %v2208
    %v2211 = vrot.slane %v2210, 2
    %vm2212 = vcmp.lt.s32.totalorder %v2210, %v2211
    %v2213 = vsel %vm2212, %v2210, %v2211
    %v2214 = vrot.slane %v2213, 1
    %vm2215 = vcmp.lt.s32.totalorder %v2213, %v2214
    %v2216 = vsel %vm2215, %v2213, %v2214
    %v2217 = vsel %vm2149, %v2216, 0
    %2218 = vst [vmem:[#allocation6] sm:$0xff] %v2217
    %v2219 = vld [vmem:[%s2045] sm:$0xf]
    %vm2220 = vcmp.ge.s32.totalorder %v2148, 7
    %vm2221 = vcmp.eq.s32.totalorder %v73, %v2216
    %v2222 = vsel %vm2221, %v2219, 0
    %v2223 = vsel %vm90, %v2222, 0
    %v2224 = vrot.slane %v2223, 4
    %v2225 = vadd.s32 %v2223, %v2224
    %v2226 = vrot.slane %v2225, 2
    %v2227 = vadd.s32 %v2225, %v2226
    %v2228 = vrot.slane %v2227, 1
    %v2229 = vadd.s32 %v2227, %v2228
    %v2230 = vsel %vm2220, %v2229, %v2216
    %2231 = vst.msk [vmem:[#allocation6 + $0x6] sm:$0x1] %vm2220, %v2230
    %v2232 = vld [vmem:[%s1749] sm:$0xf]
    %vm2233 = vcmp.ge.s32.totalorder %v2148, 6
    %vm2234 = vcmp.eq.s32.totalorder %v73, %v2230
    %v2235 = vsel %vm2234, %v2232, 0
    %v2236 = vsel %vm90, %v2235, 0
    %v2237 = vrot.slane %v2236, 4
    %v2238 = vadd.s32 %v2236, %v2237
    %v2239 = vrot.slane %v2238, 2
    %v2240 = vadd.s32 %v2238, %v2239
    %v2241 = vrot.slane %v2240, 1
    %v2242 = vadd.s32 %v2240, %v2241
    %v2243 = vsel %vm2233, %v2242, %v2230
    %2244 = vst.msk [vmem:[#allocation6 + $0x5] sm:$0x1] %vm2233, %v2243
    %v2245 = vld [vmem:[%s1453] sm:$0xf]
    %vm2246 = vcmp.ge.s32.totalorder %v2148, 5
    %vm2247 = vcmp.eq.s32.totalorder %v73, %v2243
    %v2248 = vsel %vm2247, %v2245, 0
    %v2249 = vsel %vm90, %v2248, 0
    %v2250 = vrot.slane %v2249, 4
    %v2251 = vadd.s32 %v2249, %v2250
    %v2252 = vrot.slane %v2251, 2
    %v2253 = vadd.s32 %v2251, %v2252
    %v2254 = vrot.slane %v2253, 1
    %v2255 = vadd.s32 %v2253, %v2254
    %v2256 = vsel %vm2246, %v2255, %v2243
    %2257 = vst.msk [vmem:[#allocation6 + $0x4] sm:$0x1] %vm2246, %v2256
    %v2258 = vld [vmem:[%s1157] sm:$0xf]
    %vm2259 = vcmp.ge.s32.totalorder %v2148, 4
    %vm2260 = vcmp.eq.s32.totalorder %v73, %v2256
    %v2261 = vsel %vm2260, %v2258, 0
    %v2262 = vsel %vm90, %v2261, 0
    %v2263 = vrot.slane %v2262, 4
    %v2264 = vadd.s32 %v2262, %v2263
    %v2265 = vrot.slane %v2264, 2
    %v2266 = vadd.s32 %v2264, %v2265
    %v2267 = vrot.slane %v2266, 1
    %v2268 = vadd.s32 %v2266, %v2267
    %v2269 = vsel %vm2259, %v2268, %v2256
    %2270 = vst.msk [vmem:[#allocation6 + $0x3] sm:$0x1] %vm2259, %v2269
    %v2271 = vld [vmem:[%s861] sm:$0xf]
    %vm2272 = vcmp.ge.s32.totalorder %v2148, 3
    %vm2273 = vcmp.eq.s32.totalorder %v73, %v2269
    %v2274 = vsel %vm2273, %v2271, 0
    %v2275 = vsel %vm90, %v2274, 0
    %v2276 = vrot.slane %v2275, 4
    %v2277 = vadd.s32 %v2275, %v2276
    %v2278 = vrot.slane %v2277, 2
    %v2279 = vadd.s32 %v2277, %v2278
    %v2280 = vrot.slane %v2279, 1
    %v2281 = vadd.s32 %v2279, %v2280
    %v2282 = vsel %vm2272, %v2281, %v2269
    %2283 = vst.msk [vmem:[#allocation6 + $0x2] sm:$0x1] %vm2272, %v2282
    %v2284 = vld [vmem:[%s565] sm:$0xf]
    %vm2285 = vcmp.ge.s32.totalorder %v2148, 2
    %vm2286 = vcmp.eq.s32.totalorder %v73, %v2282
    %v2287 = vsel %vm2286, %v2284, 0
    %v2288 = vsel %vm90, %v2287, 0
    %v2289 = vrot.slane %v2288, 4
    %v2290 = vadd.s32 %v2288, %v2289
    %v2291 = vrot.slane %v2290, 2
    %v2292 = vadd.s32 %v2290, %v2291
    %v2293 = vrot.slane %v2292, 1
    %v2294 = vadd.s32 %v2292, %v2293
    %v2295 = vsel %vm2285, %v2294, %v2282
    %2296 = vst.msk [vmem:[#allocation6 + $0x1] sm:$0x1] %vm2285, %v2295
    %v2297 = vld [vmem:[#allocation2] sm:$0xf]
    %vm2298 = vcmp.ge.s32.totalorder %v2148, 1
    %vm2299 = vcmp.eq.s32.totalorder %v73, %v2295
    %v2300 = vsel %vm2299, %v2297, 0
    %v2301 = vsel %vm90, %v2300, 0
    %v2302 = vrot.slane %v2301, 4
    %v2303 = vadd.s32 %v2301, %v2302
    %v2304 = vrot.slane %v2303, 2
    %v2305 = vadd.s32 %v2303, %v2304
    %v2306 = vrot.slane %v2305, 1
    %v2307 = vadd.s32 %v2305, %v2306
    %v2308 = vsel %vm2298, %v2307, %v2295
    %2309 = vst.msk [vmem:[#allocation6] sm:$0x1] %vm2298, %v2308
    // Predicated region
    $region30: #{tpu_custom_call.1} parent=1 // pred_check
      _
    $region31: #{tpu_custom_call.1} parent=1 // pred_check_branch
      %2311 = sbr.rel (0) target = $region33
    $region32: #{tpu_custom_call.1} parent=1 // pred_region
      %s2313 = ssub.s32 128, 128
      %2314 = vsyncadd [#allocation5], %s2313
      %s2316 = sshll.u32 [#allocation6], 4
      %s2317 = int_to_ptr.vmem [resolvable:$true] %s2316
      %2319 = dma.vmem_to_hbm [thread:$0]  %s2317, 128, %s6, [#allocation5]
    $region33: #{tpu_custom_call.1} parent=1 // pred_fallthru
      _
    // Predicated region
    $region34: #{tpu_custom_call.1} parent=1 // pred_check
      _
    $region35: #{tpu_custom_call.1} parent=1 // pred_check_branch
      %2321 = sbr.rel (0) target = $region37
    $region36: #{tpu_custom_call.1} parent=1 // pred_region
      %s2323 = ssub.s32 16, 16
      %2324 = vsyncadd [#allocation8], %s2323
      %s2326 = sshll.u32 [#allocation7], 4
      %s2327 = int_to_ptr.vmem [resolvable:$true] %s2326
      %2329 = dma.vmem_to_hbm [thread:$0]  %s2327, 16, %s7, [#allocation8]
    $region37: #{tpu_custom_call.1} parent=1 // pred_fallthru
      _
    // Predicated region
    $region38: #{tpu_custom_call.1} parent=1 // pred_check
      _
    $region39: #{tpu_custom_call.1} parent=1 // pred_check_branch
      %2331 = sbr.rel (0) target = $region41
    $region40: #{tpu_custom_call.1} parent=1 // pred_region
      %2332 = dma.done [#allocation5], 128
    $region41: #{tpu_custom_call.1} parent=1 // pred_fallthru
      _
    // Predicated region
    $region42: #{tpu_custom_call.1} parent=1 // pred_check
      _
    $region43: #{tpu_custom_call.1} parent=1 // pred_check_branch
      %2334 = sbr.rel (0) target = $region45
    $region44: #{tpu_custom_call.1} parent=1 // pred_region
      %2335 = dma.done [#allocation8], 16
    $region45: #{tpu_custom_call.1} parent=1 // pred_fallthru
      _
    %2336 = vsyncpa [#allocation4], 1
    %2337 = vsyncpa [#allocation5], 1
    %2338 = vsyncpa [#allocation8], 1

</llo_original>
